<compile_context>
chip_gen: v7x
topology: tpu7x:2x2x1
jax: 0.10.0
libtpu: 0.0.40
codegen_flags: <defaults>
</compile_context>

<pallas_src>
import functools
import numpy as np
import jax
import jax.numpy as jnp
from jax.experimental import pallas as pl
from jax.experimental.pallas import tpu as pltpu

D_MODEL = 256
NUM_HEADS = 2
D_FF = 512
LN_EPS = 1e-5


def _round_up(x, m):
    return ((x + m - 1) // m) * m


def _layernorm(x, gamma, beta):
    mu = jnp.mean(x, axis=-1, keepdims=True)
    var = jnp.mean(jnp.square(x - mu), axis=-1, keepdims=True)
    return (x - mu) * jax.lax.rsqrt(var + LN_EPS) * gamma + beta


def _critic_kernel(state_ref, act_ref, sel_ref,
                   w_enc, b_enc,
                   w_qkv, b_qkv,
                   wo, bo,
                   ln1_g, ln1_b,
                   w_ff1, b_ff1, w_ff2, b_ff2,
                   ln2_g, ln2_b,
                   w_head_s, w_head_a, b_head,
                   w_final, b_final,
                   out_ref, *, tile_b, cont):
    f32, bf16 = jnp.float32, jnp.bfloat16

    # act_encoder: Linear(state_dim -> d_model), TILE_B sequences at once.
    x = state_ref[...].astype(bf16)                                     # (M, state_dim)
    h = jnp.dot(x, w_enc[...], preferred_element_type=f32) + b_enc[...]  # (M, D) f32

    # Fused QKV: one (M, D) @ (D, 3D) bf16 matmul, f32 accumulate.
    qkv = jnp.dot(h.astype(bf16), w_qkv[...],
                  preferred_element_type=f32) + b_qkv[...]              # (M, 3D) f32

    dh = D_MODEL // NUM_HEADS
    scale = 1.0 / float(np.sqrt(dh))

    # Batched per-sequence attention: (tile_b, cont, cont) scores per head.
    # exp() count is tile_b*cont^2 per head instead of (tile_b*cont)^2; no mask.
    head_outs = []
    for hh in range(NUM_HEADS):                                         # static 2-head loop
        o = hh * dh
        qh = qkv[:, o:o + dh].reshape(tile_b, cont, dh).astype(bf16)
        kh = qkv[:, D_MODEL + o:D_MODEL + o + dh].reshape(tile_b, cont, dh).astype(bf16)
        vh = qkv[:, 2 * D_MODEL + o:2 * D_MODEL + o + dh].reshape(
            tile_b, cont, dh).astype(bf16)
        s = jnp.einsum('bqd,bkd->bqk', qh, kh,
                       preferred_element_type=f32) * scale              # (tile_b, cont, cont)
        s = s - jnp.max(s, axis=-1, keepdims=True)
        p = jnp.exp(s)
        p = p * pl.reciprocal(jnp.sum(p, axis=-1, keepdims=True), approx=True)
        head_outs.append(jnp.einsum('bqk,bkd->bqd', p.astype(bf16), vh,
                                    preferred_element_type=f32))        # (tile_b, cont, dh)

    # concat-of-heads @ Wo as a single K=256 matmul (full MXU depth on v6e/v7x).
    attn = jnp.concatenate(head_outs, axis=-1).reshape(tile_b * cont, D_MODEL)
    attn = jnp.dot(attn.astype(bf16), wo[...], preferred_element_type=f32) + bo[...]

    y = _layernorm(h + attn, ln1_g[...], ln1_b[...])
    f = jnp.maximum(jnp.dot(y.astype(bf16), w_ff1[...],
                            preferred_element_type=f32) + b_ff1[...], 0.0)
    f = jnp.dot(f.astype(bf16), w_ff2[...], preferred_element_type=f32) + b_ff2[...]
    z = _layernorm(y + f, ln2_g[...], ln2_b[...])

    # transformer_out[:, -1, :]: last token of every sequence via a one-hot
    # selection matmul (TILE_B, M) @ (M, D) (trivial cost, dense MXU form).
    last = jnp.dot(sel_ref[...], z.astype(bf16), preferred_element_type=f32)  # (TILE_B, D)
    a = act_ref[...].astype(bf16)

    # Fused twin Q heads: one (TILE_B, 2D) ReLU hidden, block-diagonal (2D, 2)
    # final weight -> q1 and q2 from a single matmul, stored lane-packed.
    hid = jnp.maximum(
        jnp.dot(last.astype(bf16), w_head_s[...], preferred_element_type=f32)
        + jnp.dot(a, w_head_a[...], preferred_element_type=f32)
        + b_head[...], 0.0)                                             # (TILE_B, 2D)
    q_t = jax.lax.dot_general(w_final[...], hid.astype(bf16),
                              (((0,), (1,)), ((), ())),
                              preferred_element_type=f32) + b_final[...]  # (2, TILE_B)
    out_ref[0] = q_t


def trans_critic_forward(state, action, params, *, m_target=256):
    """Pallas forward.  m_target ~ desired MXU M rows per grid step (<= 256)."""
    n_e, bs, cont, s_d = state.shape
    action_dim = action.shape[-1]
    B = n_e * bs

    # Tile sizing: fill the MXU M dimension (<= m_target rows) but keep >= 2
    # parallel grid blocks when the batch allows it (v7x: 2 TensorCores).
    mxu_tile = max(8, _round_up(max(1, m_target // max(cont, 1)), 8))
    occ_cap = _round_up((B + 1) // 2, 8) if B > 8 else 8
    tile_b = max(8, min(mxu_tile, occ_cap))
    m_rows = tile_b * cont
    B_pad = _round_up(B, tile_b)
    num_blocks = B_pad // tile_b

    state_f = state.reshape(B, cont, s_d).astype(jnp.float32)
    action_f = action.reshape(B, action_dim).astype(jnp.float32)
    if B_pad != B:
        state_f = jnp.concatenate(
            [state_f, jnp.zeros((B_pad - B, cont, s_d), jnp.float32)], axis=0)
        action_f = jnp.concatenate(
            [action_f, jnp.zeros((B_pad - B, action_dim), jnp.float32)], axis=0)
    state_tok = state_f.reshape(B_pad * cont, s_d)

    # Last-token one-hot selector (0/1 values are bf16-exact).
    sel_np = np.zeros((tile_b, m_rows), np.float32)
    sel_np[np.arange(tile_b), np.arange(tile_b) * cont + (cont - 1)] = 1.0
    sel = jnp.asarray(sel_np, jnp.bfloat16)

    # Host-side weight fusion; matmul weights cast to bf16 (f32 accumulation in
    # the kernel); biases / LayerNorm params stay f32.
    p = params
    bf = lambda w: w.astype(jnp.bfloat16)
    zcol = jnp.zeros((D_MODEL, 1), jnp.float32)
    weights = [
        bf(p["w_enc"]), p["b_enc"],
        bf(jnp.concatenate([p["wq"], p["wk"], p["wv"]], axis=1)),    # w_qkv   (D, 3D)
        jnp.concatenate([p["bq"], p["bk"], p["bv"]], axis=1),        # b_qkv   (1, 3D)
        bf(p["wo"]), p["bo"],
        p["ln1_g"], p["ln1_b"],
        bf(p["w_ff1"]), p["b_ff1"], bf(p["w_ff2"]), p["b_ff2"],
        p["ln2_g"], p["ln2_b"],
        bf(jnp.concatenate([p["fc1_ws"], p["fc3_ws"]], axis=1)),     # w_head_s (D, 2D)
        bf(jnp.concatenate([p["fc1_wa"], p["fc3_wa"]], axis=1)),     # w_head_a (A, 2D)
        jnp.concatenate([p["b_fc1"], p["b_fc3"]], axis=1),           # b_head   (1, 2D)
        bf(jnp.concatenate(
            [jnp.concatenate([p["w_fc2"], zcol], axis=0),
             jnp.concatenate([zcol, p["w_fc4"]], axis=0)], axis=1)), # w_final (2D, 2)
        jnp.concatenate([p["b_fc2"], p["b_fc4"]], axis=0),           # b_final  (2, 1)
    ]

    in_specs = [
        pl.BlockSpec((m_rows, s_d), lambda b: (b, 0)),
        pl.BlockSpec((tile_b, action_dim), lambda b: (b, 0)),
        pl.BlockSpec((tile_b, m_rows), lambda b: (0, 0)),
    ] + [pl.BlockSpec(w.shape, lambda b, nd=w.ndim: (0,) * nd) for w in weights]

    out_specs = pl.BlockSpec((1, 2, tile_b), lambda b: (b, 0, 0))
    out_shape = jax.ShapeDtypeStruct((num_blocks, 2, tile_b), jnp.float32)

    kernel = functools.partial(_critic_kernel, tile_b=tile_b, cont=cont)
    q_all = pl.pallas_call(
        kernel,
        grid=(num_blocks,),
        in_specs=in_specs,
        out_specs=out_specs,
        out_shape=out_shape,
        compiler_params=pltpu.CompilerParams(dimension_semantics=("parallel",)),
    )(state_tok, action_f, sel, *weights)

    q_flat = jnp.transpose(q_all, (1, 0, 2)).reshape(2, B_pad)
    q1 = q_flat[0, :B].reshape(n_e, bs, 1)
    q2 = q_flat[1, :B].reshape(n_e, bs, 1)
    return q1, q2


def init_params(key, state_dim, action_dim):
    ks = jax.random.split(key, 20)
    it = iter(ks)

    def mat(shape, scale):
        return jax.random.normal(next(it), shape, jnp.float32) * scale

    D, F = D_MODEL, D_FF
    return {
        "w_enc": mat((state_dim, D), 1.0 / np.sqrt(state_dim)),
        "b_enc": jnp.zeros((1, D), jnp.float32),
        "wq": mat((D, D), 1.0 / np.sqrt(D)), "bq": jnp.zeros((1, D), jnp.float32),
        "wk": mat((D, D), 1.0 / np.sqrt(D)), "bk": jnp.zeros((1, D), jnp.float32),
        "wv": mat((D, D), 1.0 / np.sqrt(D)), "bv": jnp.zeros((1, D), jnp.float32),
        "wo": mat((D, D), 1.0 / np.sqrt(D)), "bo": jnp.zeros((1, D), jnp.float32),
        "ln1_g": jnp.ones((1, D), jnp.float32), "ln1_b": jnp.zeros((1, D), jnp.float32),
        "w_ff1": mat((D, F), 1.0 / np.sqrt(D)), "b_ff1": jnp.zeros((1, F), jnp.float32),
        "w_ff2": mat((F, D), 1.0 / np.sqrt(F)), "b_ff2": jnp.zeros((1, D), jnp.float32),
        "ln2_g": jnp.ones((1, D), jnp.float32), "ln2_b": jnp.zeros((1, D), jnp.float32),
        "fc1_ws": mat((D, D), 1.0 / np.sqrt(D + action_dim)),
        "fc1_wa": mat((action_dim, D), 1.0 / np.sqrt(D + action_dim)),
        "b_fc1": jnp.zeros((1, D), jnp.float32),
        "w_fc2": mat((D, 1), 1.0 / np.sqrt(D)), "b_fc2": jnp.zeros((1, 1), jnp.float32),
        "fc3_ws": mat((D, D), 1.0 / np.sqrt(D + action_dim)),
        "fc3_wa": mat((action_dim, D), 1.0 / np.sqrt(D + action_dim)),
        "b_fc3": jnp.zeros((1, D), jnp.float32),
        "w_fc4": mat((D, 1), 1.0 / np.sqrt(D)), "b_fc4": jnp.zeros((1, 1), jnp.float32),
    }


def reference_forward(state, action, params):
    """Pure-JAX f32 reference mirroring the PyTorch forward (unfused params)."""
    p = params
    n_e, bs, cont, s_d = state.shape
    B = n_e * bs
    x = state.reshape(B, cont, s_d)
    h = x @ p["w_enc"] + p["b_enc"]
    q = h @ p["wq"] + p["bq"]
    k = h @ p["wk"] + p["bk"]
    v = h @ p["wv"] + p["bv"]
    dh = D_MODEL // NUM_HEADS
    heads = []
    for hh in range(NUM_HEADS):
        sl = slice(hh * dh, (hh + 1) * dh)
        s = jnp.einsum("bqd,bkd->bqk", q[..., sl], k[..., sl]) / np.sqrt(dh)
        pmat = jax.nn.softmax(s, axis=-1)
        heads.append(jnp.einsum("bqk,bkd->bqd", pmat, v[..., sl]))
    attn = jnp.concatenate(heads, -1) @ p["wo"] + p["bo"]

    def ln(x, g, b):
        mu = x.mean(-1, keepdims=True)
        var = ((x - mu) ** 2).mean(-1, keepdims=True)
        return (x - mu) / jnp.sqrt(var + LN_EPS) * g + b

    y = ln(h + attn, p["ln1_g"], p["ln1_b"])
    f = jax.nn.relu(y @ p["w_ff1"] + p["b_ff1"]) @ p["w_ff2"] + p["b_ff2"]
    z = ln(y + f, p["ln2_g"], p["ln2_b"])
    last = z[:, -1, :]
    a = action.reshape(B, -1)
    h1 = jax.nn.relu(last @ p["fc1_ws"] + a @ p["fc1_wa"] + p["b_fc1"])
    q1 = h1 @ p["w_fc2"] + p["b_fc2"]
    h2 = jax.nn.relu(last @ p["fc3_ws"] + a @ p["fc3_wa"] + p["b_fc3"])
    q2 = h2 @ p["w_fc4"] + p["b_fc4"]
    return q1.reshape(n_e, bs, 1), q2.reshape(n_e, bs, 1)


if __name__ == "__main__":
    n_e, bs, cont = 2, 2, 8
    state_dim, action_dim = 16, 6

    key = jax.random.PRNGKey(0)
    k1, k2, k3 = jax.random.split(key, 3)
    state = jax.random.normal(k1, (n_e, bs, cont, state_dim), jnp.float32)
    action = jax.random.normal(k2, (n_e, bs, action_dim), jnp.float32)
    params = init_params(k3, state_dim, action_dim)

    q1, q2 = trans_critic_forward(state, action, params)
    jax.block_until_ready((q1, q2))

    r1, r2 = reference_forward(state, action, params)
    assert q1.shape == (n_e, bs, 1) and q2.shape == (n_e, bs, 1)
    # Tolerance reflects bf16 MXU operands (f32 accumulation) + approx reciprocal
    # vs. the pure-f32 reference.
    assert np.allclose(np.asarray(q1), np.asarray(r1), rtol=5e-2, atol=5e-2)
    assert np.allclose(np.asarray(q2), np.asarray(r2), rtol=5e-2, atol=5e-2)
    print("KERNEL_OK")
</pallas_src>

<mosaic_0001>
module attributes {stable_mosaic.version = 11 : i64} {
  func.func @_critic_kernel(%arg0: i32, %arg1: memref<64x16xf32, #tpu.memory_space<vmem>>, %arg2: memref<8x6xf32, #tpu.memory_space<vmem>>, %arg3: memref<8x64xbf16, #tpu.memory_space<vmem>>, %arg4: memref<16x256xbf16, #tpu.memory_space<vmem>>, %arg5: memref<1x256xf32, #tpu.memory_space<vmem>>, %arg6: memref<256x768xbf16, #tpu.memory_space<vmem>>, %arg7: memref<1x768xf32, #tpu.memory_space<vmem>>, %arg8: memref<256x256xbf16, #tpu.memory_space<vmem>>, %arg9: memref<1x256xf32, #tpu.memory_space<vmem>>, %arg10: memref<1x256xf32, #tpu.memory_space<vmem>>, %arg11: memref<1x256xf32, #tpu.memory_space<vmem>>, %arg12: memref<256x512xbf16, #tpu.memory_space<vmem>>, %arg13: memref<1x512xf32, #tpu.memory_space<vmem>>, %arg14: memref<512x256xbf16, #tpu.memory_space<vmem>>, %arg15: memref<1x256xf32, #tpu.memory_space<vmem>>, %arg16: memref<1x256xf32, #tpu.memory_space<vmem>>, %arg17: memref<1x256xf32, #tpu.memory_space<vmem>>, %arg18: memref<256x512xbf16, #tpu.memory_space<vmem>>, %arg19: memref<6x512xbf16, #tpu.memory_space<vmem>>, %arg20: memref<1x512xf32, #tpu.memory_space<vmem>>, %arg21: memref<512x2xbf16, #tpu.memory_space<vmem>>, %arg22: memref<2x1xf32, #tpu.memory_space<vmem>>, %arg23: memref<1x2x8xf32, #tpu.memory_space<vmem>>) attributes {dimension_semantics = [#tpu.dimension_semantics<parallel>], iteration_bounds = array<i64: 1>, scalar_prefetch = 0 : i64, scratch_operands = 0 : i64, tpu.core_type = #tpu.core_type<tc>, window_params = [{transform_indices = @transform_0, window_bounds = array<i64: 64, 16>}, {transform_indices = @transform_1, window_bounds = array<i64: 8, 6>}, {pipeline_mode = #tpu.pipeline_mode<synchronous>, transform_indices = @transform_2, window_bounds = array<i64: 8, 64>}, {pipeline_mode = #tpu.pipeline_mode<synchronous>, transform_indices = @transform_3, window_bounds = array<i64: 16, 256>}, {pipeline_mode = #tpu.pipeline_mode<synchronous>, transform_indices = @transform_4, window_bounds = array<i64: 1, 256>}, {pipeline_mode = #tpu.pipeline_mode<synchronous>, transform_indices = @transform_5, window_bounds = array<i64: 256, 768>}, {pipeline_mode = #tpu.pipeline_mode<synchronous>, transform_indices = @transform_6, window_bounds = array<i64: 1, 768>}, {pipeline_mode = #tpu.pipeline_mode<synchronous>, transform_indices = @transform_7, window_bounds = array<i64: 256, 256>}, {pipeline_mode = #tpu.pipeline_mode<synchronous>, transform_indices = @transform_8, window_bounds = array<i64: 1, 256>}, {pipeline_mode = #tpu.pipeline_mode<synchronous>, transform_indices = @transform_9, window_bounds = array<i64: 1, 256>}, {pipeline_mode = #tpu.pipeline_mode<synchronous>, transform_indices = @transform_10, window_bounds = array<i64: 1, 256>}, {pipeline_mode = #tpu.pipeline_mode<synchronous>, transform_indices = @transform_11, window_bounds = array<i64: 256, 512>}, {pipeline_mode = #tpu.pipeline_mode<synchronous>, transform_indices = @transform_12, window_bounds = array<i64: 1, 512>}, {pipeline_mode = #tpu.pipeline_mode<synchronous>, transform_indices = @transform_13, window_bounds = array<i64: 512, 256>}, {pipeline_mode = #tpu.pipeline_mode<synchronous>, transform_indices = @transform_14, window_bounds = array<i64: 1, 256>}, {pipeline_mode = #tpu.pipeline_mode<synchronous>, transform_indices = @transform_15, window_bounds = array<i64: 1, 256>}, {pipeline_mode = #tpu.pipeline_mode<synchronous>, transform_indices = @transform_16, window_bounds = array<i64: 1, 256>}, {pipeline_mode = #tpu.pipeline_mode<synchronous>, transform_indices = @transform_17, window_bounds = array<i64: 256, 512>}, {pipeline_mode = #tpu.pipeline_mode<synchronous>, transform_indices = @transform_18, window_bounds = array<i64: 6, 512>}, {pipeline_mode = #tpu.pipeline_mode<synchronous>, transform_indices = @transform_19, window_bounds = array<i64: 1, 512>}, {pipeline_mode = #tpu.pipeline_mode<synchronous>, transform_indices = @transform_20, window_bounds = array<i64: 512, 2>}, {pipeline_mode = #tpu.pipeline_mode<synchronous>, transform_indices = @transform_21, window_bounds = array<i64: 2, 1>}, {transform_indices = @transform_22, window_bounds = array<i64: 1, 2, 8>}]} {
    %c0 = arith.constant 0 : index
    %c0_0 = arith.constant 0 : index
    %0 = vector.load %arg1[%c0, %c0_0] : memref<64x16xf32, #tpu.memory_space<vmem>>, vector<64x16xf32>
    %1 = arith.truncf %0 : vector<64x16xf32> to vector<64x16xbf16>
    %c0_1 = arith.constant 0 : index
    %c0_2 = arith.constant 0 : index
    %2 = vector.load %arg4[%c0_1, %c0_2] : memref<16x256xbf16, #tpu.memory_space<vmem>>, vector<16x256xbf16>
    %cst = arith.constant dense<0.000000e+00> : vector<64x256xf32>
    %3 = tpu.matmul %1, %2, %cst {dimension_numbers = #tpu.dot_dimension_numbers<[1], [0], [0], [1], [0, 0, 1, 1], [], []>} : vector<64x16xbf16>, vector<16x256xbf16>, vector<64x256xf32> -> vector<64x256xf32>
    %c0_3 = arith.constant 0 : index
    %c0_4 = arith.constant 0 : index
    %4 = vector.load %arg5[%c0_3, %c0_4] : memref<1x256xf32, #tpu.memory_space<vmem>>, vector<1x256xf32>
    %5 = vector.broadcast %4 : vector<1x256xf32> to vector<64x256xf32>
    %6 = arith.addf %3, %5 : vector<64x256xf32>
    %7 = arith.truncf %6 : vector<64x256xf32> to vector<64x256xbf16>
    %c0_5 = arith.constant 0 : index
    %c0_6 = arith.constant 0 : index
    %8 = vector.load %arg6[%c0_5, %c0_6] : memref<256x768xbf16, #tpu.memory_space<vmem>>, vector<256x768xbf16>
    %cst_7 = arith.constant dense<0.000000e+00> : vector<64x768xf32>
    %9 = tpu.matmul %7, %8, %cst_7 {dimension_numbers = #tpu.dot_dimension_numbers<[1], [0], [0], [1], [0, 0, 1, 1], [], []>} : vector<64x256xbf16>, vector<256x768xbf16>, vector<64x768xf32> -> vector<64x768xf32>
    %c0_8 = arith.constant 0 : index
    %c0_9 = arith.constant 0 : index
    %10 = vector.load %arg7[%c0_8, %c0_9] : memref<1x768xf32, #tpu.memory_space<vmem>>, vector<1x768xf32>
    %11 = vector.broadcast %10 : vector<1x768xf32> to vector<64x768xf32>
    %12 = arith.addf %9, %11 : vector<64x768xf32>
    %13 = vector.extract_strided_slice %12 {offsets = [0, 0], sizes = [64, 128], strides = [1, 1]} : vector<64x768xf32> to vector<64x128xf32>
    %14 = vector.shape_cast %13 : vector<64x128xf32> to vector<8x8x128xf32>
    %15 = arith.truncf %14 : vector<8x8x128xf32> to vector<8x8x128xbf16>
    %16 = vector.extract_strided_slice %12 {offsets = [0, 256], sizes = [64, 128], strides = [1, 1]} : vector<64x768xf32> to vector<64x128xf32>
    %17 = vector.shape_cast %16 : vector<64x128xf32> to vector<8x8x128xf32>
    %18 = arith.truncf %17 : vector<8x8x128xf32> to vector<8x8x128xbf16>
    %19 = vector.extract_strided_slice %12 {offsets = [0, 512], sizes = [64, 128], strides = [1, 1]} : vector<64x768xf32> to vector<64x128xf32>
    %20 = vector.shape_cast %19 : vector<64x128xf32> to vector<8x8x128xf32>
    %21 = arith.truncf %20 : vector<8x8x128xf32> to vector<8x8x128xbf16>
    "tpu.trace_start"() <{level = 10 : i32, message = "bqd,bkd->bqk"}> : () -> ()
    %cst_10 = arith.constant dense<0.000000e+00> : vector<8x8x8xf32>
    %22 = tpu.matmul %15, %18, %cst_10 {dimension_numbers = #tpu.dot_dimension_numbers<[2], [2], [1], [1], [0, 0, 0, 1, 1, 1], [0], [0]>} : vector<8x8x128xbf16>, vector<8x8x128xbf16>, vector<8x8x8xf32> -> vector<8x8x8xf32>
    "tpu.trace_stop"() : () -> ()
    %cst_11 = arith.constant 0.0883883461 : f32
    %23 = vector.broadcast %cst_11 : f32 to vector<8x8x8xf32>
    %24 = arith.mulf %22, %23 : vector<8x8x8xf32>
    %cst_12 = arith.constant dense<0xFF800000> : vector<8x8xf32>
    %25 = vector.multi_reduction <maximumf>, %24, %cst_12 [2] : vector<8x8x8xf32> to vector<8x8xf32>
    %26 = vector.shape_cast %25 : vector<8x8xf32> to vector<8x8x1xf32>
    %27 = vector.broadcast %26 : vector<8x8x1xf32> to vector<8x8x8xf32>
    %28 = arith.subf %24, %27 : vector<8x8x8xf32>
    %29 = math.exp %28 : vector<8x8x8xf32>
    %cst_13 = arith.constant dense<0.000000e+00> : vector<8x8xf32>
    %30 = vector.multi_reduction <add>, %29, %cst_13 [2] : vector<8x8x8xf32> to vector<8x8xf32>
    %31 = vector.shape_cast %30 : vector<8x8xf32> to vector<8x8x1xf32>
    %32 = tpu.reciprocal %31 {approx = true} : vector<8x8x1xf32> -> vector<8x8x1xf32>
    %33 = vector.broadcast %32 : vector<8x8x1xf32> to vector<8x8x8xf32>
    %34 = arith.mulf %29, %33 : vector<8x8x8xf32>
    %35 = arith.truncf %34 : vector<8x8x8xf32> to vector<8x8x8xbf16>
    "tpu.trace_start"() <{level = 10 : i32, message = "bqk,bkd->bqd"}> : () -> ()
    %cst_14 = arith.constant dense<0.000000e+00> : vector<8x8x128xf32>
    %36 = tpu.matmul %35, %21, %cst_14 {dimension_numbers = #tpu.dot_dimension_numbers<[2], [1], [1], [2], [0, 0, 0, 1, 1, 2], [0], [0]>} : vector<8x8x8xbf16>, vector<8x8x128xbf16>, vector<8x8x128xf32> -> vector<8x8x128xf32>
    "tpu.trace_stop"() : () -> ()
    %37 = vector.extract_strided_slice %12 {offsets = [0, 128], sizes = [64, 128], strides = [1, 1]} : vector<64x768xf32> to vector<64x128xf32>
    %38 = vector.shape_cast %37 : vector<64x128xf32> to vector<8x8x128xf32>
    %39 = arith.truncf %38 : vector<8x8x128xf32> to vector<8x8x128xbf16>
    %40 = vector.extract_strided_slice %12 {offsets = [0, 384], sizes = [64, 128], strides = [1, 1]} : vector<64x768xf32> to vector<64x128xf32>
    %41 = vector.shape_cast %40 : vector<64x128xf32> to vector<8x8x128xf32>
    %42 = arith.truncf %41 : vector<8x8x128xf32> to vector<8x8x128xbf16>
    %43 = vector.extract_strided_slice %12 {offsets = [0, 640], sizes = [64, 128], strides = [1, 1]} : vector<64x768xf32> to vector<64x128xf32>
    %44 = vector.shape_cast %43 : vector<64x128xf32> to vector<8x8x128xf32>
    %45 = arith.truncf %44 : vector<8x8x128xf32> to vector<8x8x128xbf16>
    "tpu.trace_start"() <{level = 10 : i32, message = "bqd,bkd->bqk"}> : () -> ()
    %cst_15 = arith.constant dense<0.000000e+00> : vector<8x8x8xf32>
    %46 = tpu.matmul %39, %42, %cst_15 {dimension_numbers = #tpu.dot_dimension_numbers<[2], [2], [1], [1], [0, 0, 0, 1, 1, 1], [0], [0]>} : vector<8x8x128xbf16>, vector<8x8x128xbf16>, vector<8x8x8xf32> -> vector<8x8x8xf32>
    "tpu.trace_stop"() : () -> ()
    %cst_16 = arith.constant 0.0883883461 : f32
    %47 = vector.broadcast %cst_16 : f32 to vector<8x8x8xf32>
    %48 = arith.mulf %46, %47 : vector<8x8x8xf32>
    %cst_17 = arith.constant dense<0xFF800000> : vector<8x8xf32>
    %49 = vector.multi_reduction <maximumf>, %48, %cst_17 [2] : vector<8x8x8xf32> to vector<8x8xf32>
    %50 = vector.shape_cast %49 : vector<8x8xf32> to vector<8x8x1xf32>
    %51 = vector.broadcast %50 : vector<8x8x1xf32> to vector<8x8x8xf32>
    %52 = arith.subf %48, %51 : vector<8x8x8xf32>
    %53 = math.exp %52 : vector<8x8x8xf32>
    %cst_18 = arith.constant dense<0.000000e+00> : vector<8x8xf32>
    %54 = vector.multi_reduction <add>, %53, %cst_18 [2] : vector<8x8x8xf32> to vector<8x8xf32>
    %55 = vector.shape_cast %54 : vector<8x8xf32> to vector<8x8x1xf32>
    %56 = tpu.reciprocal %55 {approx = true} : vector<8x8x1xf32> -> vector<8x8x1xf32>
    %57 = vector.broadcast %56 : vector<8x8x1xf32> to vector<8x8x8xf32>
    %58 = arith.mulf %53, %57 : vector<8x8x8xf32>
    %59 = arith.truncf %58 : vector<8x8x8xf32> to vector<8x8x8xbf16>
    "tpu.trace_start"() <{level = 10 : i32, message = "bqk,bkd->bqd"}> : () -> ()
    %cst_19 = arith.constant dense<0.000000e+00> : vector<8x8x128xf32>
    %60 = tpu.matmul %59, %45, %cst_19 {dimension_numbers = #tpu.dot_dimension_numbers<[2], [1], [1], [2], [0, 0, 0, 1, 1, 2], [0], [0]>} : vector<8x8x8xbf16>, vector<8x8x128xbf16>, vector<8x8x128xf32> -> vector<8x8x128xf32>
    "tpu.trace_stop"() : () -> ()
    %61 = tpu.concatenate %36, %60 in 2 : vector<8x8x128xf32>, vector<8x8x128xf32> -> vector<8x8x256xf32>
    %62 = vector.shape_cast %61 : vector<8x8x256xf32> to vector<64x256xf32>
    %63 = arith.truncf %62 : vector<64x256xf32> to vector<64x256xbf16>
    %c0_20 = arith.constant 0 : index
    %c0_21 = arith.constant 0 : index
    %64 = vector.load %arg8[%c0_20, %c0_21] : memref<256x256xbf16, #tpu.memory_space<vmem>>, vector<256x256xbf16>
    %cst_22 = arith.constant dense<0.000000e+00> : vector<64x256xf32>
    %65 = tpu.matmul %63, %64, %cst_22 {dimension_numbers = #tpu.dot_dimension_numbers<[1], [0], [0], [1], [0, 0, 1, 1], [], []>} : vector<64x256xbf16>, vector<256x256xbf16>, vector<64x256xf32> -> vector<64x256xf32>
    %c0_23 = arith.constant 0 : index
    %c0_24 = arith.constant 0 : index
    %66 = vector.load %arg9[%c0_23, %c0_24] : memref<1x256xf32, #tpu.memory_space<vmem>>, vector<1x256xf32>
    %67 = vector.broadcast %66 : vector<1x256xf32> to vector<64x256xf32>
    %68 = arith.addf %65, %67 : vector<64x256xf32>
    %69 = arith.addf %6, %68 : vector<64x256xf32>
    %c0_25 = arith.constant 0 : index
    %c0_26 = arith.constant 0 : index
    %70 = vector.load %arg10[%c0_25, %c0_26] : memref<1x256xf32, #tpu.memory_space<vmem>>, vector<1x256xf32>
    %c0_27 = arith.constant 0 : index
    %c0_28 = arith.constant 0 : index
    %71 = vector.load %arg11[%c0_27, %c0_28] : memref<1x256xf32, #tpu.memory_space<vmem>>, vector<1x256xf32>
    %cst_29 = arith.constant dense<0.000000e+00> : vector<64xf32>
    %72 = vector.multi_reduction <add>, %69, %cst_29 [1] : vector<64x256xf32> to vector<64xf32>
    %73 = vector.shape_cast %72 : vector<64xf32> to vector<64x1xf32>
    %cst_30 = arith.constant 2.560000e+02 : f32
    %74 = vector.broadcast %cst_30 : f32 to vector<64x1xf32>
    %75 = arith.divf %73, %74 : vector<64x1xf32>
    %76 = vector.broadcast %75 : vector<64x1xf32> to vector<64x256xf32>
    %77 = arith.subf %69, %76 : vector<64x256xf32>
    %78 = arith.mulf %77, %77 : vector<64x256xf32>
    %cst_31 = arith.constant dense<0.000000e+00> : vector<64xf32>
    %79 = vector.multi_reduction <add>, %78, %cst_31 [1] : vector<64x256xf32> to vector<64xf32>
    %80 = vector.shape_cast %79 : vector<64xf32> to vector<64x1xf32>
    %cst_32 = arith.constant 2.560000e+02 : f32
    %81 = vector.broadcast %cst_32 : f32 to vector<64x1xf32>
    %82 = arith.divf %80, %81 : vector<64x1xf32>
    %83 = vector.broadcast %75 : vector<64x1xf32> to vector<64x256xf32>
    %84 = arith.subf %69, %83 : vector<64x256xf32>
    %cst_33 = arith.constant 9.99999974E-6 : f32
    %85 = vector.broadcast %cst_33 : f32 to vector<64x1xf32>
    %86 = arith.addf %82, %85 : vector<64x1xf32>
    %87 = math.rsqrt %86 : vector<64x1xf32>
    %88 = vector.broadcast %87 : vector<64x1xf32> to vector<64x256xf32>
    %89 = arith.mulf %84, %88 : vector<64x256xf32>
    %90 = vector.broadcast %70 : vector<1x256xf32> to vector<64x256xf32>
    %91 = arith.mulf %89, %90 : vector<64x256xf32>
    %92 = vector.broadcast %71 : vector<1x256xf32> to vector<64x256xf32>
    %93 = arith.addf %91, %92 : vector<64x256xf32>
    %94 = arith.truncf %93 : vector<64x256xf32> to vector<64x256xbf16>
    %c0_34 = arith.constant 0 : index
    %c0_35 = arith.constant 0 : index
    %95 = vector.load %arg12[%c0_34, %c0_35] : memref<256x512xbf16, #tpu.memory_space<vmem>>, vector<256x512xbf16>
    %cst_36 = arith.constant dense<0.000000e+00> : vector<64x512xf32>
    %96 = tpu.matmul %94, %95, %cst_36 {dimension_numbers = #tpu.dot_dimension_numbers<[1], [0], [0], [1], [0, 0, 1, 1], [], []>} : vector<64x256xbf16>, vector<256x512xbf16>, vector<64x512xf32> -> vector<64x512xf32>
    %c0_37 = arith.constant 0 : index
    %c0_38 = arith.constant 0 : index
    %97 = vector.load %arg13[%c0_37, %c0_38] : memref<1x512xf32, #tpu.memory_space<vmem>>, vector<1x512xf32>
    %98 = vector.broadcast %97 : vector<1x512xf32> to vector<64x512xf32>
    %99 = arith.addf %96, %98 : vector<64x512xf32>
    %cst_39 = arith.constant 0.000000e+00 : f32
    %100 = vector.broadcast %cst_39 : f32 to vector<64x512xf32>
    %101 = arith.maximumf %99, %100 : vector<64x512xf32>
    %102 = arith.truncf %101 : vector<64x512xf32> to vector<64x512xbf16>
    %c0_40 = arith.constant 0 : index
    %c0_41 = arith.constant 0 : index
    %103 = vector.load %arg14[%c0_40, %c0_41] : memref<512x256xbf16, #tpu.memory_space<vmem>>, vector<512x256xbf16>
    %cst_42 = arith.constant dense<0.000000e+00> : vector<64x256xf32>
    %104 = tpu.matmul %102, %103, %cst_42 {dimension_numbers = #tpu.dot_dimension_numbers<[1], [0], [0], [1], [0, 0, 1, 1], [], []>} : vector<64x512xbf16>, vector<512x256xbf16>, vector<64x256xf32> -> vector<64x256xf32>
    %c0_43 = arith.constant 0 : index
    %c0_44 = arith.constant 0 : index
    %105 = vector.load %arg15[%c0_43, %c0_44] : memref<1x256xf32, #tpu.memory_space<vmem>>, vector<1x256xf32>
    %106 = vector.broadcast %105 : vector<1x256xf32> to vector<64x256xf32>
    %107 = arith.addf %104, %106 : vector<64x256xf32>
    %108 = arith.addf %93, %107 : vector<64x256xf32>
    %c0_45 = arith.constant 0 : index
    %c0_46 = arith.constant 0 : index
    %109 = vector.load %arg16[%c0_45, %c0_46] : memref<1x256xf32, #tpu.memory_space<vmem>>, vector<1x256xf32>
    %c0_47 = arith.constant 0 : index
    %c0_48 = arith.constant 0 : index
    %110 = vector.load %arg17[%c0_47, %c0_48] : memref<1x256xf32, #tpu.memory_space<vmem>>, vector<1x256xf32>
    %cst_49 = arith.constant dense<0.000000e+00> : vector<64xf32>
    %111 = vector.multi_reduction <add>, %108, %cst_49 [1] : vector<64x256xf32> to vector<64xf32>
    %112 = vector.shape_cast %111 : vector<64xf32> to vector<64x1xf32>
    %cst_50 = arith.constant 2.560000e+02 : f32
    %113 = vector.broadcast %cst_50 : f32 to vector<64x1xf32>
    %114 = arith.divf %112, %113 : vector<64x1xf32>
    %115 = vector.broadcast %114 : vector<64x1xf32> to vector<64x256xf32>
    %116 = arith.subf %108, %115 : vector<64x256xf32>
    %117 = arith.mulf %116, %116 : vector<64x256xf32>
    %cst_51 = arith.constant dense<0.000000e+00> : vector<64xf32>
    %118 = vector.multi_reduction <add>, %117, %cst_51 [1] : vector<64x256xf32> to vector<64xf32>
    %119 = vector.shape_cast %118 : vector<64xf32> to vector<64x1xf32>
    %cst_52 = arith.constant 2.560000e+02 : f32
    %120 = vector.broadcast %cst_52 : f32 to vector<64x1xf32>
    %121 = arith.divf %119, %120 : vector<64x1xf32>
    %122 = vector.broadcast %114 : vector<64x1xf32> to vector<64x256xf32>
    %123 = arith.subf %108, %122 : vector<64x256xf32>
    %cst_53 = arith.constant 9.99999974E-6 : f32
    %124 = vector.broadcast %cst_53 : f32 to vector<64x1xf32>
    %125 = arith.addf %121, %124 : vector<64x1xf32>
    %126 = math.rsqrt %125 : vector<64x1xf32>
    %127 = vector.broadcast %126 : vector<64x1xf32> to vector<64x256xf32>
    %128 = arith.mulf %123, %127 : vector<64x256xf32>
    %129 = vector.broadcast %109 : vector<1x256xf32> to vector<64x256xf32>
    %130 = arith.mulf %128, %129 : vector<64x256xf32>
    %131 = vector.broadcast %110 : vector<1x256xf32> to vector<64x256xf32>
    %132 = arith.addf %130, %131 : vector<64x256xf32>
    %c0_54 = arith.constant 0 : index
    %c0_55 = arith.constant 0 : index
    %133 = vector.load %arg3[%c0_54, %c0_55] : memref<8x64xbf16, #tpu.memory_space<vmem>>, vector<8x64xbf16>
    %134 = arith.truncf %132 : vector<64x256xf32> to vector<64x256xbf16>
    %cst_56 = arith.constant dense<0.000000e+00> : vector<8x256xf32>
    %135 = tpu.matmul %133, %134, %cst_56 {dimension_numbers = #tpu.dot_dimension_numbers<[1], [0], [0], [1], [0, 0, 1, 1], [], []>} : vector<8x64xbf16>, vector<64x256xbf16>, vector<8x256xf32> -> vector<8x256xf32>
    %c0_57 = arith.constant 0 : index
    %c0_58 = arith.constant 0 : index
    %136 = vector.load %arg2[%c0_57, %c0_58] : memref<8x6xf32, #tpu.memory_space<vmem>>, vector<8x6xf32>
    %137 = arith.truncf %136 : vector<8x6xf32> to vector<8x6xbf16>
    %138 = arith.truncf %135 : vector<8x256xf32> to vector<8x256xbf16>
    %c0_59 = arith.constant 0 : index
    %c0_60 = arith.constant 0 : index
    %139 = vector.load %arg18[%c0_59, %c0_60] : memref<256x512xbf16, #tpu.memory_space<vmem>>, vector<256x512xbf16>
    %cst_61 = arith.constant dense<0.000000e+00> : vector<8x512xf32>
    %140 = tpu.matmul %138, %139, %cst_61 {dimension_numbers = #tpu.dot_dimension_numbers<[1], [0], [0], [1], [0, 0, 1, 1], [], []>} : vector<8x256xbf16>, vector<256x512xbf16>, vector<8x512xf32> -> vector<8x512xf32>
    %c0_62 = arith.constant 0 : index
    %c0_63 = arith.constant 0 : index
    %141 = vector.load %arg19[%c0_62, %c0_63] : memref<6x512xbf16, #tpu.memory_space<vmem>>, vector<6x512xbf16>
    %cst_64 = arith.constant dense<0.000000e+00> : vector<8x512xf32>
    %142 = tpu.matmul %137, %141, %cst_64 {dimension_numbers = #tpu.dot_dimension_numbers<[1], [0], [0], [1], [0, 0, 1, 1], [], []>} : vector<8x6xbf16>, vector<6x512xbf16>, vector<8x512xf32> -> vector<8x512xf32>
    %143 = arith.addf %140, %142 : vector<8x512xf32>
    %c0_65 = arith.constant 0 : index
    %c0_66 = arith.constant 0 : index
    %144 = vector.load %arg20[%c0_65, %c0_66] : memref<1x512xf32, #tpu.memory_space<vmem>>, vector<1x512xf32>
    %145 = vector.broadcast %144 : vector<1x512xf32> to vector<8x512xf32>
    %146 = arith.addf %143, %145 : vector<8x512xf32>
    %cst_67 = arith.constant 0.000000e+00 : f32
    %147 = vector.broadcast %cst_67 : f32 to vector<8x512xf32>
    %148 = arith.maximumf %146, %147 : vector<8x512xf32>
    %c0_68 = arith.constant 0 : index
    %c0_69 = arith.constant 0 : index
    %149 = vector.load %arg21[%c0_68, %c0_69] : memref<512x2xbf16, #tpu.memory_space<vmem>>, vector<512x2xbf16>
    %150 = arith.truncf %148 : vector<8x512xf32> to vector<8x512xbf16>
    %cst_70 = arith.constant dense<0.000000e+00> : vector<2x8xf32>
    %151 = tpu.matmul %149, %150, %cst_70 {dimension_numbers = #tpu.dot_dimension_numbers<[0], [1], [1], [0], [0, 1, 1, 0], [], []>} : vector<512x2xbf16>, vector<8x512xbf16>, vector<2x8xf32> -> vector<2x8xf32>
    %c0_71 = arith.constant 0 : index
    %c0_72 = arith.constant 0 : index
    %152 = vector.load %arg22[%c0_71, %c0_72] : memref<2x1xf32, #tpu.memory_space<vmem>>, vector<2x1xf32>
    %153 = vector.broadcast %152 : vector<2x1xf32> to vector<2x8xf32>
    %154 = arith.addf %151, %153 : vector<2x8xf32>
    %c0_73 = arith.constant 0 : index
    %c0_74 = arith.constant 0 : index
    %c0_75 = arith.constant 0 : index
    %155 = vector.load %arg23[%c0_73, %c0_74, %c0_75] : memref<1x2x8xf32, #tpu.memory_space<vmem>>, vector<1x2x8xf32>
    %156 = vector.shape_cast %155 : vector<1x2x8xf32> to vector<2x8xf32>
    %157 = vector.shape_cast %154 : vector<2x8xf32> to vector<1x2x8xf32>
    tpu.vector_store %arg23[%c0_73, %c0_74, %c0_75], %157 {strides = array<i32>} : memref<1x2x8xf32, #tpu.memory_space<vmem>>, vector<1x2x8xf32>,
    return
  }
  func.func @transform_0(%arg0: i32) -> (i32, i32) {
    %c0_i32 = arith.constant 0 : i32
    %c0_i32_0 = arith.constant 0 : i32
    return %arg0, %c0_i32 : i32, i32
  }
  func.func @transform_1(%arg0: i32) -> (i32, i32) {
    %c0_i32 = arith.constant 0 : i32
    %c0_i32_0 = arith.constant 0 : i32
    return %arg0, %c0_i32 : i32, i32
  }
  func.func @transform_2(%arg0: i32) -> (i32, i32) {
    %c0_i32 = arith.constant 0 : i32
    %c0_i32_0 = arith.constant 0 : i32
    %c0_i32_1 = arith.constant 0 : i32
    return %c0_i32, %c0_i32_0 : i32, i32
  }
  func.func @transform_3(%arg0: i32) -> (i32, i32) {
    %c0_i32 = arith.constant 0 : i32
    %c0_i32_0 = arith.constant 0 : i32
    %c0_i32_1 = arith.constant 0 : i32
    return %c0_i32, %c0_i32_0 : i32, i32
  }
  func.func @transform_4(%arg0: i32) -> (i32, i32) {
    %c0_i32 = arith.constant 0 : i32
    %c0_i32_0 = arith.constant 0 : i32
    %c0_i32_1 = arith.constant 0 : i32
    return %c0_i32, %c0_i32_0 : i32, i32
  }
  func.func @transform_5(%arg0: i32) -> (i32, i32) {
    %c0_i32 = arith.constant 0 : i32
    %c0_i32_0 = arith.constant 0 : i32
    %c0_i32_1 = arith.constant 0 : i32
    return %c0_i32, %c0_i32_0 : i32, i32
  }
  func.func @transform_6(%arg0: i32) -> (i32, i32) {
    %c0_i32 = arith.constant 0 : i32
    %c0_i32_0 = arith.constant 0 : i32
    %c0_i32_1 = arith.constant 0 : i32
    return %c0_i32, %c0_i32_0 : i32, i32
  }
  func.func @transform_7(%arg0: i32) -> (i32, i32) {
    %c0_i32 = arith.constant 0 : i32
    %c0_i32_0 = arith.constant 0 : i32
    %c0_i32_1 = arith.constant 0 : i32
    return %c0_i32, %c0_i32_0 : i32, i32
  }
  func.func @transform_8(%arg0: i32) -> (i32, i32) {
    %c0_i32 = arith.constant 0 : i32
    %c0_i32_0 = arith.constant 0 : i32
    %c0_i32_1 = arith.constant 0 : i32
    return %c0_i32, %c0_i32_0 : i32, i32
  }
  func.func @transform_9(%arg0: i32) -> (i32, i32) {
    %c0_i32 = arith.constant 0 : i32
    %c0_i32_0 = arith.constant 0 : i32
    %c0_i32_1 = arith.constant 0 : i32
    return %c0_i32, %c0_i32_0 : i32, i32
  }
  func.func @transform_10(%arg0: i32) -> (i32, i32) {
    %c0_i32 = arith.constant 0 : i32
    %c0_i32_0 = arith.constant 0 : i32
    %c0_i32_1 = arith.constant 0 : i32
    return %c0_i32, %c0_i32_0 : i32, i32
  }
  func.func @transform_11(%arg0: i32) -> (i32, i32) {
    %c0_i32 = arith.constant 0 : i32
    %c0_i32_0 = arith.constant 0 : i32
    %c0_i32_1 = arith.constant 0 : i32
    return %c0_i32, %c0_i32_0 : i32, i32
  }
  func.func @transform_12(%arg0: i32) -> (i32, i32) {
    %c0_i32 = arith.constant 0 : i32
    %c0_i32_0 = arith.constant 0 : i32
    %c0_i32_1 = arith.constant 0 : i32
    return %c0_i32, %c0_i32_0 : i32, i32
  }
  func.func @transform_13(%arg0: i32) -> (i32, i32) {
    %c0_i32 = arith.constant 0 : i32
    %c0_i32_0 = arith.constant 0 : i32
    %c0_i32_1 = arith.constant 0 : i32
    return %c0_i32, %c0_i32_0 : i32, i32
  }
  func.func @transform_14(%arg0: i32) -> (i32, i32) {
    %c0_i32 = arith.constant 0 : i32
    %c0_i32_0 = arith.constant 0 : i32
    %c0_i32_1 = arith.constant 0 : i32
    return %c0_i32, %c0_i32_0 : i32, i32
  }
  func.func @transform_15(%arg0: i32) -> (i32, i32) {
    %c0_i32 = arith.constant 0 : i32
    %c0_i32_0 = arith.constant 0 : i32
    %c0_i32_1 = arith.constant 0 : i32
    return %c0_i32, %c0_i32_0 : i32, i32
  }
  func.func @transform_16(%arg0: i32) -> (i32, i32) {
    %c0_i32 = arith.constant 0 : i32
    %c0_i32_0 = arith.constant 0 : i32
    %c0_i32_1 = arith.constant 0 : i32
    return %c0_i32, %c0_i32_0 : i32, i32
  }
  func.func @transform_17(%arg0: i32) -> (i32, i32) {
    %c0_i32 = arith.constant 0 : i32
    %c0_i32_0 = arith.constant 0 : i32
    %c0_i32_1 = arith.constant 0 : i32
    return %c0_i32, %c0_i32_0 : i32, i32
  }
  func.func @transform_18(%arg0: i32) -> (i32, i32) {
    %c0_i32 = arith.constant 0 : i32
    %c0_i32_0 = arith.constant 0 : i32
    %c0_i32_1 = arith.constant 0 : i32
    return %c0_i32, %c0_i32_0 : i32, i32
  }
  func.func @transform_19(%arg0: i32) -> (i32, i32) {
    %c0_i32 = arith.constant 0 : i32
    %c0_i32_0 = arith.constant 0 : i32
    %c0_i32_1 = arith.constant 0 : i32
    return %c0_i32, %c0_i32_0 : i32, i32
  }
  func.func @transform_20(%arg0: i32) -> (i32, i32) {
    %c0_i32 = arith.constant 0 : i32
    %c0_i32_0 = arith.constant 0 : i32
    %c0_i32_1 = arith.constant 0 : i32
    return %c0_i32, %c0_i32_0 : i32, i32
  }
  func.func @transform_21(%arg0: i32) -> (i32, i32) {
    %c0_i32 = arith.constant 0 : i32
    %c0_i32_0 = arith.constant 0 : i32
    %c0_i32_1 = arith.constant 0 : i32
    return %c0_i32, %c0_i32_0 : i32, i32
  }
  func.func @transform_22(%arg0: i32) -> (i32, i32, i32) {
    %c0_i32 = arith.constant 0 : i32
    %c0_i32_0 = arith.constant 0 : i32
    %c0_i32_1 = arith.constant 0 : i32
    return %arg0, %c0_i32, %c0_i32_0 : i32, i32, i32
  }
}

</mosaic_0001>

<llo_original>
// kernel: tpu_custom_call.1
$region0: #{tpu_custom_call.1}
  #allocation0 [shape = 'u32[]', space=smem, size = 0x4, offset = 0x4, fixed_abs, tag = 'smem constant byte address 0x4 - core index']
  #allocation1 [shape = 'u32[144,128]{1,0:T(1,128)}', space=vmem, size = 0x12000, scoped, tag = 'internal scratch']
  %s0 = inlined_call_operand.vmem [shape: f32[64,16], index: 0, kind: input, shape index: {}]
  %s1 = inlined_call_operand.vmem [shape: f32[8,6], index: 1, kind: input, shape index: {}]
  %s2 = inlined_call_operand.vmem [shape: bf16[8,64], index: 2, kind: input, shape index: {}]
  %s3 = inlined_call_operand.vmem [shape: bf16[16,256], index: 3, kind: input, shape index: {}]
  %s4 = inlined_call_operand.vmem [shape: f32[1,256], index: 4, kind: input, shape index: {}]
  %s5 = inlined_call_operand.hbm [shape: bf16[256,768], index: 5, kind: input, shape index: {}]
  %s6 = inlined_call_operand.vmem [shape: f32[1,768], index: 6, kind: input, shape index: {}]
  %s7 = inlined_call_operand.vmem [shape: bf16[256,256], index: 7, kind: input, shape index: {}]
  %s8 = inlined_call_operand.vmem [shape: f32[1,256], index: 8, kind: input, shape index: {}]
  %s9 = inlined_call_operand.vmem [shape: f32[1,256], index: 9, kind: input, shape index: {}]
  %s10 = inlined_call_operand.vmem [shape: f32[1,256], index: 10, kind: input, shape index: {}]
  %s11 = inlined_call_operand.hbm [shape: bf16[256,512], index: 11, kind: input, shape index: {}]
  %s12 = inlined_call_operand.vmem [shape: f32[1,512], index: 12, kind: input, shape index: {}]
  %s13 = inlined_call_operand.hbm [shape: bf16[512,256], index: 13, kind: input, shape index: {}]
  %s14 = inlined_call_operand.vmem [shape: f32[1,256], index: 14, kind: input, shape index: {}]
  %s15 = inlined_call_operand.vmem [shape: f32[1,256], index: 15, kind: input, shape index: {}]
  %s16 = inlined_call_operand.vmem [shape: f32[1,256], index: 16, kind: input, shape index: {}]
  %s17 = inlined_call_operand.hbm [shape: bf16[256,512], index: 17, kind: input, shape index: {}]
  %s18 = inlined_call_operand.vmem [shape: bf16[6,512], index: 18, kind: input, shape index: {}]
  %s19 = inlined_call_operand.vmem [shape: f32[1,512], index: 19, kind: input, shape index: {}]
  %s20 = inlined_call_operand.vmem [shape: bf16[512,2], index: 20, kind: input, shape index: {}]
  %s21 = inlined_call_operand.vmem [shape: f32[2,1], index: 21, kind: input, shape index: {}]
  %s22 = inlined_call_operand.hbm [shape: f32[1,2,8], index: 22, kind: output, shape index: {}]
  %s23 = sld [smem:[#allocation0]]
  $region114: #{tpu_custom_call.1} parent=0
    _
  %s25 = ssub.s32 1, %s23
  %s26 = scalar_select 0, %s25, %s23
  $region1: #{tpu_custom_call.1} parent=0
    #allocation2 [shape = 'u8[393216]{0}', space=vmem, size = 0x60000, scoped, tag = 'input window, operand 5, single buffered']
    #allocation3 [shape = 's32[1]{0}', space=sflag, size = 0x4, scoped, tag = 'scoped memory for tpu_custom_call.1']
    #allocation4 [shape = 's32[1]{0}', space=sflag, size = 0x4, scoped, tag = 'scoped memory for tpu_custom_call.1']
    #allocation5 [shape = 'u8[262144]{0}', space=vmem, size = 0x40000, scoped, tag = 'input window, operand 11, single buffered']
    #allocation6 [shape = 's32[1]{0}', space=sflag, size = 0x4, scoped, tag = 'scoped memory for tpu_custom_call.1']
    #allocation7 [shape = 'u8[262144]{0}', space=vmem, size = 0x40000, scoped, tag = 'input window, operand 13, single buffered']
    #allocation8 [shape = 'u8[262144]{0}', space=vmem, size = 0x40000, scoped, tag = 'input window, operand 17, single buffered']
    #allocation9 [shape = 's32[1]{0}', space=sflag, size = 0x4, scoped, tag = 'scoped memory for tpu_custom_call.1']
    #allocation10 [shape = 'u8[1024]{0}', space=vmem, size = 0x400, scoped, tag = 'output window, operand 0, single buffered']
    %27 = vsyncpa [#allocation3], 0
    %28 = vsyncpa [#allocation6], 0
    %29 = vsyncpa [#allocation9], 0
    %30 = vsyncpa [#allocation4], 0
    // Predicated region
    $region2: #{tpu_custom_call.1} parent=1 // pred_check
      _
    $region3: #{tpu_custom_call.1} parent=1 // pred_check_branch
      %32 = sbr.rel (0) target = $region5
    $region4: #{tpu_custom_call.1} parent=1 // pred_region
      _
    $region5: #{tpu_custom_call.1} parent=1 // pred_fallthru
      _
    // Predicated region
    $region6: #{tpu_custom_call.1} parent=1 // pred_check
      _
    $region7: #{tpu_custom_call.1} parent=1 // pred_check_branch
      %34 = sbr.rel (0) target = $region9
    $region8: #{tpu_custom_call.1} parent=1 // pred_region
      _
    $region9: #{tpu_custom_call.1} parent=1 // pred_fallthru
      _
    // Predicated region
    $region10: #{tpu_custom_call.1} parent=1 // pred_check
      _
    $region11: #{tpu_custom_call.1} parent=1 // pred_check_branch
      %36 = sbr.rel (0) target = $region13
    $region12: #{tpu_custom_call.1} parent=1 // pred_region
      _
    $region13: #{tpu_custom_call.1} parent=1 // pred_fallthru
      _
    // Predicated region
    $region14: #{tpu_custom_call.1} parent=1 // pred_check
      _
    $region15: #{tpu_custom_call.1} parent=1 // pred_check_branch
      %38 = sbr.rel (0) target = $region17
    $region16: #{tpu_custom_call.1} parent=1 // pred_region
      _
    $region17: #{tpu_custom_call.1} parent=1 // pred_fallthru
      _
    // Predicated region
    $region18: #{tpu_custom_call.1} parent=1 // pred_check
      _
    $region19: #{tpu_custom_call.1} parent=1 // pred_check_branch
      %40 = sbr.rel (0) target = $region21
    $region20: #{tpu_custom_call.1} parent=1 // pred_region
      _
    $region21: #{tpu_custom_call.1} parent=1 // pred_fallthru
      _
    // Predicated region
    $region22: #{tpu_custom_call.1} parent=1 // pred_check
      _
    $region23: #{tpu_custom_call.1} parent=1 // pred_check_branch
      %42 = sbr.rel (0) target = $region25
    $region24: #{tpu_custom_call.1} parent=1 // pred_region
      %s44 = ssub.s32 12288, 12288
      %45 = vsyncadd [#allocation3], %s44
      %s46 = sshll.u32 [#allocation2], 4
      %s47 = int_to_ptr.vmem [resolvable:$true] %s46
      %52 = dma.hbm_to_vmem [thread:$0]  %s5, 12288, %s47, [#allocation3], 384, 384, 24
    $region25: #{tpu_custom_call.1} parent=1 // pred_fallthru
      _
    // Predicated region
    $region26: #{tpu_custom_call.1} parent=1 // pred_check
      _
    $region27: #{tpu_custom_call.1} parent=1 // pred_check_branch
      %54 = sbr.rel (0) target = $region29
    $region28: #{tpu_custom_call.1} parent=1 // pred_region
      _
    $region29: #{tpu_custom_call.1} parent=1 // pred_fallthru
      _
    // Predicated region
    $region30: #{tpu_custom_call.1} parent=1 // pred_check
      _
    $region31: #{tpu_custom_call.1} parent=1 // pred_check_branch
      %56 = sbr.rel (0) target = $region33
    $region32: #{tpu_custom_call.1} parent=1 // pred_region
      _
    $region33: #{tpu_custom_call.1} parent=1 // pred_fallthru
      _
    // Predicated region
    $region34: #{tpu_custom_call.1} parent=1 // pred_check
      _
    $region35: #{tpu_custom_call.1} parent=1 // pred_check_branch
      %58 = sbr.rel (0) target = $region37
    $region36: #{tpu_custom_call.1} parent=1 // pred_region
      _
    $region37: #{tpu_custom_call.1} parent=1 // pred_fallthru
      _
    // Predicated region
    $region38: #{tpu_custom_call.1} parent=1 // pred_check
      _
    $region39: #{tpu_custom_call.1} parent=1 // pred_check_branch
      %60 = sbr.rel (0) target = $region41
    $region40: #{tpu_custom_call.1} parent=1 // pred_region
      _
    $region41: #{tpu_custom_call.1} parent=1 // pred_fallthru
      _
    // Predicated region
    $region42: #{tpu_custom_call.1} parent=1 // pred_check
      _
    $region43: #{tpu_custom_call.1} parent=1 // pred_check_branch
      %62 = sbr.rel (0) target = $region45
    $region44: #{tpu_custom_call.1} parent=1 // pred_region
      _
    $region45: #{tpu_custom_call.1} parent=1 // pred_fallthru
      _
    // Predicated region
    $region46: #{tpu_custom_call.1} parent=1 // pred_check
      _
    $region47: #{tpu_custom_call.1} parent=1 // pred_check_branch
      %64 = sbr.rel (0) target = $region49
    $region48: #{tpu_custom_call.1} parent=1 // pred_region
      %s66 = ssub.s32 8192, 8192
      %67 = vsyncadd [#allocation6], %s66
      %s68 = sshll.u32 [#allocation5], 4
      %s69 = int_to_ptr.vmem [resolvable:$true] %s68
      %74 = dma.hbm_to_vmem [thread:$0]  %s11, 8192, %s69, [#allocation6], 256, 256, 16
    $region49: #{tpu_custom_call.1} parent=1 // pred_fallthru
      _
    // Predicated region
    $region50: #{tpu_custom_call.1} parent=1 // pred_check
      _
    $region51: #{tpu_custom_call.1} parent=1 // pred_check_branch
      %76 = sbr.rel (0) target = $region53
    $region52: #{tpu_custom_call.1} parent=1 // pred_region
      _
    $region53: #{tpu_custom_call.1} parent=1 // pred_fallthru
      _
    // Predicated region
    $region54: #{tpu_custom_call.1} parent=1 // pred_check
      _
    $region55: #{tpu_custom_call.1} parent=1 // pred_check_branch
      %78 = sbr.rel (0) target = $region57
    $region56: #{tpu_custom_call.1} parent=1 // pred_region
      %s80 = ssub.s32 8192, 8192
      %81 = vsyncadd [#allocation6], %s80
      %s82 = sshll.u32 [#allocation7], 4
      %s83 = int_to_ptr.vmem [resolvable:$true] %s82
      %88 = dma.hbm_to_vmem [thread:$0]  %s13, 8192, %s83, [#allocation6], 128, 128, 8
    $region57: #{tpu_custom_call.1} parent=1 // pred_fallthru
      _
    // Predicated region
    $region58: #{tpu_custom_call.1} parent=1 // pred_check
      _
    $region59: #{tpu_custom_call.1} parent=1 // pred_check_branch
      %90 = sbr.rel (0) target = $region61
    $region60: #{tpu_custom_call.1} parent=1 // pred_region
      _
    $region61: #{tpu_custom_call.1} parent=1 // pred_fallthru
      _
    // Predicated region
    $region62: #{tpu_custom_call.1} parent=1 // pred_check
      _
    $region63: #{tpu_custom_call.1} parent=1 // pred_check_branch
      %92 = sbr.rel (0) target = $region65
    $region64: #{tpu_custom_call.1} parent=1 // pred_region
      _
    $region65: #{tpu_custom_call.1} parent=1 // pred_fallthru
      _
    // Predicated region
    $region66: #{tpu_custom_call.1} parent=1 // pred_check
      _
    $region67: #{tpu_custom_call.1} parent=1 // pred_check_branch
      %94 = sbr.rel (0) target = $region69
    $region68: #{tpu_custom_call.1} parent=1 // pred_region
      _
    $region69: #{tpu_custom_call.1} parent=1 // pred_fallthru
      _
    // Predicated region
    $region70: #{tpu_custom_call.1} parent=1 // pred_check
      _
    $region71: #{tpu_custom_call.1} parent=1 // pred_check_branch
      %96 = sbr.rel (0) target = $region73
    $region72: #{tpu_custom_call.1} parent=1 // pred_region
      %s98 = ssub.s32 8192, 8192
      %99 = vsyncadd [#allocation9], %s98
      %s100 = sshll.u32 [#allocation8], 4
      %s101 = int_to_ptr.vmem [resolvable:$true] %s100
      %106 = dma.hbm_to_vmem [thread:$0]  %s17, 8192, %s101, [#allocation9], 256, 256, 16
    $region73: #{tpu_custom_call.1} parent=1 // pred_fallthru
      _
    // Predicated region
    $region74: #{tpu_custom_call.1} parent=1 // pred_check
      _
    $region75: #{tpu_custom_call.1} parent=1 // pred_check_branch
      %108 = sbr.rel (0) target = $region77
    $region76: #{tpu_custom_call.1} parent=1 // pred_region
      _
    $region77: #{tpu_custom_call.1} parent=1 // pred_fallthru
      _
    // Predicated region
    $region78: #{tpu_custom_call.1} parent=1 // pred_check
      _
    $region79: #{tpu_custom_call.1} parent=1 // pred_check_branch
      %110 = sbr.rel (0) target = $region81
    $region80: #{tpu_custom_call.1} parent=1 // pred_region
      _
    $region81: #{tpu_custom_call.1} parent=1 // pred_fallthru
      _
    // Predicated region
    $region82: #{tpu_custom_call.1} parent=1 // pred_check
      _
    $region83: #{tpu_custom_call.1} parent=1 // pred_check_branch
      %112 = sbr.rel (0) target = $region85
    $region84: #{tpu_custom_call.1} parent=1 // pred_region
      _
    $region85: #{tpu_custom_call.1} parent=1 // pred_fallthru
      _
    // Predicated region
    $region86: #{tpu_custom_call.1} parent=1 // pred_check
      _
    $region87: #{tpu_custom_call.1} parent=1 // pred_check_branch
      %114 = sbr.rel (0) target = $region89
    $region88: #{tpu_custom_call.1} parent=1 // pred_region
      _
    $region89: #{tpu_custom_call.1} parent=1 // pred_fallthru
      _
    // Predicated region
    $region90: #{tpu_custom_call.1} parent=1 // pred_check
      _
    $region91: #{tpu_custom_call.1} parent=1 // pred_check_branch
      %116 = sbr.rel (0) target = $region93
    $region92: #{tpu_custom_call.1} parent=1 // pred_region
      %117 = dma.done [#allocation3], 12288
    $region93: #{tpu_custom_call.1} parent=1 // pred_fallthru
      _
    // Predicated region
    $region94: #{tpu_custom_call.1} parent=1 // pred_check
      _
    $region95: #{tpu_custom_call.1} parent=1 // pred_check_branch
      %119 = sbr.rel (0) target = $region97
    $region96: #{tpu_custom_call.1} parent=1 // pred_region
      %120 = dma.done [#allocation6], 8192
    $region97: #{tpu_custom_call.1} parent=1 // pred_fallthru
      _
    // Predicated region
    $region98: #{tpu_custom_call.1} parent=1 // pred_check
      _
    $region99: #{tpu_custom_call.1} parent=1 // pred_check_branch
      %122 = sbr.rel (0) target = $region101
    $region100: #{tpu_custom_call.1} parent=1 // pred_region
      %123 = dma.done [#allocation6], 8192
    $region101: #{tpu_custom_call.1} parent=1 // pred_fallthru
      _
    // Predicated region
    $region102: #{tpu_custom_call.1} parent=1 // pred_check
      _
    $region103: #{tpu_custom_call.1} parent=1 // pred_check_branch
      %125 = sbr.rel (0) target = $region105
    $region104: #{tpu_custom_call.1} parent=1 // pred_region
      %126 = dma.done [#allocation9], 8192
    $region105: #{tpu_custom_call.1} parent=1 // pred_fallthru
      _
    %v128 = vld [vmem:[%s0] sm:$0xff]
    %v129 = vld [vmem:[%s0 + $0x8] sm:$0xff]
    %v130 = vld [vmem:[%s0 + $0x10] sm:$0xff]
    %v131 = vld [vmem:[%s0 + $0x18] sm:$0xff]
    %v132 = vld [vmem:[%s0 + $0x20] sm:$0xff]
    %v133 = vld [vmem:[%s0 + $0x28] sm:$0xff]
    %v134 = vld [vmem:[%s0 + $0x30] sm:$0xff]
    %v135 = vld [vmem:[%s0 + $0x38] sm:$0xff]
    %v136 = vpack.c.bf16 %v129, %v128
    %v137 = vpack.c.bf16 %v131, %v130
    %v138 = vpack.c.bf16 %v133, %v132
    %v139 = vpack.c.bf16 %v135, %v134
    %v140 = vld [vmem:[%s3] sm:$0xff]
    %v141 = vld [vmem:[%s3 + $0x8] sm:$0xff]
    %v142 = vld [vmem:[%s4] sm:$0x3]
    %v144 = vlaneseq
    %v145 = vshrl.u32 %v144, 7
    %v146 = vsub.s32 0, %v145
    %v147 = vrot.slane %v142, %v146
    %v148 = vlaneseq
    %v149 = vshrl.u32 %v148, 7
    %v150 = vsub.s32 1, %v149
    %v151 = vrot.slane %v142, %v150
    %v156 = vunpack.c.l.b16 %v140
    %v157 = vunpack.c.h.b16 %v140
    %v158 = vunpack.c.l.b16 %v141
    %v159 = vunpack.c.h.b16 %v141
    %v160 = vpack.c.b16 %v158, %v156
    %v161 = vpack.c.b16 %v159, %v157
    %vm164 = vcmask 130048
    %v166 = vsel %vm164, %v136, 0
    %v169 = vsel %vm164, %v137, 0
    %v172 = vsel %vm164, %v138, 0
    %v175 = vsel %vm164, %v139, 0
    %177 = vmatprep.subr.bf16.mxu0 %v161
    %178 = vmatpush1.bf16.msra.mxu0 %v160
    %179 = vmatprep.subr.bf16.mxu0 0
    %180 = vmatpush1.bf16.msra.mxu0 0
    %181 = vmatprep.subr.bf16.mxu0 0
    %182 = vmatpush1.bf16.msra.mxu0 0
    %183 = vmatprep.subr.bf16.mxu0 0
    %184 = vmatpush1.bf16.msra.mxu0 0
    %185 = vmatprep.subr.bf16.mxu0 0
    %186 = vmatpush1.bf16.msra.mxu0 0
    %187 = vmatprep.subr.bf16.mxu0 0
    %188 = vmatpush1.bf16.msra.mxu0 0
    %189 = vmatprep.subr.bf16.mxu0 0
    %190 = vmatpush1.bf16.msra.mxu0 0
    %191 = vmatprep.subr.bf16.mxu0 0
    %192 = vmatpush1.bf16.msra.mxu0 0
    %193 = vmatprep.subr.bf16.mxu0 0
    %194 = vmatpush1.bf16.msra.mxu0 0
    %195 = vmatprep.subr.bf16.mxu0 0
    %196 = vmatpush1.bf16.msra.mxu0 0
    %197 = vmatprep.subr.bf16.mxu0 0
    %198 = vmatpush1.bf16.msra.mxu0 0
    %199 = vmatprep.subr.bf16.mxu0 0
    %200 = vmatpush1.bf16.msra.mxu0 0
    %201 = vmatprep.subr.bf16.mxu0 0
    %202 = vmatpush1.bf16.msra.mxu0 0
    %203 = vmatprep.subr.bf16.mxu0 0
    %204 = vmatpush1.bf16.msra.mxu0 0
    %205 = vmatprep.subr.bf16.mxu0 0
    %206 = vmatpush1.bf16.msra.mxu0 0
    %207 = vmatprep.subr.bf16.mxu0 0
    %208 = vmatpush1.bf16.msra.mxu0 0
    %209 = vmatprep.mubr.bf16.mxu0 0
    %210 = vmatmul.mubr.bf16.gmra.mrb[0].mxu0 %v166
    %v211 = vpop.f32.mrb[0].mxu0
    %v212 = vadd.f32 %v147, %v211
    %v213 = vpop.f32.mrb[0].mxu0
    %v214 = vadd.f32 %v151, %v213
    %v215 = vpop.f32.mrb[0].mxu0
    %v216 = vadd.f32 %v147, %v215
    %v217 = vpop.f32.mrb[0].mxu0
    %v218 = vadd.f32 %v151, %v217
    %219 = vmatprep.mubr.bf16.mxu0 0
    %220 = vmatmul.mubr.bf16.gmra.mrb[0].mxu0 %v169
    %v221 = vpop.f32.mrb[0].mxu0
    %v222 = vadd.f32 %v147, %v221
    %v223 = vpop.f32.mrb[0].mxu0
    %v224 = vadd.f32 %v151, %v223
    %v225 = vpop.f32.mrb[0].mxu0
    %v226 = vadd.f32 %v147, %v225
    %v227 = vpop.f32.mrb[0].mxu0
    %v228 = vadd.f32 %v151, %v227
    %229 = vmatprep.mubr.bf16.mxu0 0
    %230 = vmatmul.mubr.bf16.gmra.mrb[0].mxu0 %v172
    %v231 = vpop.f32.mrb[0].mxu0
    %v232 = vadd.f32 %v147, %v231
    %v233 = vpop.f32.mrb[0].mxu0
    %v234 = vadd.f32 %v151, %v233
    %v235 = vpop.f32.mrb[0].mxu0
    %v236 = vadd.f32 %v147, %v235
    %v237 = vpop.f32.mrb[0].mxu0
    %v238 = vadd.f32 %v151, %v237
    %239 = vmatprep.mubr.bf16.mxu0 0
    %240 = vmatmul.mubr.bf16.gmra.mrb[0].mxu0 %v175
    %v241 = vpop.f32.mrb[0].mxu0
    %v242 = vadd.f32 %v147, %v241
    %v243 = vpop.f32.mrb[0].mxu0
    %v244 = vadd.f32 %v151, %v243
    %v245 = vpop.f32.mrb[0].mxu0
    %v246 = vadd.f32 %v147, %v245
    %v247 = vpop.f32.mrb[0].mxu0
    %v248 = vadd.f32 %v151, %v247
    %249 = vdwg.mxu0
    %v250 = vpack.c.bf16 %v216, %v212
    %v251 = vpack.c.bf16 %v218, %v214
    %v252 = vpack.c.bf16 %v226, %v222
    %v253 = vpack.c.bf16 %v228, %v224
    %v254 = vpack.c.bf16 %v236, %v232
    %v255 = vpack.c.bf16 %v238, %v234
    %v256 = vpack.c.bf16 %v246, %v242
    %v257 = vpack.c.bf16 %v248, %v244
    %v258 = vld [vmem:[#allocation2] sm:$0xff]
    %v259 = vld [vmem:[#allocation2 + $0x8] sm:$0xff]
    %v260 = vld [vmem:[#allocation2 + $0x10] sm:$0xff]
    %v261 = vld [vmem:[#allocation2 + $0x18] sm:$0xff]
    %v262 = vld [vmem:[#allocation2 + $0x20] sm:$0xff]
    %v263 = vld [vmem:[#allocation2 + $0x28] sm:$0xff]
    %v264 = vld [vmem:[#allocation2 + $0x30] sm:$0xff]
    %v265 = vld [vmem:[#allocation2 + $0x38] sm:$0xff]
    %v266 = vld [vmem:[#allocation2 + $0x40] sm:$0xff]
    %v267 = vld [vmem:[#allocation2 + $0x48] sm:$0xff]
    %v268 = vld [vmem:[#allocation2 + $0x50] sm:$0xff]
    %v269 = vld [vmem:[#allocation2 + $0x58] sm:$0xff]
    %v270 = vld [vmem:[#allocation2 + $0x60] sm:$0xff]
    %v271 = vld [vmem:[#allocation2 + $0x68] sm:$0xff]
    %v272 = vld [vmem:[#allocation2 + $0x70] sm:$0xff]
    %v273 = vld [vmem:[#allocation2 + $0x78] sm:$0xff]
    %v274 = vld [vmem:[#allocation2 + $0x80] sm:$0xff]
    %v275 = vld [vmem:[#allocation2 + $0x88] sm:$0xff]
    %v276 = vld [vmem:[#allocation2 + $0x90] sm:$0xff]
    %v277 = vld [vmem:[#allocation2 + $0x98] sm:$0xff]
    %v278 = vld [vmem:[#allocation2 + $0xa0] sm:$0xff]
    %v279 = vld [vmem:[#allocation2 + $0xa8] sm:$0xff]
    %v280 = vld [vmem:[#allocation2 + $0xb0] sm:$0xff]
    %v281 = vld [vmem:[#allocation2 + $0xb8] sm:$0xff]
    %v282 = vld [vmem:[#allocation2 + $0xc0] sm:$0xff]
    %v283 = vld [vmem:[#allocation2 + $0xc8] sm:$0xff]
    %v284 = vld [vmem:[#allocation2 + $0xd0] sm:$0xff]
    %v285 = vld [vmem:[#allocation2 + $0xd8] sm:$0xff]
    %v286 = vld [vmem:[#allocation2 + $0xe0] sm:$0xff]
    %v287 = vld [vmem:[#allocation2 + $0xe8] sm:$0xff]
    %v288 = vld [vmem:[#allocation2 + $0xf0] sm:$0xff]
    %v289 = vld [vmem:[#allocation2 + $0xf8] sm:$0xff]
    %v290 = vld [vmem:[#allocation2 + $0x100] sm:$0xff]
    %v291 = vld [vmem:[#allocation2 + $0x108] sm:$0xff]
    %v292 = vld [vmem:[#allocation2 + $0x110] sm:$0xff]
    %v293 = vld [vmem:[#allocation2 + $0x118] sm:$0xff]
    %v294 = vld [vmem:[#allocation2 + $0x120] sm:$0xff]
    %v295 = vld [vmem:[#allocation2 + $0x128] sm:$0xff]
    %v296 = vld [vmem:[#allocation2 + $0x130] sm:$0xff]
    %v297 = vld [vmem:[#allocation2 + $0x138] sm:$0xff]
    %v298 = vld [vmem:[#allocation2 + $0x140] sm:$0xff]
    %v299 = vld [vmem:[#allocation2 + $0x148] sm:$0xff]
    %v300 = vld [vmem:[#allocation2 + $0x150] sm:$0xff]
    %v301 = vld [vmem:[#allocation2 + $0x158] sm:$0xff]
    %v302 = vld [vmem:[#allocation2 + $0x160] sm:$0xff]
    %v303 = vld [vmem:[#allocation2 + $0x168] sm:$0xff]
    %v304 = vld [vmem:[#allocation2 + $0x170] sm:$0xff]
    %v305 = vld [vmem:[#allocation2 + $0x178] sm:$0xff]
    %v306 = vld [vmem:[#allocation2 + $0x180] sm:$0xff]
    %v307 = vld [vmem:[#allocation2 + $0x188] sm:$0xff]
    %v308 = vld [vmem:[#allocation2 + $0x190] sm:$0xff]
    %v309 = vld [vmem:[#allocation2 + $0x198] sm:$0xff]
    %v310 = vld [vmem:[#allocation2 + $0x1a0] sm:$0xff]
    %v311 = vld [vmem:[#allocation2 + $0x1a8] sm:$0xff]
    %v312 = vld [vmem:[#allocation2 + $0x1b0] sm:$0xff]
    %v313 = vld [vmem:[#allocation2 + $0x1b8] sm:$0xff]
    %v314 = vld [vmem:[#allocation2 + $0x1c0] sm:$0xff]
    %v315 = vld [vmem:[#allocation2 + $0x1c8] sm:$0xff]
    %v316 = vld [vmem:[#allocation2 + $0x1d0] sm:$0xff]
    %v317 = vld [vmem:[#allocation2 + $0x1d8] sm:$0xff]
    %v318 = vld [vmem:[#allocation2 + $0x1e0] sm:$0xff]
    %v319 = vld [vmem:[#allocation2 + $0x1e8] sm:$0xff]
    %v320 = vld [vmem:[#allocation2 + $0x1f0] sm:$0xff]
    %v321 = vld [vmem:[#allocation2 + $0x1f8] sm:$0xff]
    %v322 = vld [vmem:[#allocation2 + $0x200] sm:$0xff]
    %v323 = vld [vmem:[#allocation2 + $0x208] sm:$0xff]
    %v324 = vld [vmem:[#allocation2 + $0x210] sm:$0xff]
    %v325 = vld [vmem:[#allocation2 + $0x218] sm:$0xff]
    %v326 = vld [vmem:[#allocation2 + $0x220] sm:$0xff]
    %v327 = vld [vmem:[#allocation2 + $0x228] sm:$0xff]
    %v328 = vld [vmem:[#allocation2 + $0x230] sm:$0xff]
    %v329 = vld [vmem:[#allocation2 + $0x238] sm:$0xff]
    %v330 = vld [vmem:[#allocation2 + $0x240] sm:$0xff]
    %v331 = vld [vmem:[#allocation2 + $0x248] sm:$0xff]
    %v332 = vld [vmem:[#allocation2 + $0x250] sm:$0xff]
    %v333 = vld [vmem:[#allocation2 + $0x258] sm:$0xff]
    %v334 = vld [vmem:[#allocation2 + $0x260] sm:$0xff]
    %v335 = vld [vmem:[#allocation2 + $0x268] sm:$0xff]
    %v336 = vld [vmem:[#allocation2 + $0x270] sm:$0xff]
    %v337 = vld [vmem:[#allocation2 + $0x278] sm:$0xff]
    %v338 = vld [vmem:[#allocation2 + $0x280] sm:$0xff]
    %v339 = vld [vmem:[#allocation2 + $0x288] sm:$0xff]
    %v340 = vld [vmem:[#allocation2 + $0x290] sm:$0xff]
    %v341 = vld [vmem:[#allocation2 + $0x298] sm:$0xff]
    %v342 = vld [vmem:[#allocation2 + $0x2a0] sm:$0xff]
    %v343 = vld [vmem:[#allocation2 + $0x2a8] sm:$0xff]
    %v344 = vld [vmem:[#allocation2 + $0x2b0] sm:$0xff]
    %v345 = vld [vmem:[#allocation2 + $0x2b8] sm:$0xff]
    %v346 = vld [vmem:[#allocation2 + $0x2c0] sm:$0xff]
    %v347 = vld [vmem:[#allocation2 + $0x2c8] sm:$0xff]
    %v348 = vld [vmem:[#allocation2 + $0x2d0] sm:$0xff]
    %v349 = vld [vmem:[#allocation2 + $0x2d8] sm:$0xff]
    %v350 = vld [vmem:[#allocation2 + $0x2e0] sm:$0xff]
    %v351 = vld [vmem:[#allocation2 + $0x2e8] sm:$0xff]
    %v352 = vld [vmem:[#allocation2 + $0x2f0] sm:$0xff]
    %v353 = vld [vmem:[#allocation2 + $0x2f8] sm:$0xff]
    %v354 = vld [vmem:[%s6] sm:$0x3f]
    %v356 = vlaneseq
    %v357 = vshrl.u32 %v356, 7
    %v358 = vsub.s32 0, %v357
    %v359 = vrot.slane %v354, %v358
    %v360 = vlaneseq
    %v361 = vshrl.u32 %v360, 7
    %v362 = vsub.s32 1, %v361
    %v363 = vrot.slane %v354, %v362
    %v364 = vlaneseq
    %v365 = vshrl.u32 %v364, 7
    %v366 = vsub.s32 2, %v365
    %v367 = vrot.slane %v354, %v366
    %v368 = vlaneseq
    %v369 = vshrl.u32 %v368, 7
    %v370 = vsub.s32 3, %v369
    %v371 = vrot.slane %v354, %v370
    %v372 = vlaneseq
    %v373 = vshrl.u32 %v372, 7
    %v374 = vsub.s32 4, %v373
    %v375 = vrot.slane %v354, %v374
    %v376 = vlaneseq
    %v377 = vshrl.u32 %v376, 7
    %v378 = vsub.s32 5, %v377
    %v379 = vrot.slane %v354, %v378
    %v482 = vunpack.c.l.b16 %v258
    %v483 = vunpack.c.h.b16 %v258
    %v484 = vunpack.c.l.b16 %v259
    %v485 = vunpack.c.h.b16 %v259
    %v486 = vunpack.c.l.b16 %v260
    %v487 = vunpack.c.h.b16 %v260
    %v488 = vunpack.c.l.b16 %v261
    %v489 = vunpack.c.h.b16 %v261
    %v490 = vunpack.c.l.b16 %v262
    %v491 = vunpack.c.h.b16 %v262
    %v492 = vunpack.c.l.b16 %v263
    %v493 = vunpack.c.h.b16 %v263
    %v494 = vunpack.c.l.b16 %v264
    %v495 = vunpack.c.h.b16 %v264
    %v496 = vunpack.c.l.b16 %v265
    %v497 = vunpack.c.h.b16 %v265
    %v498 = vunpack.c.l.b16 %v266
    %v499 = vunpack.c.h.b16 %v266
    %v500 = vunpack.c.l.b16 %v267
    %v501 = vunpack.c.h.b16 %v267
    %v502 = vunpack.c.l.b16 %v268
    %v503 = vunpack.c.h.b16 %v268
    %v504 = vunpack.c.l.b16 %v269
    %v505 = vunpack.c.h.b16 %v269
    %v506 = vunpack.c.l.b16 %v270
    %v507 = vunpack.c.h.b16 %v270
    %v508 = vunpack.c.l.b16 %v271
    %v509 = vunpack.c.h.b16 %v271
    %v510 = vunpack.c.l.b16 %v272
    %v511 = vunpack.c.h.b16 %v272
    %v512 = vunpack.c.l.b16 %v273
    %v513 = vunpack.c.h.b16 %v273
    %v514 = vunpack.c.l.b16 %v274
    %v515 = vunpack.c.h.b16 %v274
    %v516 = vunpack.c.l.b16 %v275
    %v517 = vunpack.c.h.b16 %v275
    %v518 = vunpack.c.l.b16 %v276
    %v519 = vunpack.c.h.b16 %v276
    %v520 = vunpack.c.l.b16 %v277
    %v521 = vunpack.c.h.b16 %v277
    %v522 = vunpack.c.l.b16 %v278
    %v523 = vunpack.c.h.b16 %v278
    %v524 = vunpack.c.l.b16 %v279
    %v525 = vunpack.c.h.b16 %v279
    %v526 = vunpack.c.l.b16 %v280
    %v527 = vunpack.c.h.b16 %v280
    %v528 = vunpack.c.l.b16 %v281
    %v529 = vunpack.c.h.b16 %v281
    %v530 = vunpack.c.l.b16 %v282
    %v531 = vunpack.c.h.b16 %v282
    %v532 = vunpack.c.l.b16 %v283
    %v533 = vunpack.c.h.b16 %v283
    %v534 = vunpack.c.l.b16 %v284
    %v535 = vunpack.c.h.b16 %v284
    %v536 = vunpack.c.l.b16 %v285
    %v537 = vunpack.c.h.b16 %v285
    %v538 = vunpack.c.l.b16 %v286
    %v539 = vunpack.c.h.b16 %v286
    %v540 = vunpack.c.l.b16 %v287
    %v541 = vunpack.c.h.b16 %v287
    %v542 = vunpack.c.l.b16 %v288
    %v543 = vunpack.c.h.b16 %v288
    %v544 = vunpack.c.l.b16 %v289
    %v545 = vunpack.c.h.b16 %v289
    %v546 = vunpack.c.l.b16 %v290
    %v547 = vunpack.c.h.b16 %v290
    %v548 = vunpack.c.l.b16 %v291
    %v549 = vunpack.c.h.b16 %v291
    %v550 = vunpack.c.l.b16 %v292
    %v551 = vunpack.c.h.b16 %v292
    %v552 = vunpack.c.l.b16 %v293
    %v553 = vunpack.c.h.b16 %v293
    %v554 = vunpack.c.l.b16 %v294
    %v555 = vunpack.c.h.b16 %v294
    %v556 = vunpack.c.l.b16 %v295
    %v557 = vunpack.c.h.b16 %v295
    %v558 = vunpack.c.l.b16 %v296
    %v559 = vunpack.c.h.b16 %v296
    %v560 = vunpack.c.l.b16 %v297
    %v561 = vunpack.c.h.b16 %v297
    %v562 = vunpack.c.l.b16 %v298
    %v563 = vunpack.c.h.b16 %v298
    %v564 = vunpack.c.l.b16 %v299
    %v565 = vunpack.c.h.b16 %v299
    %v566 = vunpack.c.l.b16 %v300
    %v567 = vunpack.c.h.b16 %v300
    %v568 = vunpack.c.l.b16 %v301
    %v569 = vunpack.c.h.b16 %v301
    %v570 = vunpack.c.l.b16 %v302
    %v571 = vunpack.c.h.b16 %v302
    %v572 = vunpack.c.l.b16 %v303
    %v573 = vunpack.c.h.b16 %v303
    %v574 = vunpack.c.l.b16 %v304
    %v575 = vunpack.c.h.b16 %v304
    %v576 = vunpack.c.l.b16 %v305
    %v577 = vunpack.c.h.b16 %v305
    %v578 = vunpack.c.l.b16 %v306
    %v579 = vunpack.c.h.b16 %v306
    %v580 = vunpack.c.l.b16 %v307
    %v581 = vunpack.c.h.b16 %v307
    %v582 = vunpack.c.l.b16 %v308
    %v583 = vunpack.c.h.b16 %v308
    %v584 = vunpack.c.l.b16 %v309
    %v585 = vunpack.c.h.b16 %v309
    %v586 = vunpack.c.l.b16 %v310
    %v587 = vunpack.c.h.b16 %v310
    %v588 = vunpack.c.l.b16 %v311
    %v589 = vunpack.c.h.b16 %v311
    %v590 = vunpack.c.l.b16 %v312
    %v591 = vunpack.c.h.b16 %v312
    %v592 = vunpack.c.l.b16 %v313
    %v593 = vunpack.c.h.b16 %v313
    %v594 = vunpack.c.l.b16 %v314
    %v595 = vunpack.c.h.b16 %v314
    %v596 = vunpack.c.l.b16 %v315
    %v597 = vunpack.c.h.b16 %v315
    %v598 = vunpack.c.l.b16 %v316
    %v599 = vunpack.c.h.b16 %v316
    %v600 = vunpack.c.l.b16 %v317
    %v601 = vunpack.c.h.b16 %v317
    %v602 = vunpack.c.l.b16 %v318
    %v603 = vunpack.c.h.b16 %v318
    %v604 = vunpack.c.l.b16 %v319
    %v605 = vunpack.c.h.b16 %v319
    %v606 = vunpack.c.l.b16 %v320
    %v607 = vunpack.c.h.b16 %v320
    %v608 = vunpack.c.l.b16 %v321
    %v609 = vunpack.c.h.b16 %v321
    %v610 = vunpack.c.l.b16 %v322
    %v611 = vunpack.c.h.b16 %v322
    %v612 = vunpack.c.l.b16 %v323
    %v613 = vunpack.c.h.b16 %v323
    %v614 = vunpack.c.l.b16 %v324
    %v615 = vunpack.c.h.b16 %v324
    %v616 = vunpack.c.l.b16 %v325
    %v617 = vunpack.c.h.b16 %v325
    %v618 = vunpack.c.l.b16 %v326
    %v619 = vunpack.c.h.b16 %v326
    %v620 = vunpack.c.l.b16 %v327
    %v621 = vunpack.c.h.b16 %v327
    %v622 = vunpack.c.l.b16 %v328
    %v623 = vunpack.c.h.b16 %v328
    %v624 = vunpack.c.l.b16 %v329
    %v625 = vunpack.c.h.b16 %v329
    %v626 = vunpack.c.l.b16 %v330
    %v627 = vunpack.c.h.b16 %v330
    %v628 = vunpack.c.l.b16 %v331
    %v629 = vunpack.c.h.b16 %v331
    %v630 = vunpack.c.l.b16 %v332
    %v631 = vunpack.c.h.b16 %v332
    %v632 = vunpack.c.l.b16 %v333
    %v633 = vunpack.c.h.b16 %v333
    %v634 = vunpack.c.l.b16 %v334
    %v635 = vunpack.c.h.b16 %v334
    %v636 = vunpack.c.l.b16 %v335
    %v637 = vunpack.c.h.b16 %v335
    %v638 = vunpack.c.l.b16 %v336
    %v639 = vunpack.c.h.b16 %v336
    %v640 = vunpack.c.l.b16 %v337
    %v641 = vunpack.c.h.b16 %v337
    %v642 = vunpack.c.l.b16 %v338
    %v643 = vunpack.c.h.b16 %v338
    %v644 = vunpack.c.l.b16 %v339
    %v645 = vunpack.c.h.b16 %v339
    %v646 = vunpack.c.l.b16 %v340
    %v647 = vunpack.c.h.b16 %v340
    %v648 = vunpack.c.l.b16 %v341
    %v649 = vunpack.c.h.b16 %v341
    %v650 = vunpack.c.l.b16 %v342
    %v651 = vunpack.c.h.b16 %v342
    %v652 = vunpack.c.l.b16 %v343
    %v653 = vunpack.c.h.b16 %v343
    %v654 = vunpack.c.l.b16 %v344
    %v655 = vunpack.c.h.b16 %v344
    %v656 = vunpack.c.l.b16 %v345
    %v657 = vunpack.c.h.b16 %v345
    %v658 = vunpack.c.l.b16 %v346
    %v659 = vunpack.c.h.b16 %v346
    %v660 = vunpack.c.l.b16 %v347
    %v661 = vunpack.c.h.b16 %v347
    %v662 = vunpack.c.l.b16 %v348
    %v663 = vunpack.c.h.b16 %v348
    %v664 = vunpack.c.l.b16 %v349
    %v665 = vunpack.c.h.b16 %v349
    %v666 = vunpack.c.l.b16 %v350
    %v667 = vunpack.c.h.b16 %v350
    %v668 = vunpack.c.l.b16 %v351
    %v669 = vunpack.c.h.b16 %v351
    %v670 = vunpack.c.l.b16 %v352
    %v671 = vunpack.c.h.b16 %v352
    %v672 = vunpack.c.l.b16 %v353
    %v673 = vunpack.c.h.b16 %v353
    %v674 = vpack.c.b16 %v488, %v482
    %v675 = vpack.c.b16 %v489, %v483
    %v676 = vpack.c.b16 %v490, %v484
    %v677 = vpack.c.b16 %v491, %v485
    %v678 = vpack.c.b16 %v492, %v486
    %v679 = vpack.c.b16 %v493, %v487
    %v680 = vpack.c.b16 %v500, %v494
    %v681 = vpack.c.b16 %v501, %v495
    %v682 = vpack.c.b16 %v502, %v496
    %v683 = vpack.c.b16 %v503, %v497
    %v684 = vpack.c.b16 %v504, %v498
    %v685 = vpack.c.b16 %v505, %v499
    %v686 = vpack.c.b16 %v512, %v506
    %v687 = vpack.c.b16 %v513, %v507
    %v688 = vpack.c.b16 %v514, %v508
    %v689 = vpack.c.b16 %v515, %v509
    %v690 = vpack.c.b16 %v516, %v510
    %v691 = vpack.c.b16 %v517, %v511
    %v692 = vpack.c.b16 %v524, %v518
    %v693 = vpack.c.b16 %v525, %v519
    %v694 = vpack.c.b16 %v526, %v520
    %v695 = vpack.c.b16 %v527, %v521
    %v696 = vpack.c.b16 %v528, %v522
    %v697 = vpack.c.b16 %v529, %v523
    %v698 = vpack.c.b16 %v536, %v530
    %v699 = vpack.c.b16 %v537, %v531
    %v700 = vpack.c.b16 %v538, %v532
    %v701 = vpack.c.b16 %v539, %v533
    %v702 = vpack.c.b16 %v540, %v534
    %v703 = vpack.c.b16 %v541, %v535
    %v704 = vpack.c.b16 %v548, %v542
    %v705 = vpack.c.b16 %v549, %v543
    %v706 = vpack.c.b16 %v550, %v544
    %v707 = vpack.c.b16 %v551, %v545
    %v708 = vpack.c.b16 %v552, %v546
    %v709 = vpack.c.b16 %v553, %v547
    %v710 = vpack.c.b16 %v560, %v554
    %v711 = vpack.c.b16 %v561, %v555
    %v712 = vpack.c.b16 %v562, %v556
    %v713 = vpack.c.b16 %v563, %v557
    %v714 = vpack.c.b16 %v564, %v558
    %v715 = vpack.c.b16 %v565, %v559
    %v716 = vpack.c.b16 %v572, %v566
    %v717 = vpack.c.b16 %v573, %v567
    %v718 = vpack.c.b16 %v574, %v568
    %v719 = vpack.c.b16 %v575, %v569
    %v720 = vpack.c.b16 %v576, %v570
    %v721 = vpack.c.b16 %v577, %v571
    %v722 = vpack.c.b16 %v584, %v578
    %v723 = vpack.c.b16 %v585, %v579
    %v724 = vpack.c.b16 %v586, %v580
    %v725 = vpack.c.b16 %v587, %v581
    %v726 = vpack.c.b16 %v588, %v582
    %v727 = vpack.c.b16 %v589, %v583
    %v728 = vpack.c.b16 %v596, %v590
    %v729 = vpack.c.b16 %v597, %v591
    %v730 = vpack.c.b16 %v598, %v592
    %v731 = vpack.c.b16 %v599, %v593
    %v732 = vpack.c.b16 %v600, %v594
    %v733 = vpack.c.b16 %v601, %v595
    %v734 = vpack.c.b16 %v608, %v602
    %v735 = vpack.c.b16 %v609, %v603
    %v736 = vpack.c.b16 %v610, %v604
    %v737 = vpack.c.b16 %v611, %v605
    %v738 = vpack.c.b16 %v612, %v606
    %v739 = vpack.c.b16 %v613, %v607
    %v740 = vpack.c.b16 %v620, %v614
    %v741 = vpack.c.b16 %v621, %v615
    %v742 = vpack.c.b16 %v622, %v616
    %v743 = vpack.c.b16 %v623, %v617
    %v744 = vpack.c.b16 %v624, %v618
    %v745 = vpack.c.b16 %v625, %v619
    %v746 = vpack.c.b16 %v632, %v626
    %v747 = vpack.c.b16 %v633, %v627
    %v748 = vpack.c.b16 %v634, %v628
    %v749 = vpack.c.b16 %v635, %v629
    %v750 = vpack.c.b16 %v636, %v630
    %v751 = vpack.c.b16 %v637, %v631
    %v752 = vpack.c.b16 %v644, %v638
    %v753 = vpack.c.b16 %v645, %v639
    %v754 = vpack.c.b16 %v646, %v640
    %v755 = vpack.c.b16 %v647, %v641
    %v756 = vpack.c.b16 %v648, %v642
    %v757 = vpack.c.b16 %v649, %v643
    %v758 = vpack.c.b16 %v656, %v650
    %v759 = vpack.c.b16 %v657, %v651
    %v760 = vpack.c.b16 %v658, %v652
    %v761 = vpack.c.b16 %v659, %v653
    %v762 = vpack.c.b16 %v660, %v654
    %v763 = vpack.c.b16 %v661, %v655
    %v764 = vpack.c.b16 %v668, %v662
    %v765 = vpack.c.b16 %v669, %v663
    %v766 = vpack.c.b16 %v670, %v664
    %v767 = vpack.c.b16 %v671, %v665
    %v768 = vpack.c.b16 %v672, %v666
    %v769 = vpack.c.b16 %v673, %v667
    %866 = vmatprep.subr.bf16.mxu0 %v675
    %867 = vmatpush1.bf16.msra.mxu0 %v674
    %868 = vmatprep.subr.bf16.mxu0 %v681
    %869 = vmatpush1.bf16.msra.mxu0 %v680
    %870 = vmatprep.subr.bf16.mxu0 %v687
    %871 = vmatpush1.bf16.msra.mxu0 %v686
    %872 = vmatprep.subr.bf16.mxu0 %v693
    %873 = vmatpush1.bf16.msra.mxu0 %v692
    %874 = vmatprep.subr.bf16.mxu0 %v699
    %875 = vmatpush1.bf16.msra.mxu0 %v698
    %876 = vmatprep.subr.bf16.mxu0 %v705
    %877 = vmatpush1.bf16.msra.mxu0 %v704
    %878 = vmatprep.subr.bf16.mxu0 %v711
    %879 = vmatpush1.bf16.msra.mxu0 %v710
    %880 = vmatprep.subr.bf16.mxu0 %v717
    %881 = vmatpush1.bf16.msra.mxu0 %v716
    %882 = vmatprep.subr.bf16.mxu0 %v723
    %883 = vmatpush1.bf16.msra.mxu0 %v722
    %884 = vmatprep.subr.bf16.mxu0 %v729
    %885 = vmatpush1.bf16.msra.mxu0 %v728
    %886 = vmatprep.subr.bf16.mxu0 %v735
    %887 = vmatpush1.bf16.msra.mxu0 %v734
    %888 = vmatprep.subr.bf16.mxu0 %v741
    %889 = vmatpush1.bf16.msra.mxu0 %v740
    %890 = vmatprep.subr.bf16.mxu0 %v747
    %891 = vmatpush1.bf16.msra.mxu0 %v746
    %892 = vmatprep.subr.bf16.mxu0 %v753
    %893 = vmatpush1.bf16.msra.mxu0 %v752
    %894 = vmatprep.subr.bf16.mxu0 %v759
    %895 = vmatpush1.bf16.msra.mxu0 %v758
    %896 = vmatprep.subr.bf16.mxu0 %v765
    %897 = vmatpush1.bf16.msra.mxu0 %v764
    %898 = vmatprep.mubr.bf16.mxu0 %v251
    %899 = vmatmul.mubr.bf16.gmra.mrb[0].mxu0 %v250
    %v900 = vpop.f32.mrb[0].mxu0
    %v901 = vadd.f32 %v359, %v900
    %v902 = vpop.f32.mrb[0].mxu0
    %v903 = vadd.f32 %v363, %v902
    %v904 = vpop.f32.mrb[0].mxu0
    %v905 = vadd.f32 %v359, %v904
    %v906 = vpop.f32.mrb[0].mxu0
    %v907 = vadd.f32 %v363, %v906
    %908 = vmatprep.mubr.bf16.mxu0 %v253
    %909 = vmatmul.mubr.bf16.gmra.mrb[0].mxu0 %v252
    %v910 = vpop.f32.mrb[0].mxu0
    %v911 = vadd.f32 %v359, %v910
    %v912 = vpop.f32.mrb[0].mxu0
    %v913 = vadd.f32 %v363, %v912
    %v914 = vpop.f32.mrb[0].mxu0
    %v915 = vadd.f32 %v359, %v914
    %v916 = vpop.f32.mrb[0].mxu0
    %v917 = vadd.f32 %v363, %v916
    %918 = vmatprep.mubr.bf16.mxu0 %v255
    %919 = vmatmul.mubr.bf16.gmra.mrb[0].mxu0 %v254
    %v920 = vpop.f32.mrb[0].mxu0
    %v921 = vadd.f32 %v359, %v920
    %v922 = vpop.f32.mrb[0].mxu0
    %v923 = vadd.f32 %v363, %v922
    %v924 = vpop.f32.mrb[0].mxu0
    %v925 = vadd.f32 %v359, %v924
    %v926 = vpop.f32.mrb[0].mxu0
    %v927 = vadd.f32 %v363, %v926
    %928 = vmatprep.mubr.bf16.mxu0 %v257
    %929 = vmatmul.mubr.bf16.gmra.mrb[0].mxu0 %v256
    %v930 = vpop.f32.mrb[0].mxu0
    %v931 = vadd.f32 %v359, %v930
    %v932 = vpop.f32.mrb[0].mxu0
    %v933 = vadd.f32 %v363, %v932
    %v934 = vpop.f32.mrb[0].mxu0
    %v935 = vadd.f32 %v359, %v934
    %v936 = vpop.f32.mrb[0].mxu0
    %v937 = vadd.f32 %v363, %v936
    %938 = vdwg.mxu0
    %939 = vmatprep.subr.bf16.mxu0 %v677
    %940 = vmatpush1.bf16.msra.mxu0 %v676
    %941 = vmatprep.subr.bf16.mxu0 %v683
    %942 = vmatpush1.bf16.msra.mxu0 %v682
    %943 = vmatprep.subr.bf16.mxu0 %v689
    %944 = vmatpush1.bf16.msra.mxu0 %v688
    %945 = vmatprep.subr.bf16.mxu0 %v695
    %946 = vmatpush1.bf16.msra.mxu0 %v694
    %947 = vmatprep.subr.bf16.mxu0 %v701
    %948 = vmatpush1.bf16.msra.mxu0 %v700
    %949 = vmatprep.subr.bf16.mxu0 %v707
    %950 = vmatpush1.bf16.msra.mxu0 %v706
    %951 = vmatprep.subr.bf16.mxu0 %v713
    %952 = vmatpush1.bf16.msra.mxu0 %v712
    %953 = vmatprep.subr.bf16.mxu0 %v719
    %954 = vmatpush1.bf16.msra.mxu0 %v718
    %955 = vmatprep.subr.bf16.mxu0 %v725
    %956 = vmatpush1.bf16.msra.mxu0 %v724
    %957 = vmatprep.subr.bf16.mxu0 %v731
    %958 = vmatpush1.bf16.msra.mxu0 %v730
    %959 = vmatprep.subr.bf16.mxu0 %v737
    %960 = vmatpush1.bf16.msra.mxu0 %v736
    %961 = vmatprep.subr.bf16.mxu0 %v743
    %962 = vmatpush1.bf16.msra.mxu0 %v742
    %963 = vmatprep.subr.bf16.mxu0 %v749
    %964 = vmatpush1.bf16.msra.mxu0 %v748
    %965 = vmatprep.subr.bf16.mxu0 %v755
    %966 = vmatpush1.bf16.msra.mxu0 %v754
    %967 = vmatprep.subr.bf16.mxu0 %v761
    %968 = vmatpush1.bf16.msra.mxu0 %v760
    %969 = vmatprep.subr.bf16.mxu0 %v767
    %970 = vmatpush1.bf16.msra.mxu0 %v766
    %971 = vmatprep.mubr.bf16.mxu0 %v251
    %972 = vmatmul.mubr.bf16.gmra.mrb[0].mxu0 %v250
    %v973 = vpop.f32.mrb[0].mxu0
    %v974 = vadd.f32 %v367, %v973
    %v975 = vpop.f32.mrb[0].mxu0
    %v976 = vadd.f32 %v371, %v975
    %v977 = vpop.f32.mrb[0].mxu0
    %v978 = vadd.f32 %v367, %v977
    %v979 = vpop.f32.mrb[0].mxu0
    %v980 = vadd.f32 %v371, %v979
    %981 = vmatprep.mubr.bf16.mxu0 %v253
    %982 = vmatmul.mubr.bf16.gmra.mrb[0].mxu0 %v252
    %v983 = vpop.f32.mrb[0].mxu0
    %v984 = vadd.f32 %v367, %v983
    %v985 = vpop.f32.mrb[0].mxu0
    %v986 = vadd.f32 %v371, %v985
    %v987 = vpop.f32.mrb[0].mxu0
    %v988 = vadd.f32 %v367, %v987
    %v989 = vpop.f32.mrb[0].mxu0
    %v990 = vadd.f32 %v371, %v989
    %991 = vmatprep.mubr.bf16.mxu0 %v255
    %992 = vmatmul.mubr.bf16.gmra.mrb[0].mxu0 %v254
    %v993 = vpop.f32.mrb[0].mxu0
    %v994 = vadd.f32 %v367, %v993
    %v995 = vpop.f32.mrb[0].mxu0
    %v996 = vadd.f32 %v371, %v995
    %v997 = vpop.f32.mrb[0].mxu0
    %v998 = vadd.f32 %v367, %v997
    %v999 = vpop.f32.mrb[0].mxu0
    %v1000 = vadd.f32 %v371, %v999
    %1001 = vmatprep.mubr.bf16.mxu0 %v257
    %1002 = vmatmul.mubr.bf16.gmra.mrb[0].mxu0 %v256
    %v1003 = vpop.f32.mrb[0].mxu0
    %v1004 = vadd.f32 %v367, %v1003
    %v1005 = vpop.f32.mrb[0].mxu0
    %v1006 = vadd.f32 %v371, %v1005
    %v1007 = vpop.f32.mrb[0].mxu0
    %v1008 = vadd.f32 %v367, %v1007
    %v1009 = vpop.f32.mrb[0].mxu0
    %v1010 = vadd.f32 %v371, %v1009
    %1011 = vdwg.mxu0
    %1012 = vmatprep.subr.bf16.mxu0 %v679
    %1013 = vmatpush1.bf16.msra.mxu0 %v678
    %1014 = vmatprep.subr.bf16.mxu0 %v685
    %1015 = vmatpush1.bf16.msra.mxu0 %v684
    %1016 = vmatprep.subr.bf16.mxu0 %v691
    %1017 = vmatpush1.bf16.msra.mxu0 %v690
    %1018 = vmatprep.subr.bf16.mxu0 %v697
    %1019 = vmatpush1.bf16.msra.mxu0 %v696
    %1020 = vmatprep.subr.bf16.mxu0 %v703
    %1021 = vmatpush1.bf16.msra.mxu0 %v702
    %1022 = vmatprep.subr.bf16.mxu0 %v709
    %1023 = vmatpush1.bf16.msra.mxu0 %v708
    %1024 = vmatprep.subr.bf16.mxu0 %v715
    %1025 = vmatpush1.bf16.msra.mxu0 %v714
    %1026 = vmatprep.subr.bf16.mxu0 %v721
    %1027 = vmatpush1.bf16.msra.mxu0 %v720
    %1028 = vmatprep.subr.bf16.mxu0 %v727
    %1029 = vmatpush1.bf16.msra.mxu0 %v726
    %1030 = vmatprep.subr.bf16.mxu0 %v733
    %1031 = vmatpush1.bf16.msra.mxu0 %v732
    %1032 = vmatprep.subr.bf16.mxu0 %v739
    %1033 = vmatpush1.bf16.msra.mxu0 %v738
    %1034 = vmatprep.subr.bf16.mxu0 %v745
    %1035 = vmatpush1.bf16.msra.mxu0 %v744
    %1036 = vmatprep.subr.bf16.mxu0 %v751
    %1037 = vmatpush1.bf16.msra.mxu0 %v750
    %1038 = vmatprep.subr.bf16.mxu0 %v757
    %1039 = vmatpush1.bf16.msra.mxu0 %v756
    %1040 = vmatprep.subr.bf16.mxu0 %v763
    %1041 = vmatpush1.bf16.msra.mxu0 %v762
    %1042 = vmatprep.subr.bf16.mxu0 %v769
    %1043 = vmatpush1.bf16.msra.mxu0 %v768
    %1044 = vmatprep.mubr.bf16.mxu0 %v251
    %1045 = vmatmul.mubr.bf16.gmra.mrb[0].mxu0 %v250
    %v1046 = vpop.f32.mrb[0].mxu0
    %v1047 = vadd.f32 %v375, %v1046
    %v1048 = vpop.f32.mrb[0].mxu0
    %v1049 = vadd.f32 %v379, %v1048
    %v1050 = vpop.f32.mrb[0].mxu0
    %v1051 = vadd.f32 %v375, %v1050
    %v1052 = vpop.f32.mrb[0].mxu0
    %v1053 = vadd.f32 %v379, %v1052
    %1054 = vmatprep.mubr.bf16.mxu0 %v253
    %1055 = vmatmul.mubr.bf16.gmra.mrb[0].mxu0 %v252
    %v1056 = vpop.f32.mrb[0].mxu0
    %v1057 = vadd.f32 %v375, %v1056
    %v1058 = vpop.f32.mrb[0].mxu0
    %v1059 = vadd.f32 %v379, %v1058
    %v1060 = vpop.f32.mrb[0].mxu0
    %v1061 = vadd.f32 %v375, %v1060
    %v1062 = vpop.f32.mrb[0].mxu0
    %v1063 = vadd.f32 %v379, %v1062
    %1064 = vmatprep.mubr.bf16.mxu0 %v255
    %1065 = vmatmul.mubr.bf16.gmra.mrb[0].mxu0 %v254
    %v1066 = vpop.f32.mrb[0].mxu0
    %v1067 = vadd.f32 %v375, %v1066
    %v1068 = vpop.f32.mrb[0].mxu0
    %v1069 = vadd.f32 %v379, %v1068
    %v1070 = vpop.f32.mrb[0].mxu0
    %v1071 = vadd.f32 %v375, %v1070
    %v1072 = vpop.f32.mrb[0].mxu0
    %v1073 = vadd.f32 %v379, %v1072
    %1074 = vmatprep.mubr.bf16.mxu0 %v257
    %1075 = vmatmul.mubr.bf16.gmra.mrb[0].mxu0 %v256
    %v1076 = vpop.f32.mrb[0].mxu0
    %v1077 = vadd.f32 %v375, %v1076
    %v1078 = vpop.f32.mrb[0].mxu0
    %v1079 = vadd.f32 %v379, %v1078
    %v1080 = vpop.f32.mrb[0].mxu0
    %v1081 = vadd.f32 %v375, %v1080
    %v1082 = vpop.f32.mrb[0].mxu0
    %v1083 = vadd.f32 %v379, %v1082
    %1084 = vdwg.mxu0
    %v1085 = vpack.c.bf16 %v901, %v901
    %v1086 = vpack.c.bf16 %v905, %v905
    %v1087 = vpack.c.bf16 %v911, %v911
    %v1088 = vpack.c.bf16 %v915, %v915
    %v1089 = vpack.c.bf16 %v921, %v921
    %v1090 = vpack.c.bf16 %v925, %v925
    %v1091 = vpack.c.bf16 %v931, %v931
    %v1092 = vpack.c.bf16 %v935, %v935
    %v1093 = vpack.c.bf16 %v974, %v974
    %v1094 = vpack.c.bf16 %v978, %v978
    %v1095 = vpack.c.bf16 %v984, %v984
    %v1096 = vpack.c.bf16 %v988, %v988
    %v1097 = vpack.c.bf16 %v994, %v994
    %v1098 = vpack.c.bf16 %v998, %v998
    %v1099 = vpack.c.bf16 %v1004, %v1004
    %v1100 = vpack.c.bf16 %v1008, %v1008
    %v1101 = vpack.c.bf16 %v1047, %v1047
    %v1102 = vpack.c.bf16 %v1051, %v1051
    %v1103 = vpack.c.bf16 %v1057, %v1057
    %v1104 = vpack.c.bf16 %v1061, %v1061
    %v1105 = vpack.c.bf16 %v1067, %v1067
    %v1106 = vpack.c.bf16 %v1071, %v1071
    %v1107 = vpack.c.bf16 %v1077, %v1077
    %v1108 = vpack.c.bf16 %v1081, %v1081
    %1109 = vmatprep.subr.bf16.mxu0 0
    %1110 = vmatpush1.bf16.xpose.msra.mxu0 %v1093
    %1111 = vmatprep.subr.bf16.mxu0 0
    %1112 = vmatpush1.bf16.xpose.msra.mxu0 0
    %1113 = vmatprep.subr.bf16.mxu0 0
    %1114 = vmatpush1.bf16.xpose.msra.mxu0 0
    %1115 = vmatprep.subr.bf16.mxu0 0
    %1116 = vmatpush1.bf16.xpose.msra.mxu0 0
    %1117 = vmatprep.subr.bf16.mxu0 0
    %1118 = vmatpush1.bf16.xpose.msra.mxu0 0
    %1119 = vmatprep.subr.bf16.mxu0 0
    %1120 = vmatpush1.bf16.xpose.msra.mxu0 0
    %1121 = vmatprep.subr.bf16.mxu0 0
    %1122 = vmatpush1.bf16.xpose.msra.mxu0 0
    %1123 = vmatprep.subr.bf16.mxu0 0
    %1124 = vmatpush1.bf16.xpose.msra.mxu0 0
    %1125 = vmatprep.subr.bf16.mxu0 0
    %1126 = vmatpush1.bf16.xpose.msra.mxu0 0
    %1127 = vmatprep.subr.bf16.mxu0 0
    %1128 = vmatpush1.bf16.xpose.msra.mxu0 0
    %1129 = vmatprep.subr.bf16.mxu0 0
    %1130 = vmatpush1.bf16.xpose.msra.mxu0 0
    %1131 = vmatprep.subr.bf16.mxu0 0
    %1132 = vmatpush1.bf16.xpose.msra.mxu0 0
    %1133 = vmatprep.subr.bf16.mxu0 0
    %1134 = vmatpush1.bf16.xpose.msra.mxu0 0
    %1135 = vmatprep.subr.bf16.mxu0 0
    %1136 = vmatpush1.bf16.xpose.msra.mxu0 0
    %1137 = vmatprep.subr.bf16.mxu0 0
    %1138 = vmatpush1.bf16.xpose.msra.mxu0 0
    %1139 = vmatprep.subr.bf16.mxu0 0
    %1140 = vmatpush1.bf16.xpose.msra.mxu0 0
    %1141 = vmatprep.mubr.bf16.mxu0 0
    %1142 = vmatmul.mubr.bf16.gmra.mrb[0].mxu0 %v1085
    %v1143 = vpop.f32.mrb[0].mxu0
    %v1144 = vadd.f32 0.0, %v1143
    %v1145 = vpop.f32.mrb[0].mxu0
    %v1146 = vpop.f32.mrb[0].mxu0
    %v1147 = vpop.f32.mrb[0].mxu0
    %1148 = vdwg.mxu0
    %1149 = vmatprep.subr.bf16.mxu0 0
    %1150 = vmatpush1.bf16.xpose.msra.mxu0 %v1094
    %1151 = vmatprep.subr.bf16.mxu0 0
    %1152 = vmatpush1.bf16.xpose.msra.mxu0 0
    %1153 = vmatprep.subr.bf16.mxu0 0
    %1154 = vmatpush1.bf16.xpose.msra.mxu0 0
    %1155 = vmatprep.subr.bf16.mxu0 0
    %1156 = vmatpush1.bf16.xpose.msra.mxu0 0
    %1157 = vmatprep.subr.bf16.mxu0 0
    %1158 = vmatpush1.bf16.xpose.msra.mxu0 0
    %1159 = vmatprep.subr.bf16.mxu0 0
    %1160 = vmatpush1.bf16.xpose.msra.mxu0 0
    %1161 = vmatprep.subr.bf16.mxu0 0
    %1162 = vmatpush1.bf16.xpose.msra.mxu0 0
    %1163 = vmatprep.subr.bf16.mxu0 0
    %1164 = vmatpush1.bf16.xpose.msra.mxu0 0
    %1165 = vmatprep.subr.bf16.mxu0 0
    %1166 = vmatpush1.bf16.xpose.msra.mxu0 0
    %1167 = vmatprep.subr.bf16.mxu0 0
    %1168 = vmatpush1.bf16.xpose.msra.mxu0 0
    %1169 = vmatprep.subr.bf16.mxu0 0
    %1170 = vmatpush1.bf16.xpose.msra.mxu0 0
    %1171 = vmatprep.subr.bf16.mxu0 0
    %1172 = vmatpush1.bf16.xpose.msra.mxu0 0
    %1173 = vmatprep.subr.bf16.mxu0 0
    %1174 = vmatpush1.bf16.xpose.msra.mxu0 0
    %1175 = vmatprep.subr.bf16.mxu0 0
    %1176 = vmatpush1.bf16.xpose.msra.mxu0 0
    %1177 = vmatprep.subr.bf16.mxu0 0
    %1178 = vmatpush1.bf16.xpose.msra.mxu0 0
    %1179 = vmatprep.subr.bf16.mxu0 0
    %1180 = vmatpush1.bf16.xpose.msra.mxu0 0
    %1181 = vmatprep.mubr.bf16.mxu0 0
    %1182 = vmatmul.mubr.bf16.gmra.mrb[0].mxu0 %v1086
    %v1183 = vpop.f32.mrb[0].mxu0
    %v1184 = vadd.f32 0.0, %v1183
    %v1185 = vpop.f32.mrb[0].mxu0
    %v1186 = vpop.f32.mrb[0].mxu0
    %v1187 = vpop.f32.mrb[0].mxu0
    %1188 = vdwg.mxu0
    %1189 = vmatprep.subr.bf16.mxu0 0
    %1190 = vmatpush1.bf16.xpose.msra.mxu0 %v1095
    %1191 = vmatprep.subr.bf16.mxu0 0
    %1192 = vmatpush1.bf16.xpose.msra.mxu0 0
    %1193 = vmatprep.subr.bf16.mxu0 0
    %1194 = vmatpush1.bf16.xpose.msra.mxu0 0
    %1195 = vmatprep.subr.bf16.mxu0 0
    %1196 = vmatpush1.bf16.xpose.msra.mxu0 0
    %1197 = vmatprep.subr.bf16.mxu0 0
    %1198 = vmatpush1.bf16.xpose.msra.mxu0 0
    %1199 = vmatprep.subr.bf16.mxu0 0
    %1200 = vmatpush1.bf16.xpose.msra.mxu0 0
    %1201 = vmatprep.subr.bf16.mxu0 0
    %1202 = vmatpush1.bf16.xpose.msra.mxu0 0
    %1203 = vmatprep.subr.bf16.mxu0 0
    %1204 = vmatpush1.bf16.xpose.msra.mxu0 0
    %1205 = vmatprep.subr.bf16.mxu0 0
    %1206 = vmatpush1.bf16.xpose.msra.mxu0 0
    %1207 = vmatprep.subr.bf16.mxu0 0
    %1208 = vmatpush1.bf16.xpose.msra.mxu0 0
    %1209 = vmatprep.subr.bf16.mxu0 0
    %1210 = vmatpush1.bf16.xpose.msra.mxu0 0
    %1211 = vmatprep.subr.bf16.mxu0 0
    %1212 = vmatpush1.bf16.xpose.msra.mxu0 0
    %1213 = vmatprep.subr.bf16.mxu0 0
    %1214 = vmatpush1.bf16.xpose.msra.mxu0 0
    %1215 = vmatprep.subr.bf16.mxu0 0
    %1216 = vmatpush1.bf16.xpose.msra.mxu0 0
    %1217 = vmatprep.subr.bf16.mxu0 0
    %1218 = vmatpush1.bf16.xpose.msra.mxu0 0
    %1219 = vmatprep.subr.bf16.mxu0 0
    %1220 = vmatpush1.bf16.xpose.msra.mxu0 0
    %1221 = vmatprep.mubr.bf16.mxu0 0
    %1222 = vmatmul.mubr.bf16.gmra.mrb[0].mxu0 %v1087
    %v1223 = vpop.f32.mrb[0].mxu0
    %v1224 = vadd.f32 0.0, %v1223
    %v1225 = vpop.f32.mrb[0].mxu0
    %v1226 = vpop.f32.mrb[0].mxu0
    %v1227 = vpop.f32.mrb[0].mxu0
    %1228 = vdwg.mxu0
    %1229 = vmatprep.subr.bf16.mxu0 0
    %1230 = vmatpush1.bf16.xpose.msra.mxu0 %v1096
    %1231 = vmatprep.subr.bf16.mxu0 0
    %1232 = vmatpush1.bf16.xpose.msra.mxu0 0
    %1233 = vmatprep.subr.bf16.mxu0 0
    %1234 = vmatpush1.bf16.xpose.msra.mxu0 0
    %1235 = vmatprep.subr.bf16.mxu0 0
    %1236 = vmatpush1.bf16.xpose.msra.mxu0 0
    %1237 = vmatprep.subr.bf16.mxu0 0
    %1238 = vmatpush1.bf16.xpose.msra.mxu0 0
    %1239 = vmatprep.subr.bf16.mxu0 0
    %1240 = vmatpush1.bf16.xpose.msra.mxu0 0
    %1241 = vmatprep.subr.bf16.mxu0 0
    %1242 = vmatpush1.bf16.xpose.msra.mxu0 0
    %1243 = vmatprep.subr.bf16.mxu0 0
    %1244 = vmatpush1.bf16.xpose.msra.mxu0 0
    %1245 = vmatprep.subr.bf16.mxu0 0
    %1246 = vmatpush1.bf16.xpose.msra.mxu0 0
    %1247 = vmatprep.subr.bf16.mxu0 0
    %1248 = vmatpush1.bf16.xpose.msra.mxu0 0
    %1249 = vmatprep.subr.bf16.mxu0 0
    %1250 = vmatpush1.bf16.xpose.msra.mxu0 0
    %1251 = vmatprep.subr.bf16.mxu0 0
    %1252 = vmatpush1.bf16.xpose.msra.mxu0 0
    %1253 = vmatprep.subr.bf16.mxu0 0
    %1254 = vmatpush1.bf16.xpose.msra.mxu0 0
    %1255 = vmatprep.subr.bf16.mxu0 0
    %1256 = vmatpush1.bf16.xpose.msra.mxu0 0
    %1257 = vmatprep.subr.bf16.mxu0 0
    %1258 = vmatpush1.bf16.xpose.msra.mxu0 0
    %1259 = vmatprep.subr.bf16.mxu0 0
    %1260 = vmatpush1.bf16.xpose.msra.mxu0 0
    %1261 = vmatprep.mubr.bf16.mxu0 0
    %1262 = vmatmul.mubr.bf16.gmra.mrb[0].mxu0 %v1088
    %v1263 = vpop.f32.mrb[0].mxu0
    %v1264 = vadd.f32 0.0, %v1263
    %v1265 = vpop.f32.mrb[0].mxu0
    %v1266 = vpop.f32.mrb[0].mxu0
    %v1267 = vpop.f32.mrb[0].mxu0
    %1268 = vdwg.mxu0
    %1269 = vmatprep.subr.bf16.mxu0 0
    %1270 = vmatpush1.bf16.xpose.msra.mxu0 %v1097
    %1271 = vmatprep.subr.bf16.mxu0 0
    %1272 = vmatpush1.bf16.xpose.msra.mxu0 0
    %1273 = vmatprep.subr.bf16.mxu0 0
    %1274 = vmatpush1.bf16.xpose.msra.mxu0 0
    %1275 = vmatprep.subr.bf16.mxu0 0
    %1276 = vmatpush1.bf16.xpose.msra.mxu0 0
    %1277 = vmatprep.subr.bf16.mxu0 0
    %1278 = vmatpush1.bf16.xpose.msra.mxu0 0
    %1279 = vmatprep.subr.bf16.mxu0 0
    %1280 = vmatpush1.bf16.xpose.msra.mxu0 0
    %1281 = vmatprep.subr.bf16.mxu0 0
    %1282 = vmatpush1.bf16.xpose.msra.mxu0 0
    %1283 = vmatprep.subr.bf16.mxu0 0
    %1284 = vmatpush1.bf16.xpose.msra.mxu0 0
    %1285 = vmatprep.subr.bf16.mxu0 0
    %1286 = vmatpush1.bf16.xpose.msra.mxu0 0
    %1287 = vmatprep.subr.bf16.mxu0 0
    %1288 = vmatpush1.bf16.xpose.msra.mxu0 0
    %1289 = vmatprep.subr.bf16.mxu0 0
    %1290 = vmatpush1.bf16.xpose.msra.mxu0 0
    %1291 = vmatprep.subr.bf16.mxu0 0
    %1292 = vmatpush1.bf16.xpose.msra.mxu0 0
    %1293 = vmatprep.subr.bf16.mxu0 0
    %1294 = vmatpush1.bf16.xpose.msra.mxu0 0
    %1295 = vmatprep.subr.bf16.mxu0 0
    %1296 = vmatpush1.bf16.xpose.msra.mxu0 0
    %1297 = vmatprep.subr.bf16.mxu0 0
    %1298 = vmatpush1.bf16.xpose.msra.mxu0 0
    %1299 = vmatprep.subr.bf16.mxu0 0
    %1300 = vmatpush1.bf16.xpose.msra.mxu0 0
    %1301 = vmatprep.mubr.bf16.mxu0 0
    %1302 = vmatmul.mubr.bf16.gmra.mrb[0].mxu0 %v1089
    %v1303 = vpop.f32.mrb[0].mxu0
    %v1304 = vadd.f32 0.0, %v1303
    %v1305 = vpop.f32.mrb[0].mxu0
    %v1306 = vpop.f32.mrb[0].mxu0
    %v1307 = vpop.f32.mrb[0].mxu0
    %1308 = vdwg.mxu0
    %1309 = vmatprep.subr.bf16.mxu0 0
    %1310 = vmatpush1.bf16.xpose.msra.mxu0 %v1098
    %1311 = vmatprep.subr.bf16.mxu0 0
    %1312 = vmatpush1.bf16.xpose.msra.mxu0 0
    %1313 = vmatprep.subr.bf16.mxu0 0
    %1314 = vmatpush1.bf16.xpose.msra.mxu0 0
    %1315 = vmatprep.subr.bf16.mxu0 0
    %1316 = vmatpush1.bf16.xpose.msra.mxu0 0
    %1317 = vmatprep.subr.bf16.mxu0 0
    %1318 = vmatpush1.bf16.xpose.msra.mxu0 0
    %1319 = vmatprep.subr.bf16.mxu0 0
    %1320 = vmatpush1.bf16.xpose.msra.mxu0 0
    %1321 = vmatprep.subr.bf16.mxu0 0
    %1322 = vmatpush1.bf16.xpose.msra.mxu0 0
    %1323 = vmatprep.subr.bf16.mxu0 0
    %1324 = vmatpush1.bf16.xpose.msra.mxu0 0
    %1325 = vmatprep.subr.bf16.mxu0 0
    %1326 = vmatpush1.bf16.xpose.msra.mxu0 0
    %1327 = vmatprep.subr.bf16.mxu0 0
    %1328 = vmatpush1.bf16.xpose.msra.mxu0 0
    %1329 = vmatprep.subr.bf16.mxu0 0
    %1330 = vmatpush1.bf16.xpose.msra.mxu0 0
    %1331 = vmatprep.subr.bf16.mxu0 0
    %1332 = vmatpush1.bf16.xpose.msra.mxu0 0
    %1333 = vmatprep.subr.bf16.mxu0 0
    %1334 = vmatpush1.bf16.xpose.msra.mxu0 0
    %1335 = vmatprep.subr.bf16.mxu0 0
    %1336 = vmatpush1.bf16.xpose.msra.mxu0 0
    %1337 = vmatprep.subr.bf16.mxu0 0
    %1338 = vmatpush1.bf16.xpose.msra.mxu0 0
    %1339 = vmatprep.subr.bf16.mxu0 0
    %1340 = vmatpush1.bf16.xpose.msra.mxu0 0
    %1341 = vmatprep.mubr.bf16.mxu0 0
    %1342 = vmatmul.mubr.bf16.gmra.mrb[0].mxu0 %v1090
    %v1343 = vpop.f32.mrb[0].mxu0
    %v1344 = vadd.f32 0.0, %v1343
    %v1345 = vpop.f32.mrb[0].mxu0
    %v1346 = vpop.f32.mrb[0].mxu0
    %v1347 = vpop.f32.mrb[0].mxu0
    %1348 = vdwg.mxu0
    %1349 = vmatprep.subr.bf16.mxu0 0
    %1350 = vmatpush1.bf16.xpose.msra.mxu0 %v1099
    %1351 = vmatprep.subr.bf16.mxu0 0
    %1352 = vmatpush1.bf16.xpose.msra.mxu0 0
    %1353 = vmatprep.subr.bf16.mxu0 0
    %1354 = vmatpush1.bf16.xpose.msra.mxu0 0
    %1355 = vmatprep.subr.bf16.mxu0 0
    %1356 = vmatpush1.bf16.xpose.msra.mxu0 0
    %1357 = vmatprep.subr.bf16.mxu0 0
    %1358 = vmatpush1.bf16.xpose.msra.mxu0 0
    %1359 = vmatprep.subr.bf16.mxu0 0
    %1360 = vmatpush1.bf16.xpose.msra.mxu0 0
    %1361 = vmatprep.subr.bf16.mxu0 0
    %1362 = vmatpush1.bf16.xpose.msra.mxu0 0
    %1363 = vmatprep.subr.bf16.mxu0 0
    %1364 = vmatpush1.bf16.xpose.msra.mxu0 0
    %1365 = vmatprep.subr.bf16.mxu0 0
    %1366 = vmatpush1.bf16.xpose.msra.mxu0 0
    %1367 = vmatprep.subr.bf16.mxu0 0
    %1368 = vmatpush1.bf16.xpose.msra.mxu0 0
    %1369 = vmatprep.subr.bf16.mxu0 0
    %1370 = vmatpush1.bf16.xpose.msra.mxu0 0
    %1371 = vmatprep.subr.bf16.mxu0 0
    %1372 = vmatpush1.bf16.xpose.msra.mxu0 0
    %1373 = vmatprep.subr.bf16.mxu0 0
    %1374 = vmatpush1.bf16.xpose.msra.mxu0 0
    %1375 = vmatprep.subr.bf16.mxu0 0
    %1376 = vmatpush1.bf16.xpose.msra.mxu0 0
    %1377 = vmatprep.subr.bf16.mxu0 0
    %1378 = vmatpush1.bf16.xpose.msra.mxu0 0
    %1379 = vmatprep.subr.bf16.mxu0 0
    %1380 = vmatpush1.bf16.xpose.msra.mxu0 0
    %1381 = vmatprep.mubr.bf16.mxu0 0
    %1382 = vmatmul.mubr.bf16.gmra.mrb[0].mxu0 %v1091
    %v1383 = vpop.f32.mrb[0].mxu0
    %v1384 = vadd.f32 0.0, %v1383
    %v1385 = vpop.f32.mrb[0].mxu0
    %v1386 = vpop.f32.mrb[0].mxu0
    %v1387 = vpop.f32.mrb[0].mxu0
    %1388 = vdwg.mxu0
    %1389 = vmatprep.subr.bf16.mxu0 0
    %1390 = vmatpush1.bf16.xpose.msra.mxu0 %v1100
    %1391 = vmatprep.subr.bf16.mxu0 0
    %1392 = vmatpush1.bf16.xpose.msra.mxu0 0
    %1393 = vmatprep.subr.bf16.mxu0 0
    %1394 = vmatpush1.bf16.xpose.msra.mxu0 0
    %1395 = vmatprep.subr.bf16.mxu0 0
    %1396 = vmatpush1.bf16.xpose.msra.mxu0 0
    %1397 = vmatprep.subr.bf16.mxu0 0
    %1398 = vmatpush1.bf16.xpose.msra.mxu0 0
    %1399 = vmatprep.subr.bf16.mxu0 0
    %1400 = vmatpush1.bf16.xpose.msra.mxu0 0
    %1401 = vmatprep.subr.bf16.mxu0 0
    %1402 = vmatpush1.bf16.xpose.msra.mxu0 0
    %1403 = vmatprep.subr.bf16.mxu0 0
    %1404 = vmatpush1.bf16.xpose.msra.mxu0 0
    %1405 = vmatprep.subr.bf16.mxu0 0
    %1406 = vmatpush1.bf16.xpose.msra.mxu0 0
    %1407 = vmatprep.subr.bf16.mxu0 0
    %1408 = vmatpush1.bf16.xpose.msra.mxu0 0
    %1409 = vmatprep.subr.bf16.mxu0 0
    %1410 = vmatpush1.bf16.xpose.msra.mxu0 0
    %1411 = vmatprep.subr.bf16.mxu0 0
    %1412 = vmatpush1.bf16.xpose.msra.mxu0 0
    %1413 = vmatprep.subr.bf16.mxu0 0
    %1414 = vmatpush1.bf16.xpose.msra.mxu0 0
    %1415 = vmatprep.subr.bf16.mxu0 0
    %1416 = vmatpush1.bf16.xpose.msra.mxu0 0
    %1417 = vmatprep.subr.bf16.mxu0 0
    %1418 = vmatpush1.bf16.xpose.msra.mxu0 0
    %1419 = vmatprep.subr.bf16.mxu0 0
    %1420 = vmatpush1.bf16.xpose.msra.mxu0 0
    %1421 = vmatprep.mubr.bf16.mxu0 0
    %1422 = vmatmul.mubr.bf16.gmra.mrb[0].mxu0 %v1092
    %v1423 = vpop.f32.mrb[0].mxu0
    %v1424 = vadd.f32 0.0, %v1423
    %v1425 = vpop.f32.mrb[0].mxu0
    %v1426 = vpop.f32.mrb[0].mxu0
    %v1427 = vpop.f32.mrb[0].mxu0
    %1428 = vdwg.mxu0
    %v1429 = vmul.f32 %v1144, 0.088388346
    %v1430 = vmul.f32 %v1184, 0.088388346
    %v1431 = vmul.f32 %v1224, 0.088388346
    %v1432 = vmul.f32 %v1264, 0.088388346
    %v1433 = vmul.f32 %v1304, 0.088388346
    %v1434 = vmul.f32 %v1344, 0.088388346
    %v1435 = vmul.f32 %v1384, 0.088388346
    %v1436 = vmul.f32 %v1424, 0.088388346
    %vm1437 = vcmask 64512
    %v1438 = vsel %vm1437, %v1429, -inf
    %1439 = vmax.xlane.f32.xlu0 %v1438
    %v1440 = vpop.xlane.xlu0 %1439
    %v1441 = vsel %vm1437, %v1430, -inf
    %1442 = vmax.xlane.f32.xlu0 %v1441
    %v1443 = vpop.xlane.xlu0 %1442
    %v1444 = vsel %vm1437, %v1431, -inf
    %1445 = vmax.xlane.f32.xlu0 %v1444
    %v1446 = vpop.xlane.xlu0 %1445
    %v1447 = vsel %vm1437, %v1432, -inf
    %1448 = vmax.xlane.f32.xlu0 %v1447
    %v1449 = vpop.xlane.xlu0 %1448
    %v1450 = vsel %vm1437, %v1433, -inf
    %1451 = vmax.xlane.f32.xlu0 %v1450
    %v1452 = vpop.xlane.xlu0 %1451
    %v1453 = vsel %vm1437, %v1434, -inf
    %1454 = vmax.xlane.f32.xlu0 %v1453
    %v1455 = vpop.xlane.xlu0 %1454
    %v1456 = vsel %vm1437, %v1435, -inf
    %1457 = vmax.xlane.f32.xlu0 %v1456
    %v1458 = vpop.xlane.xlu0 %1457
    %v1459 = vsel %vm1437, %v1436, -inf
    %1460 = vmax.xlane.f32.xlu0 %v1459
    %v1461 = vpop.xlane.xlu0 %1460
    %v1462 = vsub.f32 %v1429, %v1440
    %v1463 = vsub.f32 %v1430, %v1443
    %v1464 = vsub.f32 %v1431, %v1446
    %v1465 = vsub.f32 %v1432, %v1449
    %v1466 = vsub.f32 %v1433, %v1452
    %v1467 = vsub.f32 %v1434, %v1455
    %v1468 = vsub.f32 %v1435, %v1458
    %v1469 = vsub.f32 %v1436, %v1461
    %v1470 = vmul.f32 %v1462, 1.442695
    %v1471 = vpow.pop %v1470
    %v1472 = vmul.f32 %v1463, 1.442695
    %v1473 = vpow.pop %v1472
    %v1474 = vmul.f32 %v1464, 1.442695
    %v1475 = vpow.pop %v1474
    %v1476 = vmul.f32 %v1465, 1.442695
    %v1477 = vpow.pop %v1476
    %v1478 = vmul.f32 %v1466, 1.442695
    %v1479 = vpow.pop %v1478
    %v1480 = vmul.f32 %v1467, 1.442695
    %v1481 = vpow.pop %v1480
    %v1482 = vmul.f32 %v1468, 1.442695
    %v1483 = vpow.pop %v1482
    %v1484 = vmul.f32 %v1469, 1.442695
    %v1485 = vpow.pop %v1484
    %v1486 = vsel %vm1437, %v1471, 0.0
    %1487 = vadd.xlane.f32.xlu0 %v1486
    %v1488 = vpop.xlane.xlu0 %1487
    %v1489 = vsel %vm1437, %v1473, 0.0
    %1490 = vadd.xlane.f32.xlu0 %v1489
    %v1491 = vpop.xlane.xlu0 %1490
    %v1492 = vsel %vm1437, %v1475, 0.0
    %1493 = vadd.xlane.f32.xlu0 %v1492
    %v1494 = vpop.xlane.xlu0 %1493
    %v1495 = vsel %vm1437, %v1477, 0.0
    %1496 = vadd.xlane.f32.xlu0 %v1495
    %v1497 = vpop.xlane.xlu0 %1496
    %v1498 = vsel %vm1437, %v1479, 0.0
    %1499 = vadd.xlane.f32.xlu0 %v1498
    %v1500 = vpop.xlane.xlu0 %1499
    %v1501 = vsel %vm1437, %v1481, 0.0
    %1502 = vadd.xlane.f32.xlu0 %v1501
    %v1503 = vpop.xlane.xlu0 %1502
    %v1504 = vsel %vm1437, %v1483, 0.0
    %1505 = vadd.xlane.f32.xlu0 %v1504
    %v1506 = vpop.xlane.xlu0 %1505
    %v1507 = vsel %vm1437, %v1485, 0.0
    %1508 = vadd.xlane.f32.xlu0 %v1507
    %v1509 = vpop.xlane.xlu0 %1508
    %v1510 = vrcp.pop %v1488
    %v1511 = vrcp.pop %v1491
    %v1512 = vrcp.pop %v1494
    %v1513 = vrcp.pop %v1497
    %v1514 = vrcp.pop %v1500
    %v1515 = vrcp.pop %v1503
    %v1516 = vrcp.pop %v1506
    %v1517 = vrcp.pop %v1509
    %v1518 = vmul.f32 %v1471, %v1510
    %v1519 = vmul.f32 %v1473, %v1511
    %v1520 = vmul.f32 %v1475, %v1512
    %v1521 = vmul.f32 %v1477, %v1513
    %v1522 = vmul.f32 %v1479, %v1514
    %v1523 = vmul.f32 %v1481, %v1515
    %v1524 = vmul.f32 %v1483, %v1516
    %v1525 = vmul.f32 %v1485, %v1517
    %v1526 = vpack.c.bf16 %v1518, %v1518
    %v1527 = vpack.c.bf16 %v1519, %v1519
    %v1528 = vpack.c.bf16 %v1520, %v1520
    %v1529 = vpack.c.bf16 %v1521, %v1521
    %v1530 = vpack.c.bf16 %v1522, %v1522
    %v1531 = vpack.c.bf16 %v1523, %v1523
    %v1532 = vpack.c.bf16 %v1524, %v1524
    %v1533 = vpack.c.bf16 %v1525, %v1525
    %v1535 = vsel %vm1437, %v1526, 0
    %vm1537 = vcmask 1043456
    %v1539 = vsel %vm1537, %v1101, 0
    %1541 = vmatprep.subr.bf16.mxu0 0
    %1542 = vmatpush1.bf16.msra.mxu0 %v1539
    %1543 = vmatprep.subr.bf16.mxu0 0
    %1544 = vmatpush1.bf16.msra.mxu0 0
    %1545 = vmatprep.subr.bf16.mxu0 0
    %1546 = vmatpush1.bf16.msra.mxu0 0
    %1547 = vmatprep.subr.bf16.mxu0 0
    %1548 = vmatpush1.bf16.msra.mxu0 0
    %1549 = vmatprep.subr.bf16.mxu0 0
    %1550 = vmatpush1.bf16.msra.mxu0 0
    %1551 = vmatprep.subr.bf16.mxu0 0
    %1552 = vmatpush1.bf16.msra.mxu0 0
    %1553 = vmatprep.subr.bf16.mxu0 0
    %1554 = vmatpush1.bf16.msra.mxu0 0
    %1555 = vmatprep.subr.bf16.mxu0 0
    %1556 = vmatpush1.bf16.msra.mxu0 0
    %1557 = vmatprep.subr.bf16.mxu0 0
    %1558 = vmatpush1.bf16.msra.mxu0 0
    %1559 = vmatprep.subr.bf16.mxu0 0
    %1560 = vmatpush1.bf16.msra.mxu0 0
    %1561 = vmatprep.subr.bf16.mxu0 0
    %1562 = vmatpush1.bf16.msra.mxu0 0
    %1563 = vmatprep.subr.bf16.mxu0 0
    %1564 = vmatpush1.bf16.msra.mxu0 0
    %1565 = vmatprep.subr.bf16.mxu0 0
    %1566 = vmatpush1.bf16.msra.mxu0 0
    %1567 = vmatprep.subr.bf16.mxu0 0
    %1568 = vmatpush1.bf16.msra.mxu0 0
    %1569 = vmatprep.subr.bf16.mxu0 0
    %1570 = vmatpush1.bf16.msra.mxu0 0
    %1571 = vmatprep.subr.bf16.mxu0 0
    %1572 = vmatpush1.bf16.msra.mxu0 0
    %1573 = vmatprep.mubr.bf16.mxu0 0
    %1574 = vmatmul.mubr.bf16.gmra.mrb[0].mxu0 %v1535
    %v1575 = vpop.f32.mrb[0].mxu0
    %v1576 = vadd.f32 0.0, %v1575
    %v1577 = vpop.f32.mrb[0].mxu0
    %v1578 = vpop.f32.mrb[0].mxu0
    %v1579 = vpop.f32.mrb[0].mxu0
    %1580 = vdwg.mxu0
    %v1582 = vsel %vm1437, %v1527, 0
    %v1585 = vsel %vm1537, %v1102, 0
    %1587 = vmatprep.subr.bf16.mxu0 0
    %1588 = vmatpush1.bf16.msra.mxu0 %v1585
    %1589 = vmatprep.subr.bf16.mxu0 0
    %1590 = vmatpush1.bf16.msra.mxu0 0
    %1591 = vmatprep.subr.bf16.mxu0 0
    %1592 = vmatpush1.bf16.msra.mxu0 0
    %1593 = vmatprep.subr.bf16.mxu0 0
    %1594 = vmatpush1.bf16.msra.mxu0 0
    %1595 = vmatprep.subr.bf16.mxu0 0
    %1596 = vmatpush1.bf16.msra.mxu0 0
    %1597 = vmatprep.subr.bf16.mxu0 0
    %1598 = vmatpush1.bf16.msra.mxu0 0
    %1599 = vmatprep.subr.bf16.mxu0 0
    %1600 = vmatpush1.bf16.msra.mxu0 0
    %1601 = vmatprep.subr.bf16.mxu0 0
    %1602 = vmatpush1.bf16.msra.mxu0 0
    %1603 = vmatprep.subr.bf16.mxu0 0
    %1604 = vmatpush1.bf16.msra.mxu0 0
    %1605 = vmatprep.subr.bf16.mxu0 0
    %1606 = vmatpush1.bf16.msra.mxu0 0
    %1607 = vmatprep.subr.bf16.mxu0 0
    %1608 = vmatpush1.bf16.msra.mxu0 0
    %1609 = vmatprep.subr.bf16.mxu0 0
    %1610 = vmatpush1.bf16.msra.mxu0 0
    %1611 = vmatprep.subr.bf16.mxu0 0
    %1612 = vmatpush1.bf16.msra.mxu0 0
    %1613 = vmatprep.subr.bf16.mxu0 0
    %1614 = vmatpush1.bf16.msra.mxu0 0
    %1615 = vmatprep.subr.bf16.mxu0 0
    %1616 = vmatpush1.bf16.msra.mxu0 0
    %1617 = vmatprep.subr.bf16.mxu0 0
    %1618 = vmatpush1.bf16.msra.mxu0 0
    %1619 = vmatprep.mubr.bf16.mxu0 0
    %1620 = vmatmul.mubr.bf16.gmra.mrb[0].mxu0 %v1582
    %v1621 = vpop.f32.mrb[0].mxu0
    %v1622 = vadd.f32 0.0, %v1621
    %v1623 = vpop.f32.mrb[0].mxu0
    %v1624 = vpop.f32.mrb[0].mxu0
    %v1625 = vpop.f32.mrb[0].mxu0
    %1626 = vdwg.mxu0
    %v1628 = vsel %vm1437, %v1528, 0
    %v1631 = vsel %vm1537, %v1103, 0
    %1633 = vmatprep.subr.bf16.mxu0 0
    %1634 = vmatpush1.bf16.msra.mxu0 %v1631
    %1635 = vmatprep.subr.bf16.mxu0 0
    %1636 = vmatpush1.bf16.msra.mxu0 0
    %1637 = vmatprep.subr.bf16.mxu0 0
    %1638 = vmatpush1.bf16.msra.mxu0 0
    %1639 = vmatprep.subr.bf16.mxu0 0
    %1640 = vmatpush1.bf16.msra.mxu0 0
    %1641 = vmatprep.subr.bf16.mxu0 0
    %1642 = vmatpush1.bf16.msra.mxu0 0
    %1643 = vmatprep.subr.bf16.mxu0 0
    %1644 = vmatpush1.bf16.msra.mxu0 0
    %1645 = vmatprep.subr.bf16.mxu0 0
    %1646 = vmatpush1.bf16.msra.mxu0 0
    %1647 = vmatprep.subr.bf16.mxu0 0
    %1648 = vmatpush1.bf16.msra.mxu0 0
    %1649 = vmatprep.subr.bf16.mxu0 0
    %1650 = vmatpush1.bf16.msra.mxu0 0
    %1651 = vmatprep.subr.bf16.mxu0 0
    %1652 = vmatpush1.bf16.msra.mxu0 0
    %1653 = vmatprep.subr.bf16.mxu0 0
    %1654 = vmatpush1.bf16.msra.mxu0 0
    %1655 = vmatprep.subr.bf16.mxu0 0
    %1656 = vmatpush1.bf16.msra.mxu0 0
    %1657 = vmatprep.subr.bf16.mxu0 0
    %1658 = vmatpush1.bf16.msra.mxu0 0
    %1659 = vmatprep.subr.bf16.mxu0 0
    %1660 = vmatpush1.bf16.msra.mxu0 0
    %1661 = vmatprep.subr.bf16.mxu0 0
    %1662 = vmatpush1.bf16.msra.mxu0 0
    %1663 = vmatprep.subr.bf16.mxu0 0
    %1664 = vmatpush1.bf16.msra.mxu0 0
    %1665 = vmatprep.mubr.bf16.mxu0 0
    %1666 = vmatmul.mubr.bf16.gmra.mrb[0].mxu0 %v1628
    %v1667 = vpop.f32.mrb[0].mxu0
    %v1668 = vadd.f32 0.0, %v1667
    %v1669 = vpop.f32.mrb[0].mxu0
    %v1670 = vpop.f32.mrb[0].mxu0
    %v1671 = vpop.f32.mrb[0].mxu0
    %1672 = vdwg.mxu0
    %v1674 = vsel %vm1437, %v1529, 0
    %v1677 = vsel %vm1537, %v1104, 0
    %1679 = vmatprep.subr.bf16.mxu0 0
    %1680 = vmatpush1.bf16.msra.mxu0 %v1677
    %1681 = vmatprep.subr.bf16.mxu0 0
    %1682 = vmatpush1.bf16.msra.mxu0 0
    %1683 = vmatprep.subr.bf16.mxu0 0
    %1684 = vmatpush1.bf16.msra.mxu0 0
    %1685 = vmatprep.subr.bf16.mxu0 0
    %1686 = vmatpush1.bf16.msra.mxu0 0
    %1687 = vmatprep.subr.bf16.mxu0 0
    %1688 = vmatpush1.bf16.msra.mxu0 0
    %1689 = vmatprep.subr.bf16.mxu0 0
    %1690 = vmatpush1.bf16.msra.mxu0 0
    %1691 = vmatprep.subr.bf16.mxu0 0
    %1692 = vmatpush1.bf16.msra.mxu0 0
    %1693 = vmatprep.subr.bf16.mxu0 0
    %1694 = vmatpush1.bf16.msra.mxu0 0
    %1695 = vmatprep.subr.bf16.mxu0 0
    %1696 = vmatpush1.bf16.msra.mxu0 0
    %1697 = vmatprep.subr.bf16.mxu0 0
    %1698 = vmatpush1.bf16.msra.mxu0 0
    %1699 = vmatprep.subr.bf16.mxu0 0
    %1700 = vmatpush1.bf16.msra.mxu0 0
    %1701 = vmatprep.subr.bf16.mxu0 0
    %1702 = vmatpush1.bf16.msra.mxu0 0
    %1703 = vmatprep.subr.bf16.mxu0 0
    %1704 = vmatpush1.bf16.msra.mxu0 0
    %1705 = vmatprep.subr.bf16.mxu0 0
    %1706 = vmatpush1.bf16.msra.mxu0 0
    %1707 = vmatprep.subr.bf16.mxu0 0
    %1708 = vmatpush1.bf16.msra.mxu0 0
    %1709 = vmatprep.subr.bf16.mxu0 0
    %1710 = vmatpush1.bf16.msra.mxu0 0
    %1711 = vmatprep.mubr.bf16.mxu0 0
    %1712 = vmatmul.mubr.bf16.gmra.mrb[0].mxu0 %v1674
    %v1713 = vpop.f32.mrb[0].mxu0
    %v1714 = vadd.f32 0.0, %v1713
    %v1715 = vpop.f32.mrb[0].mxu0
    %v1716 = vpop.f32.mrb[0].mxu0
    %v1717 = vpop.f32.mrb[0].mxu0
    %1718 = vdwg.mxu0
    %v1720 = vsel %vm1437, %v1530, 0
    %v1723 = vsel %vm1537, %v1105, 0
    %1725 = vmatprep.subr.bf16.mxu0 0
    %1726 = vmatpush1.bf16.msra.mxu0 %v1723
    %1727 = vmatprep.subr.bf16.mxu0 0
    %1728 = vmatpush1.bf16.msra.mxu0 0
    %1729 = vmatprep.subr.bf16.mxu0 0
    %1730 = vmatpush1.bf16.msra.mxu0 0
    %1731 = vmatprep.subr.bf16.mxu0 0
    %1732 = vmatpush1.bf16.msra.mxu0 0
    %1733 = vmatprep.subr.bf16.mxu0 0
    %1734 = vmatpush1.bf16.msra.mxu0 0
    %1735 = vmatprep.subr.bf16.mxu0 0
    %1736 = vmatpush1.bf16.msra.mxu0 0
    %1737 = vmatprep.subr.bf16.mxu0 0
    %1738 = vmatpush1.bf16.msra.mxu0 0
    %1739 = vmatprep.subr.bf16.mxu0 0
    %1740 = vmatpush1.bf16.msra.mxu0 0
    %1741 = vmatprep.subr.bf16.mxu0 0
    %1742 = vmatpush1.bf16.msra.mxu0 0
    %1743 = vmatprep.subr.bf16.mxu0 0
    %1744 = vmatpush1.bf16.msra.mxu0 0
    %1745 = vmatprep.subr.bf16.mxu0 0
    %1746 = vmatpush1.bf16.msra.mxu0 0
    %1747 = vmatprep.subr.bf16.mxu0 0
    %1748 = vmatpush1.bf16.msra.mxu0 0
    %1749 = vmatprep.subr.bf16.mxu0 0
    %1750 = vmatpush1.bf16.msra.mxu0 0
    %1751 = vmatprep.subr.bf16.mxu0 0
    %1752 = vmatpush1.bf16.msra.mxu0 0
    %1753 = vmatprep.subr.bf16.mxu0 0
    %1754 = vmatpush1.bf16.msra.mxu0 0
    %1755 = vmatprep.subr.bf16.mxu0 0
    %1756 = vmatpush1.bf16.msra.mxu0 0
    %1757 = vmatprep.mubr.bf16.mxu0 0
    %1758 = vmatmul.mubr.bf16.gmra.mrb[0].mxu0 %v1720
    %v1759 = vpop.f32.mrb[0].mxu0
    %v1760 = vadd.f32 0.0, %v1759
    %v1761 = vpop.f32.mrb[0].mxu0
    %v1762 = vpop.f32.mrb[0].mxu0
    %v1763 = vpop.f32.mrb[0].mxu0
    %1764 = vdwg.mxu0
    %v1766 = vsel %vm1437, %v1531, 0
    %v1769 = vsel %vm1537, %v1106, 0
    %1771 = vmatprep.subr.bf16.mxu0 0
    %1772 = vmatpush1.bf16.msra.mxu0 %v1769
    %1773 = vmatprep.subr.bf16.mxu0 0
    %1774 = vmatpush1.bf16.msra.mxu0 0
    %1775 = vmatprep.subr.bf16.mxu0 0
    %1776 = vmatpush1.bf16.msra.mxu0 0
    %1777 = vmatprep.subr.bf16.mxu0 0
    %1778 = vmatpush1.bf16.msra.mxu0 0
    %1779 = vmatprep.subr.bf16.mxu0 0
    %1780 = vmatpush1.bf16.msra.mxu0 0
    %1781 = vmatprep.subr.bf16.mxu0 0
    %1782 = vmatpush1.bf16.msra.mxu0 0
    %1783 = vmatprep.subr.bf16.mxu0 0
    %1784 = vmatpush1.bf16.msra.mxu0 0
    %1785 = vmatprep.subr.bf16.mxu0 0
    %1786 = vmatpush1.bf16.msra.mxu0 0
    %1787 = vmatprep.subr.bf16.mxu0 0
    %1788 = vmatpush1.bf16.msra.mxu0 0
    %1789 = vmatprep.subr.bf16.mxu0 0
    %1790 = vmatpush1.bf16.msra.mxu0 0
    %1791 = vmatprep.subr.bf16.mxu0 0
    %1792 = vmatpush1.bf16.msra.mxu0 0
    %1793 = vmatprep.subr.bf16.mxu0 0
    %1794 = vmatpush1.bf16.msra.mxu0 0
    %1795 = vmatprep.subr.bf16.mxu0 0
    %1796 = vmatpush1.bf16.msra.mxu0 0
    %1797 = vmatprep.subr.bf16.mxu0 0
    %1798 = vmatpush1.bf16.msra.mxu0 0
    %1799 = vmatprep.subr.bf16.mxu0 0
    %1800 = vmatpush1.bf16.msra.mxu0 0
    %1801 = vmatprep.subr.bf16.mxu0 0
    %1802 = vmatpush1.bf16.msra.mxu0 0
    %1803 = vmatprep.mubr.bf16.mxu0 0
    %1804 = vmatmul.mubr.bf16.gmra.mrb[0].mxu0 %v1766
    %v1805 = vpop.f32.mrb[0].mxu0
    %v1806 = vadd.f32 0.0, %v1805
    %v1807 = vpop.f32.mrb[0].mxu0
    %v1808 = vpop.f32.mrb[0].mxu0
    %v1809 = vpop.f32.mrb[0].mxu0
    %1810 = vdwg.mxu0
    %v1812 = vsel %vm1437, %v1532, 0
    %v1815 = vsel %vm1537, %v1107, 0
    %1817 = vmatprep.subr.bf16.mxu0 0
    %1818 = vmatpush1.bf16.msra.mxu0 %v1815
    %1819 = vmatprep.subr.bf16.mxu0 0
    %1820 = vmatpush1.bf16.msra.mxu0 0
    %1821 = vmatprep.subr.bf16.mxu0 0
    %1822 = vmatpush1.bf16.msra.mxu0 0
    %1823 = vmatprep.subr.bf16.mxu0 0
    %1824 = vmatpush1.bf16.msra.mxu0 0
    %1825 = vmatprep.subr.bf16.mxu0 0
    %1826 = vmatpush1.bf16.msra.mxu0 0
    %1827 = vmatprep.subr.bf16.mxu0 0
    %1828 = vmatpush1.bf16.msra.mxu0 0
    %1829 = vmatprep.subr.bf16.mxu0 0
    %1830 = vmatpush1.bf16.msra.mxu0 0
    %1831 = vmatprep.subr.bf16.mxu0 0
    %1832 = vmatpush1.bf16.msra.mxu0 0
    %1833 = vmatprep.subr.bf16.mxu0 0
    %1834 = vmatpush1.bf16.msra.mxu0 0
    %1835 = vmatprep.subr.bf16.mxu0 0
    %1836 = vmatpush1.bf16.msra.mxu0 0
    %1837 = vmatprep.subr.bf16.mxu0 0
    %1838 = vmatpush1.bf16.msra.mxu0 0
    %1839 = vmatprep.subr.bf16.mxu0 0
    %1840 = vmatpush1.bf16.msra.mxu0 0
    %1841 = vmatprep.subr.bf16.mxu0 0
    %1842 = vmatpush1.bf16.msra.mxu0 0
    %1843 = vmatprep.subr.bf16.mxu0 0
    %1844 = vmatpush1.bf16.msra.mxu0 0
    %1845 = vmatprep.subr.bf16.mxu0 0
    %1846 = vmatpush1.bf16.msra.mxu0 0
    %1847 = vmatprep.subr.bf16.mxu0 0
    %1848 = vmatpush1.bf16.msra.mxu0 0
    %1849 = vmatprep.mubr.bf16.mxu0 0
    %1850 = vmatmul.mubr.bf16.gmra.mrb[0].mxu0 %v1812
    %v1851 = vpop.f32.mrb[0].mxu0
    %v1852 = vadd.f32 0.0, %v1851
    %v1853 = vpop.f32.mrb[0].mxu0
    %v1854 = vpop.f32.mrb[0].mxu0
    %v1855 = vpop.f32.mrb[0].mxu0
    %1856 = vdwg.mxu0
    %v1858 = vsel %vm1437, %v1533, 0
    %v1861 = vsel %vm1537, %v1108, 0
    %1863 = vmatprep.subr.bf16.mxu0 0
    %1864 = vmatpush1.bf16.msra.mxu0 %v1861
    %1865 = vmatprep.subr.bf16.mxu0 0
    %1866 = vmatpush1.bf16.msra.mxu0 0
    %1867 = vmatprep.subr.bf16.mxu0 0
    %1868 = vmatpush1.bf16.msra.mxu0 0
    %1869 = vmatprep.subr.bf16.mxu0 0
    %1870 = vmatpush1.bf16.msra.mxu0 0
    %1871 = vmatprep.subr.bf16.mxu0 0
    %1872 = vmatpush1.bf16.msra.mxu0 0
    %1873 = vmatprep.subr.bf16.mxu0 0
    %1874 = vmatpush1.bf16.msra.mxu0 0
    %1875 = vmatprep.subr.bf16.mxu0 0
    %1876 = vmatpush1.bf16.msra.mxu0 0
    %1877 = vmatprep.subr.bf16.mxu0 0
    %1878 = vmatpush1.bf16.msra.mxu0 0
    %1879 = vmatprep.subr.bf16.mxu0 0
    %1880 = vmatpush1.bf16.msra.mxu0 0
    %1881 = vmatprep.subr.bf16.mxu0 0
    %1882 = vmatpush1.bf16.msra.mxu0 0
    %1883 = vmatprep.subr.bf16.mxu0 0
    %1884 = vmatpush1.bf16.msra.mxu0 0
    %1885 = vmatprep.subr.bf16.mxu0 0
    %1886 = vmatpush1.bf16.msra.mxu0 0
    %1887 = vmatprep.subr.bf16.mxu0 0
    %1888 = vmatpush1.bf16.msra.mxu0 0
    %1889 = vmatprep.subr.bf16.mxu0 0
    %1890 = vmatpush1.bf16.msra.mxu0 0
    %1891 = vmatprep.subr.bf16.mxu0 0
    %1892 = vmatpush1.bf16.msra.mxu0 0
    %1893 = vmatprep.subr.bf16.mxu0 0
    %1894 = vmatpush1.bf16.msra.mxu0 0
    %1895 = vmatprep.mubr.bf16.mxu0 0
    %1896 = vmatmul.mubr.bf16.gmra.mrb[0].mxu0 %v1858
    %v1897 = vpop.f32.mrb[0].mxu0
    %v1898 = vadd.f32 0.0, %v1897
    %v1899 = vpop.f32.mrb[0].mxu0
    %v1900 = vpop.f32.mrb[0].mxu0
    %v1901 = vpop.f32.mrb[0].mxu0
    %1902 = vdwg.mxu0
    %v1903 = vpack.c.bf16 %v903, %v903
    %v1904 = vpack.c.bf16 %v907, %v907
    %v1905 = vpack.c.bf16 %v913, %v913
    %v1906 = vpack.c.bf16 %v917, %v917
    %v1907 = vpack.c.bf16 %v923, %v923
    %v1908 = vpack.c.bf16 %v927, %v927
    %v1909 = vpack.c.bf16 %v933, %v933
    %v1910 = vpack.c.bf16 %v937, %v937
    %v1911 = vpack.c.bf16 %v976, %v976
    %v1912 = vpack.c.bf16 %v980, %v980
    %v1913 = vpack.c.bf16 %v986, %v986
    %v1914 = vpack.c.bf16 %v990, %v990
    %v1915 = vpack.c.bf16 %v996, %v996
    %v1916 = vpack.c.bf16 %v1000, %v1000
    %v1917 = vpack.c.bf16 %v1006, %v1006
    %v1918 = vpack.c.bf16 %v1010, %v1010
    %v1919 = vpack.c.bf16 %v1049, %v1049
    %v1920 = vpack.c.bf16 %v1053, %v1053
    %v1921 = vpack.c.bf16 %v1059, %v1059
    %v1922 = vpack.c.bf16 %v1063, %v1063
    %v1923 = vpack.c.bf16 %v1069, %v1069
    %v1924 = vpack.c.bf16 %v1073, %v1073
    %v1925 = vpack.c.bf16 %v1079, %v1079
    %v1926 = vpack.c.bf16 %v1083, %v1083
    %1927 = vmatprep.subr.bf16.mxu0 0
    %1928 = vmatpush1.bf16.xpose.msra.mxu0 %v1911
    %1929 = vmatprep.subr.bf16.mxu0 0
    %1930 = vmatpush1.bf16.xpose.msra.mxu0 0
    %1931 = vmatprep.subr.bf16.mxu0 0
    %1932 = vmatpush1.bf16.xpose.msra.mxu0 0
    %1933 = vmatprep.subr.bf16.mxu0 0
    %1934 = vmatpush1.bf16.xpose.msra.mxu0 0
    %1935 = vmatprep.subr.bf16.mxu0 0
    %1936 = vmatpush1.bf16.xpose.msra.mxu0 0
    %1937 = vmatprep.subr.bf16.mxu0 0
    %1938 = vmatpush1.bf16.xpose.msra.mxu0 0
    %1939 = vmatprep.subr.bf16.mxu0 0
    %1940 = vmatpush1.bf16.xpose.msra.mxu0 0
    %1941 = vmatprep.subr.bf16.mxu0 0
    %1942 = vmatpush1.bf16.xpose.msra.mxu0 0
    %1943 = vmatprep.subr.bf16.mxu0 0
    %1944 = vmatpush1.bf16.xpose.msra.mxu0 0
    %1945 = vmatprep.subr.bf16.mxu0 0
    %1946 = vmatpush1.bf16.xpose.msra.mxu0 0
    %1947 = vmatprep.subr.bf16.mxu0 0
    %1948 = vmatpush1.bf16.xpose.msra.mxu0 0
    %1949 = vmatprep.subr.bf16.mxu0 0
    %1950 = vmatpush1.bf16.xpose.msra.mxu0 0
    %1951 = vmatprep.subr.bf16.mxu0 0
    %1952 = vmatpush1.bf16.xpose.msra.mxu0 0
    %1953 = vmatprep.subr.bf16.mxu0 0
    %1954 = vmatpush1.bf16.xpose.msra.mxu0 0
    %1955 = vmatprep.subr.bf16.mxu0 0
    %1956 = vmatpush1.bf16.xpose.msra.mxu0 0
    %1957 = vmatprep.subr.bf16.mxu0 0
    %1958 = vmatpush1.bf16.xpose.msra.mxu0 0
    %1959 = vmatprep.mubr.bf16.mxu0 0
    %1960 = vmatmul.mubr.bf16.gmra.mrb[0].mxu0 %v1903
    %v1961 = vpop.f32.mrb[0].mxu0
    %v1962 = vadd.f32 0.0, %v1961
    %v1963 = vpop.f32.mrb[0].mxu0
    %v1964 = vpop.f32.mrb[0].mxu0
    %v1965 = vpop.f32.mrb[0].mxu0
    %1966 = vdwg.mxu0
    %1967 = vmatprep.subr.bf16.mxu0 0
    %1968 = vmatpush1.bf16.xpose.msra.mxu0 %v1912
    %1969 = vmatprep.subr.bf16.mxu0 0
    %1970 = vmatpush1.bf16.xpose.msra.mxu0 0
    %1971 = vmatprep.subr.bf16.mxu0 0
    %1972 = vmatpush1.bf16.xpose.msra.mxu0 0
    %1973 = vmatprep.subr.bf16.mxu0 0
    %1974 = vmatpush1.bf16.xpose.msra.mxu0 0
    %1975 = vmatprep.subr.bf16.mxu0 0
    %1976 = vmatpush1.bf16.xpose.msra.mxu0 0
    %1977 = vmatprep.subr.bf16.mxu0 0
    %1978 = vmatpush1.bf16.xpose.msra.mxu0 0
    %1979 = vmatprep.subr.bf16.mxu0 0
    %1980 = vmatpush1.bf16.xpose.msra.mxu0 0
    %1981 = vmatprep.subr.bf16.mxu0 0
    %1982 = vmatpush1.bf16.xpose.msra.mxu0 0
    %1983 = vmatprep.subr.bf16.mxu0 0
    %1984 = vmatpush1.bf16.xpose.msra.mxu0 0
    %1985 = vmatprep.subr.bf16.mxu0 0
    %1986 = vmatpush1.bf16.xpose.msra.mxu0 0
    %1987 = vmatprep.subr.bf16.mxu0 0
    %1988 = vmatpush1.bf16.xpose.msra.mxu0 0
    %1989 = vmatprep.subr.bf16.mxu0 0
    %1990 = vmatpush1.bf16.xpose.msra.mxu0 0
    %1991 = vmatprep.subr.bf16.mxu0 0
    %1992 = vmatpush1.bf16.xpose.msra.mxu0 0
    %1993 = vmatprep.subr.bf16.mxu0 0
    %1994 = vmatpush1.bf16.xpose.msra.mxu0 0
    %1995 = vmatprep.subr.bf16.mxu0 0
    %1996 = vmatpush1.bf16.xpose.msra.mxu0 0
    %1997 = vmatprep.subr.bf16.mxu0 0
    %1998 = vmatpush1.bf16.xpose.msra.mxu0 0
    %1999 = vmatprep.mubr.bf16.mxu0 0
    %2000 = vmatmul.mubr.bf16.gmra.mrb[0].mxu0 %v1904
    %v2001 = vpop.f32.mrb[0].mxu0
    %v2002 = vadd.f32 0.0, %v2001
    %v2003 = vpop.f32.mrb[0].mxu0
    %v2004 = vpop.f32.mrb[0].mxu0
    %v2005 = vpop.f32.mrb[0].mxu0
    %2006 = vdwg.mxu0
    %2007 = vmatprep.subr.bf16.mxu0 0
    %2008 = vmatpush1.bf16.xpose.msra.mxu0 %v1913
    %2009 = vmatprep.subr.bf16.mxu0 0
    %2010 = vmatpush1.bf16.xpose.msra.mxu0 0
    %2011 = vmatprep.subr.bf16.mxu0 0
    %2012 = vmatpush1.bf16.xpose.msra.mxu0 0
    %2013 = vmatprep.subr.bf16.mxu0 0
    %2014 = vmatpush1.bf16.xpose.msra.mxu0 0
    %2015 = vmatprep.subr.bf16.mxu0 0
    %2016 = vmatpush1.bf16.xpose.msra.mxu0 0
    %2017 = vmatprep.subr.bf16.mxu0 0
    %2018 = vmatpush1.bf16.xpose.msra.mxu0 0
    %2019 = vmatprep.subr.bf16.mxu0 0
    %2020 = vmatpush1.bf16.xpose.msra.mxu0 0
    %2021 = vmatprep.subr.bf16.mxu0 0
    %2022 = vmatpush1.bf16.xpose.msra.mxu0 0
    %2023 = vmatprep.subr.bf16.mxu0 0
    %2024 = vmatpush1.bf16.xpose.msra.mxu0 0
    %2025 = vmatprep.subr.bf16.mxu0 0
    %2026 = vmatpush1.bf16.xpose.msra.mxu0 0
    %2027 = vmatprep.subr.bf16.mxu0 0
    %2028 = vmatpush1.bf16.xpose.msra.mxu0 0
    %2029 = vmatprep.subr.bf16.mxu0 0
    %2030 = vmatpush1.bf16.xpose.msra.mxu0 0
    %2031 = vmatprep.subr.bf16.mxu0 0
    %2032 = vmatpush1.bf16.xpose.msra.mxu0 0
    %2033 = vmatprep.subr.bf16.mxu0 0
    %2034 = vmatpush1.bf16.xpose.msra.mxu0 0
    %2035 = vmatprep.subr.bf16.mxu0 0
    %2036 = vmatpush1.bf16.xpose.msra.mxu0 0
    %2037 = vmatprep.subr.bf16.mxu0 0
    %2038 = vmatpush1.bf16.xpose.msra.mxu0 0
    %2039 = vmatprep.mubr.bf16.mxu0 0
    %2040 = vmatmul.mubr.bf16.gmra.mrb[0].mxu0 %v1905
    %v2041 = vpop.f32.mrb[0].mxu0
    %v2042 = vadd.f32 0.0, %v2041
    %v2043 = vpop.f32.mrb[0].mxu0
    %v2044 = vpop.f32.mrb[0].mxu0
    %v2045 = vpop.f32.mrb[0].mxu0
    %2046 = vdwg.mxu0
    %2047 = vmatprep.subr.bf16.mxu0 0
    %2048 = vmatpush1.bf16.xpose.msra.mxu0 %v1914
    %2049 = vmatprep.subr.bf16.mxu0 0
    %2050 = vmatpush1.bf16.xpose.msra.mxu0 0
    %2051 = vmatprep.subr.bf16.mxu0 0
    %2052 = vmatpush1.bf16.xpose.msra.mxu0 0
    %2053 = vmatprep.subr.bf16.mxu0 0
    %2054 = vmatpush1.bf16.xpose.msra.mxu0 0
    %2055 = vmatprep.subr.bf16.mxu0 0
    %2056 = vmatpush1.bf16.xpose.msra.mxu0 0
    %2057 = vmatprep.subr.bf16.mxu0 0
    %2058 = vmatpush1.bf16.xpose.msra.mxu0 0
    %2059 = vmatprep.subr.bf16.mxu0 0
    %2060 = vmatpush1.bf16.xpose.msra.mxu0 0
    %2061 = vmatprep.subr.bf16.mxu0 0
    %2062 = vmatpush1.bf16.xpose.msra.mxu0 0
    %2063 = vmatprep.subr.bf16.mxu0 0
    %2064 = vmatpush1.bf16.xpose.msra.mxu0 0
    %2065 = vmatprep.subr.bf16.mxu0 0
    %2066 = vmatpush1.bf16.xpose.msra.mxu0 0
    %2067 = vmatprep.subr.bf16.mxu0 0
    %2068 = vmatpush1.bf16.xpose.msra.mxu0 0
    %2069 = vmatprep.subr.bf16.mxu0 0
    %2070 = vmatpush1.bf16.xpose.msra.mxu0 0
    %2071 = vmatprep.subr.bf16.mxu0 0
    %2072 = vmatpush1.bf16.xpose.msra.mxu0 0
    %2073 = vmatprep.subr.bf16.mxu0 0
    %2074 = vmatpush1.bf16.xpose.msra.mxu0 0
    %2075 = vmatprep.subr.bf16.mxu0 0
    %2076 = vmatpush1.bf16.xpose.msra.mxu0 0
    %2077 = vmatprep.subr.bf16.mxu0 0
    %2078 = vmatpush1.bf16.xpose.msra.mxu0 0
    %2079 = vmatprep.mubr.bf16.mxu0 0
    %2080 = vmatmul.mubr.bf16.gmra.mrb[0].mxu0 %v1906
    %v2081 = vpop.f32.mrb[0].mxu0
    %v2082 = vadd.f32 0.0, %v2081
    %v2083 = vpop.f32.mrb[0].mxu0
    %v2084 = vpop.f32.mrb[0].mxu0
    %v2085 = vpop.f32.mrb[0].mxu0
    %2086 = vdwg.mxu0
    %2087 = vmatprep.subr.bf16.mxu0 0
    %2088 = vmatpush1.bf16.xpose.msra.mxu0 %v1915
    %2089 = vmatprep.subr.bf16.mxu0 0
    %2090 = vmatpush1.bf16.xpose.msra.mxu0 0
    %2091 = vmatprep.subr.bf16.mxu0 0
    %2092 = vmatpush1.bf16.xpose.msra.mxu0 0
    %2093 = vmatprep.subr.bf16.mxu0 0
    %2094 = vmatpush1.bf16.xpose.msra.mxu0 0
    %2095 = vmatprep.subr.bf16.mxu0 0
    %2096 = vmatpush1.bf16.xpose.msra.mxu0 0
    %2097 = vmatprep.subr.bf16.mxu0 0
    %2098 = vmatpush1.bf16.xpose.msra.mxu0 0
    %2099 = vmatprep.subr.bf16.mxu0 0
    %2100 = vmatpush1.bf16.xpose.msra.mxu0 0
    %2101 = vmatprep.subr.bf16.mxu0 0
    %2102 = vmatpush1.bf16.xpose.msra.mxu0 0
    %2103 = vmatprep.subr.bf16.mxu0 0
    %2104 = vmatpush1.bf16.xpose.msra.mxu0 0
    %2105 = vmatprep.subr.bf16.mxu0 0
    %2106 = vmatpush1.bf16.xpose.msra.mxu0 0
    %2107 = vmatprep.subr.bf16.mxu0 0
    %2108 = vmatpush1.bf16.xpose.msra.mxu0 0
    %2109 = vmatprep.subr.bf16.mxu0 0
    %2110 = vmatpush1.bf16.xpose.msra.mxu0 0
    %2111 = vmatprep.subr.bf16.mxu0 0
    %2112 = vmatpush1.bf16.xpose.msra.mxu0 0
    %2113 = vmatprep.subr.bf16.mxu0 0
    %2114 = vmatpush1.bf16.xpose.msra.mxu0 0
    %2115 = vmatprep.subr.bf16.mxu0 0
    %2116 = vmatpush1.bf16.xpose.msra.mxu0 0
    %2117 = vmatprep.subr.bf16.mxu0 0
    %2118 = vmatpush1.bf16.xpose.msra.mxu0 0
    %2119 = vmatprep.mubr.bf16.mxu0 0
    %2120 = vmatmul.mubr.bf16.gmra.mrb[0].mxu0 %v1907
    %v2121 = vpop.f32.mrb[0].mxu0
    %v2122 = vadd.f32 0.0, %v2121
    %v2123 = vpop.f32.mrb[0].mxu0
    %v2124 = vpop.f32.mrb[0].mxu0
    %v2125 = vpop.f32.mrb[0].mxu0
    %2126 = vdwg.mxu0
    %2127 = vmatprep.subr.bf16.mxu0 0
    %2128 = vmatpush1.bf16.xpose.msra.mxu0 %v1916
    %2129 = vmatprep.subr.bf16.mxu0 0
    %2130 = vmatpush1.bf16.xpose.msra.mxu0 0
    %2131 = vmatprep.subr.bf16.mxu0 0
    %2132 = vmatpush1.bf16.xpose.msra.mxu0 0
    %2133 = vmatprep.subr.bf16.mxu0 0
    %2134 = vmatpush1.bf16.xpose.msra.mxu0 0
    %2135 = vmatprep.subr.bf16.mxu0 0
    %2136 = vmatpush1.bf16.xpose.msra.mxu0 0
    %2137 = vmatprep.subr.bf16.mxu0 0
    %2138 = vmatpush1.bf16.xpose.msra.mxu0 0
    %2139 = vmatprep.subr.bf16.mxu0 0
    %2140 = vmatpush1.bf16.xpose.msra.mxu0 0
    %2141 = vmatprep.subr.bf16.mxu0 0
    %2142 = vmatpush1.bf16.xpose.msra.mxu0 0
    %2143 = vmatprep.subr.bf16.mxu0 0
    %2144 = vmatpush1.bf16.xpose.msra.mxu0 0
    %2145 = vmatprep.subr.bf16.mxu0 0
    %2146 = vmatpush1.bf16.xpose.msra.mxu0 0
    %2147 = vmatprep.subr.bf16.mxu0 0
    %2148 = vmatpush1.bf16.xpose.msra.mxu0 0
    %2149 = vmatprep.subr.bf16.mxu0 0
    %2150 = vmatpush1.bf16.xpose.msra.mxu0 0
    %2151 = vmatprep.subr.bf16.mxu0 0
    %2152 = vmatpush1.bf16.xpose.msra.mxu0 0
    %2153 = vmatprep.subr.bf16.mxu0 0
    %2154 = vmatpush1.bf16.xpose.msra.mxu0 0
    %2155 = vmatprep.subr.bf16.mxu0 0
    %2156 = vmatpush1.bf16.xpose.msra.mxu0 0
    %2157 = vmatprep.subr.bf16.mxu0 0
    %2158 = vmatpush1.bf16.xpose.msra.mxu0 0
    %2159 = vmatprep.mubr.bf16.mxu0 0
    %2160 = vmatmul.mubr.bf16.gmra.mrb[0].mxu0 %v1908
    %v2161 = vpop.f32.mrb[0].mxu0
    %v2162 = vadd.f32 0.0, %v2161
    %v2163 = vpop.f32.mrb[0].mxu0
    %v2164 = vpop.f32.mrb[0].mxu0
    %v2165 = vpop.f32.mrb[0].mxu0
    %2166 = vdwg.mxu0
    %2167 = vmatprep.subr.bf16.mxu0 0
    %2168 = vmatpush1.bf16.xpose.msra.mxu0 %v1917
    %2169 = vmatprep.subr.bf16.mxu0 0
    %2170 = vmatpush1.bf16.xpose.msra.mxu0 0
    %2171 = vmatprep.subr.bf16.mxu0 0
    %2172 = vmatpush1.bf16.xpose.msra.mxu0 0
    %2173 = vmatprep.subr.bf16.mxu0 0
    %2174 = vmatpush1.bf16.xpose.msra.mxu0 0
    %2175 = vmatprep.subr.bf16.mxu0 0
    %2176 = vmatpush1.bf16.xpose.msra.mxu0 0
    %2177 = vmatprep.subr.bf16.mxu0 0
    %2178 = vmatpush1.bf16.xpose.msra.mxu0 0
    %2179 = vmatprep.subr.bf16.mxu0 0
    %2180 = vmatpush1.bf16.xpose.msra.mxu0 0
    %2181 = vmatprep.subr.bf16.mxu0 0
    %2182 = vmatpush1.bf16.xpose.msra.mxu0 0
    %2183 = vmatprep.subr.bf16.mxu0 0
    %2184 = vmatpush1.bf16.xpose.msra.mxu0 0
    %2185 = vmatprep.subr.bf16.mxu0 0
    %2186 = vmatpush1.bf16.xpose.msra.mxu0 0
    %2187 = vmatprep.subr.bf16.mxu0 0
    %2188 = vmatpush1.bf16.xpose.msra.mxu0 0
    %2189 = vmatprep.subr.bf16.mxu0 0
    %2190 = vmatpush1.bf16.xpose.msra.mxu0 0
    %2191 = vmatprep.subr.bf16.mxu0 0
    %2192 = vmatpush1.bf16.xpose.msra.mxu0 0
    %2193 = vmatprep.subr.bf16.mxu0 0
    %2194 = vmatpush1.bf16.xpose.msra.mxu0 0
    %2195 = vmatprep.subr.bf16.mxu0 0
    %2196 = vmatpush1.bf16.xpose.msra.mxu0 0
    %2197 = vmatprep.subr.bf16.mxu0 0
    %2198 = vmatpush1.bf16.xpose.msra.mxu0 0
    %2199 = vmatprep.mubr.bf16.mxu0 0
    %2200 = vmatmul.mubr.bf16.gmra.mrb[0].mxu0 %v1909
    %v2201 = vpop.f32.mrb[0].mxu0
    %v2202 = vadd.f32 0.0, %v2201
    %v2203 = vpop.f32.mrb[0].mxu0
    %v2204 = vpop.f32.mrb[0].mxu0
    %v2205 = vpop.f32.mrb[0].mxu0
    %2206 = vdwg.mxu0
    %2207 = vmatprep.subr.bf16.mxu0 0
    %2208 = vmatpush1.bf16.xpose.msra.mxu0 %v1918
    %2209 = vmatprep.subr.bf16.mxu0 0
    %2210 = vmatpush1.bf16.xpose.msra.mxu0 0
    %2211 = vmatprep.subr.bf16.mxu0 0
    %2212 = vmatpush1.bf16.xpose.msra.mxu0 0
    %2213 = vmatprep.subr.bf16.mxu0 0
    %2214 = vmatpush1.bf16.xpose.msra.mxu0 0
    %2215 = vmatprep.subr.bf16.mxu0 0
    %2216 = vmatpush1.bf16.xpose.msra.mxu0 0
    %2217 = vmatprep.subr.bf16.mxu0 0
    %2218 = vmatpush1.bf16.xpose.msra.mxu0 0
    %2219 = vmatprep.subr.bf16.mxu0 0
    %2220 = vmatpush1.bf16.xpose.msra.mxu0 0
    %2221 = vmatprep.subr.bf16.mxu0 0
    %2222 = vmatpush1.bf16.xpose.msra.mxu0 0
    %2223 = vmatprep.subr.bf16.mxu0 0
    %2224 = vmatpush1.bf16.xpose.msra.mxu0 0
    %2225 = vmatprep.subr.bf16.mxu0 0
    %2226 = vmatpush1.bf16.xpose.msra.mxu0 0
    %2227 = vmatprep.subr.bf16.mxu0 0
    %2228 = vmatpush1.bf16.xpose.msra.mxu0 0
    %2229 = vmatprep.subr.bf16.mxu0 0
    %2230 = vmatpush1.bf16.xpose.msra.mxu0 0
    %2231 = vmatprep.subr.bf16.mxu0 0
    %2232 = vmatpush1.bf16.xpose.msra.mxu0 0
    %2233 = vmatprep.subr.bf16.mxu0 0
    %2234 = vmatpush1.bf16.xpose.msra.mxu0 0
    %2235 = vmatprep.subr.bf16.mxu0 0
    %2236 = vmatpush1.bf16.xpose.msra.mxu0 0
    %2237 = vmatprep.subr.bf16.mxu0 0
    %2238 = vmatpush1.bf16.xpose.msra.mxu0 0
    %2239 = vmatprep.mubr.bf16.mxu0 0
    %2240 = vmatmul.mubr.bf16.gmra.mrb[0].mxu0 %v1910
    %v2241 = vpop.f32.mrb[0].mxu0
    %v2242 = vadd.f32 0.0, %v2241
    %v2243 = vpop.f32.mrb[0].mxu0
    %v2244 = vpop.f32.mrb[0].mxu0
    %v2245 = vpop.f32.mrb[0].mxu0
    %2246 = vdwg.mxu0
    %v2247 = vmul.f32 %v1962, 0.088388346
    %v2248 = vmul.f32 %v2002, 0.088388346
    %v2249 = vmul.f32 %v2042, 0.088388346
    %v2250 = vmul.f32 %v2082, 0.088388346
    %v2251 = vmul.f32 %v2122, 0.088388346
    %v2252 = vmul.f32 %v2162, 0.088388346
    %v2253 = vmul.f32 %v2202, 0.088388346
    %v2254 = vmul.f32 %v2242, 0.088388346
    %v2255 = vsel %vm1437, %v2247, -inf
    %2256 = vmax.xlane.f32.xlu0 %v2255
    %v2257 = vpop.xlane.xlu0 %2256
    %v2258 = vsel %vm1437, %v2248, -inf
    %2259 = vmax.xlane.f32.xlu0 %v2258
    %v2260 = vpop.xlane.xlu0 %2259
    %v2261 = vsel %vm1437, %v2249, -inf
    %2262 = vmax.xlane.f32.xlu0 %v2261
    %v2263 = vpop.xlane.xlu0 %2262
    %v2264 = vsel %vm1437, %v2250, -inf
    %2265 = vmax.xlane.f32.xlu0 %v2264
    %v2266 = vpop.xlane.xlu0 %2265
    %v2267 = vsel %vm1437, %v2251, -inf
    %2268 = vmax.xlane.f32.xlu0 %v2267
    %v2269 = vpop.xlane.xlu0 %2268
    %v2270 = vsel %vm1437, %v2252, -inf
    %2271 = vmax.xlane.f32.xlu0 %v2270
    %v2272 = vpop.xlane.xlu0 %2271
    %v2273 = vsel %vm1437, %v2253, -inf
    %2274 = vmax.xlane.f32.xlu0 %v2273
    %v2275 = vpop.xlane.xlu0 %2274
    %v2276 = vsel %vm1437, %v2254, -inf
    %2277 = vmax.xlane.f32.xlu0 %v2276
    %v2278 = vpop.xlane.xlu0 %2277
    %v2279 = vsub.f32 %v2247, %v2257
    %v2280 = vsub.f32 %v2248, %v2260
    %v2281 = vsub.f32 %v2249, %v2263
    %v2282 = vsub.f32 %v2250, %v2266
    %v2283 = vsub.f32 %v2251, %v2269
    %v2284 = vsub.f32 %v2252, %v2272
    %v2285 = vsub.f32 %v2253, %v2275
    %v2286 = vsub.f32 %v2254, %v2278
    %v2287 = vmul.f32 %v2279, 1.442695
    %v2288 = vpow.pop %v2287
    %v2289 = vmul.f32 %v2280, 1.442695
    %v2290 = vpow.pop %v2289
    %v2291 = vmul.f32 %v2281, 1.442695
    %v2292 = vpow.pop %v2291
    %v2293 = vmul.f32 %v2282, 1.442695
    %v2294 = vpow.pop %v2293
    %v2295 = vmul.f32 %v2283, 1.442695
    %v2296 = vpow.pop %v2295
    %v2297 = vmul.f32 %v2284, 1.442695
    %v2298 = vpow.pop %v2297
    %v2299 = vmul.f32 %v2285, 1.442695
    %v2300 = vpow.pop %v2299
    %v2301 = vmul.f32 %v2286, 1.442695
    %v2302 = vpow.pop %v2301
    %v2303 = vsel %vm1437, %v2288, 0.0
    %2304 = vadd.xlane.f32.xlu0 %v2303
    %v2305 = vpop.xlane.xlu0 %2304
    %v2306 = vsel %vm1437, %v2290, 0.0
    %2307 = vadd.xlane.f32.xlu0 %v2306
    %v2308 = vpop.xlane.xlu0 %2307
    %v2309 = vsel %vm1437, %v2292, 0.0
    %2310 = vadd.xlane.f32.xlu0 %v2309
    %v2311 = vpop.xlane.xlu0 %2310
    %v2312 = vsel %vm1437, %v2294, 0.0
    %2313 = vadd.xlane.f32.xlu0 %v2312
    %v2314 = vpop.xlane.xlu0 %2313
    %v2315 = vsel %vm1437, %v2296, 0.0
    %2316 = vadd.xlane.f32.xlu0 %v2315
    %v2317 = vpop.xlane.xlu0 %2316
    %v2318 = vsel %vm1437, %v2298, 0.0
    %2319 = vadd.xlane.f32.xlu0 %v2318
    %v2320 = vpop.xlane.xlu0 %2319
    %v2321 = vsel %vm1437, %v2300, 0.0
    %2322 = vadd.xlane.f32.xlu0 %v2321
    %v2323 = vpop.xlane.xlu0 %2322
    %v2324 = vsel %vm1437, %v2302, 0.0
    %2325 = vadd.xlane.f32.xlu0 %v2324
    %v2326 = vpop.xlane.xlu0 %2325
    %v2327 = vrcp.pop %v2305
    %v2328 = vrcp.pop %v2308
    %v2329 = vrcp.pop %v2311
    %v2330 = vrcp.pop %v2314
    %v2331 = vrcp.pop %v2317
    %v2332 = vrcp.pop %v2320
    %v2333 = vrcp.pop %v2323
    %v2334 = vrcp.pop %v2326
    %v2335 = vmul.f32 %v2288, %v2327
    %v2336 = vmul.f32 %v2290, %v2328
    %v2337 = vmul.f32 %v2292, %v2329
    %v2338 = vmul.f32 %v2294, %v2330
    %v2339 = vmul.f32 %v2296, %v2331
    %v2340 = vmul.f32 %v2298, %v2332
    %v2341 = vmul.f32 %v2300, %v2333
    %v2342 = vmul.f32 %v2302, %v2334
    %v2343 = vpack.c.bf16 %v2335, %v2335
    %v2344 = vpack.c.bf16 %v2336, %v2336
    %v2345 = vpack.c.bf16 %v2337, %v2337
    %v2346 = vpack.c.bf16 %v2338, %v2338
    %v2347 = vpack.c.bf16 %v2339, %v2339
    %v2348 = vpack.c.bf16 %v2340, %v2340
    %v2349 = vpack.c.bf16 %v2341, %v2341
    %v2350 = vpack.c.bf16 %v2342, %v2342
    %v2352 = vsel %vm1437, %v2343, 0
    %v2355 = vsel %vm1537, %v1919, 0
    %2357 = vmatprep.subr.bf16.mxu0 0
    %2358 = vmatpush1.bf16.msra.mxu0 %v2355
    %2359 = vmatprep.subr.bf16.mxu0 0
    %2360 = vmatpush1.bf16.msra.mxu0 0
    %2361 = vmatprep.subr.bf16.mxu0 0
    %2362 = vmatpush1.bf16.msra.mxu0 0
    %2363 = vmatprep.subr.bf16.mxu0 0
    %2364 = vmatpush1.bf16.msra.mxu0 0
    %2365 = vmatprep.subr.bf16.mxu0 0
    %2366 = vmatpush1.bf16.msra.mxu0 0
    %2367 = vmatprep.subr.bf16.mxu0 0
    %2368 = vmatpush1.bf16.msra.mxu0 0
    %2369 = vmatprep.subr.bf16.mxu0 0
    %2370 = vmatpush1.bf16.msra.mxu0 0
    %2371 = vmatprep.subr.bf16.mxu0 0
    %2372 = vmatpush1.bf16.msra.mxu0 0
    %2373 = vmatprep.subr.bf16.mxu0 0
    %2374 = vmatpush1.bf16.msra.mxu0 0
    %2375 = vmatprep.subr.bf16.mxu0 0
    %2376 = vmatpush1.bf16.msra.mxu0 0
    %2377 = vmatprep.subr.bf16.mxu0 0
    %2378 = vmatpush1.bf16.msra.mxu0 0
    %2379 = vmatprep.subr.bf16.mxu0 0
    %2380 = vmatpush1.bf16.msra.mxu0 0
    %2381 = vmatprep.subr.bf16.mxu0 0
    %2382 = vmatpush1.bf16.msra.mxu0 0
    %2383 = vmatprep.subr.bf16.mxu0 0
    %2384 = vmatpush1.bf16.msra.mxu0 0
    %2385 = vmatprep.subr.bf16.mxu0 0
    %2386 = vmatpush1.bf16.msra.mxu0 0
    %2387 = vmatprep.subr.bf16.mxu0 0
    %2388 = vmatpush1.bf16.msra.mxu0 0
    %2389 = vmatprep.mubr.bf16.mxu0 0
    %2390 = vmatmul.mubr.bf16.gmra.mrb[0].mxu0 %v2352
    %v2391 = vpop.f32.mrb[0].mxu0
    %v2392 = vadd.f32 0.0, %v2391
    %v2393 = vpop.f32.mrb[0].mxu0
    %v2394 = vpop.f32.mrb[0].mxu0
    %v2395 = vpop.f32.mrb[0].mxu0
    %2396 = vdwg.mxu0
    %v2398 = vsel %vm1437, %v2344, 0
    %v2401 = vsel %vm1537, %v1920, 0
    %2403 = vmatprep.subr.bf16.mxu0 0
    %2404 = vmatpush1.bf16.msra.mxu0 %v2401
    %2405 = vmatprep.subr.bf16.mxu0 0
    %2406 = vmatpush1.bf16.msra.mxu0 0
    %2407 = vmatprep.subr.bf16.mxu0 0
    %2408 = vmatpush1.bf16.msra.mxu0 0
    %2409 = vmatprep.subr.bf16.mxu0 0
    %2410 = vmatpush1.bf16.msra.mxu0 0
    %2411 = vmatprep.subr.bf16.mxu0 0
    %2412 = vmatpush1.bf16.msra.mxu0 0
    %2413 = vmatprep.subr.bf16.mxu0 0
    %2414 = vmatpush1.bf16.msra.mxu0 0
    %2415 = vmatprep.subr.bf16.mxu0 0
    %2416 = vmatpush1.bf16.msra.mxu0 0
    %2417 = vmatprep.subr.bf16.mxu0 0
    %2418 = vmatpush1.bf16.msra.mxu0 0
    %2419 = vmatprep.subr.bf16.mxu0 0
    %2420 = vmatpush1.bf16.msra.mxu0 0
    %2421 = vmatprep.subr.bf16.mxu0 0
    %2422 = vmatpush1.bf16.msra.mxu0 0
    %2423 = vmatprep.subr.bf16.mxu0 0
    %2424 = vmatpush1.bf16.msra.mxu0 0
    %2425 = vmatprep.subr.bf16.mxu0 0
    %2426 = vmatpush1.bf16.msra.mxu0 0
    %2427 = vmatprep.subr.bf16.mxu0 0
    %2428 = vmatpush1.bf16.msra.mxu0 0
    %2429 = vmatprep.subr.bf16.mxu0 0
    %2430 = vmatpush1.bf16.msra.mxu0 0
    %2431 = vmatprep.subr.bf16.mxu0 0
    %2432 = vmatpush1.bf16.msra.mxu0 0
    %2433 = vmatprep.subr.bf16.mxu0 0
    %2434 = vmatpush1.bf16.msra.mxu0 0
    %2435 = vmatprep.mubr.bf16.mxu0 0
    %2436 = vmatmul.mubr.bf16.gmra.mrb[0].mxu0 %v2398
    %v2437 = vpop.f32.mrb[0].mxu0
    %v2438 = vadd.f32 0.0, %v2437
    %v2439 = vpop.f32.mrb[0].mxu0
    %v2440 = vpop.f32.mrb[0].mxu0
    %v2441 = vpop.f32.mrb[0].mxu0
    %2442 = vdwg.mxu0
    %v2444 = vsel %vm1437, %v2345, 0
    %v2447 = vsel %vm1537, %v1921, 0
    %2449 = vmatprep.subr.bf16.mxu0 0
    %2450 = vmatpush1.bf16.msra.mxu0 %v2447
    %2451 = vmatprep.subr.bf16.mxu0 0
    %2452 = vmatpush1.bf16.msra.mxu0 0
    %2453 = vmatprep.subr.bf16.mxu0 0
    %2454 = vmatpush1.bf16.msra.mxu0 0
    %2455 = vmatprep.subr.bf16.mxu0 0
    %2456 = vmatpush1.bf16.msra.mxu0 0
    %2457 = vmatprep.subr.bf16.mxu0 0
    %2458 = vmatpush1.bf16.msra.mxu0 0
    %2459 = vmatprep.subr.bf16.mxu0 0
    %2460 = vmatpush1.bf16.msra.mxu0 0
    %2461 = vmatprep.subr.bf16.mxu0 0
    %2462 = vmatpush1.bf16.msra.mxu0 0
    %2463 = vmatprep.subr.bf16.mxu0 0
    %2464 = vmatpush1.bf16.msra.mxu0 0
    %2465 = vmatprep.subr.bf16.mxu0 0
    %2466 = vmatpush1.bf16.msra.mxu0 0
    %2467 = vmatprep.subr.bf16.mxu0 0
    %2468 = vmatpush1.bf16.msra.mxu0 0
    %2469 = vmatprep.subr.bf16.mxu0 0
    %2470 = vmatpush1.bf16.msra.mxu0 0
    %2471 = vmatprep.subr.bf16.mxu0 0
    %2472 = vmatpush1.bf16.msra.mxu0 0
    %2473 = vmatprep.subr.bf16.mxu0 0
    %2474 = vmatpush1.bf16.msra.mxu0 0
    %2475 = vmatprep.subr.bf16.mxu0 0
    %2476 = vmatpush1.bf16.msra.mxu0 0
    %2477 = vmatprep.subr.bf16.mxu0 0
    %2478 = vmatpush1.bf16.msra.mxu0 0
    %2479 = vmatprep.subr.bf16.mxu0 0
    %2480 = vmatpush1.bf16.msra.mxu0 0
    %2481 = vmatprep.mubr.bf16.mxu0 0
    %2482 = vmatmul.mubr.bf16.gmra.mrb[0].mxu0 %v2444
    %v2483 = vpop.f32.mrb[0].mxu0
    %v2484 = vadd.f32 0.0, %v2483
    %v2485 = vpop.f32.mrb[0].mxu0
    %v2486 = vpop.f32.mrb[0].mxu0
    %v2487 = vpop.f32.mrb[0].mxu0
    %2488 = vdwg.mxu0
    %v2490 = vsel %vm1437, %v2346, 0
    %v2493 = vsel %vm1537, %v1922, 0
    %2495 = vmatprep.subr.bf16.mxu0 0
    %2496 = vmatpush1.bf16.msra.mxu0 %v2493
    %2497 = vmatprep.subr.bf16.mxu0 0
    %2498 = vmatpush1.bf16.msra.mxu0 0
    %2499 = vmatprep.subr.bf16.mxu0 0
    %2500 = vmatpush1.bf16.msra.mxu0 0
    %2501 = vmatprep.subr.bf16.mxu0 0
    %2502 = vmatpush1.bf16.msra.mxu0 0
    %2503 = vmatprep.subr.bf16.mxu0 0
    %2504 = vmatpush1.bf16.msra.mxu0 0
    %2505 = vmatprep.subr.bf16.mxu0 0
    %2506 = vmatpush1.bf16.msra.mxu0 0
    %2507 = vmatprep.subr.bf16.mxu0 0
    %2508 = vmatpush1.bf16.msra.mxu0 0
    %2509 = vmatprep.subr.bf16.mxu0 0
    %2510 = vmatpush1.bf16.msra.mxu0 0
    %2511 = vmatprep.subr.bf16.mxu0 0
    %2512 = vmatpush1.bf16.msra.mxu0 0
    %2513 = vmatprep.subr.bf16.mxu0 0
    %2514 = vmatpush1.bf16.msra.mxu0 0
    %2515 = vmatprep.subr.bf16.mxu0 0
    %2516 = vmatpush1.bf16.msra.mxu0 0
    %2517 = vmatprep.subr.bf16.mxu0 0
    %2518 = vmatpush1.bf16.msra.mxu0 0
    %2519 = vmatprep.subr.bf16.mxu0 0
    %2520 = vmatpush1.bf16.msra.mxu0 0
    %2521 = vmatprep.subr.bf16.mxu0 0
    %2522 = vmatpush1.bf16.msra.mxu0 0
    %2523 = vmatprep.subr.bf16.mxu0 0
    %2524 = vmatpush1.bf16.msra.mxu0 0
    %2525 = vmatprep.subr.bf16.mxu0 0
    %2526 = vmatpush1.bf16.msra.mxu0 0
    %2527 = vmatprep.mubr.bf16.mxu0 0
    %2528 = vmatmul.mubr.bf16.gmra.mrb[0].mxu0 %v2490
    %v2529 = vpop.f32.mrb[0].mxu0
    %v2530 = vadd.f32 0.0, %v2529
    %v2531 = vpop.f32.mrb[0].mxu0
    %v2532 = vpop.f32.mrb[0].mxu0
    %v2533 = vpop.f32.mrb[0].mxu0
    %2534 = vdwg.mxu0
    %v2536 = vsel %vm1437, %v2347, 0
    %v2539 = vsel %vm1537, %v1923, 0
    %2541 = vmatprep.subr.bf16.mxu0 0
    %2542 = vmatpush1.bf16.msra.mxu0 %v2539
    %2543 = vmatprep.subr.bf16.mxu0 0
    %2544 = vmatpush1.bf16.msra.mxu0 0
    %2545 = vmatprep.subr.bf16.mxu0 0
    %2546 = vmatpush1.bf16.msra.mxu0 0
    %2547 = vmatprep.subr.bf16.mxu0 0
    %2548 = vmatpush1.bf16.msra.mxu0 0
    %2549 = vmatprep.subr.bf16.mxu0 0
    %2550 = vmatpush1.bf16.msra.mxu0 0
    %2551 = vmatprep.subr.bf16.mxu0 0
    %2552 = vmatpush1.bf16.msra.mxu0 0
    %2553 = vmatprep.subr.bf16.mxu0 0
    %2554 = vmatpush1.bf16.msra.mxu0 0
    %2555 = vmatprep.subr.bf16.mxu0 0
    %2556 = vmatpush1.bf16.msra.mxu0 0
    %2557 = vmatprep.subr.bf16.mxu0 0
    %2558 = vmatpush1.bf16.msra.mxu0 0
    %2559 = vmatprep.subr.bf16.mxu0 0
    %2560 = vmatpush1.bf16.msra.mxu0 0
    %2561 = vmatprep.subr.bf16.mxu0 0
    %2562 = vmatpush1.bf16.msra.mxu0 0
    %2563 = vmatprep.subr.bf16.mxu0 0
    %2564 = vmatpush1.bf16.msra.mxu0 0
    %2565 = vmatprep.subr.bf16.mxu0 0
    %2566 = vmatpush1.bf16.msra.mxu0 0
    %2567 = vmatprep.subr.bf16.mxu0 0
    %2568 = vmatpush1.bf16.msra.mxu0 0
    %2569 = vmatprep.subr.bf16.mxu0 0
    %2570 = vmatpush1.bf16.msra.mxu0 0
    %2571 = vmatprep.subr.bf16.mxu0 0
    %2572 = vmatpush1.bf16.msra.mxu0 0
    %2573 = vmatprep.mubr.bf16.mxu0 0
    %2574 = vmatmul.mubr.bf16.gmra.mrb[0].mxu0 %v2536
    %v2575 = vpop.f32.mrb[0].mxu0
    %v2576 = vadd.f32 0.0, %v2575
    %v2577 = vpop.f32.mrb[0].mxu0
    %v2578 = vpop.f32.mrb[0].mxu0
    %v2579 = vpop.f32.mrb[0].mxu0
    %2580 = vdwg.mxu0
    %v2582 = vsel %vm1437, %v2348, 0
    %v2585 = vsel %vm1537, %v1924, 0
    %2587 = vmatprep.subr.bf16.mxu0 0
    %2588 = vmatpush1.bf16.msra.mxu0 %v2585
    %2589 = vmatprep.subr.bf16.mxu0 0
    %2590 = vmatpush1.bf16.msra.mxu0 0
    %2591 = vmatprep.subr.bf16.mxu0 0
    %2592 = vmatpush1.bf16.msra.mxu0 0
    %2593 = vmatprep.subr.bf16.mxu0 0
    %2594 = vmatpush1.bf16.msra.mxu0 0
    %2595 = vmatprep.subr.bf16.mxu0 0
    %2596 = vmatpush1.bf16.msra.mxu0 0
    %2597 = vmatprep.subr.bf16.mxu0 0
    %2598 = vmatpush1.bf16.msra.mxu0 0
    %2599 = vmatprep.subr.bf16.mxu0 0
    %2600 = vmatpush1.bf16.msra.mxu0 0
    %2601 = vmatprep.subr.bf16.mxu0 0
    %2602 = vmatpush1.bf16.msra.mxu0 0
    %2603 = vmatprep.subr.bf16.mxu0 0
    %2604 = vmatpush1.bf16.msra.mxu0 0
    %2605 = vmatprep.subr.bf16.mxu0 0
    %2606 = vmatpush1.bf16.msra.mxu0 0
    %2607 = vmatprep.subr.bf16.mxu0 0
    %2608 = vmatpush1.bf16.msra.mxu0 0
    %2609 = vmatprep.subr.bf16.mxu0 0
    %2610 = vmatpush1.bf16.msra.mxu0 0
    %2611 = vmatprep.subr.bf16.mxu0 0
    %2612 = vmatpush1.bf16.msra.mxu0 0
    %2613 = vmatprep.subr.bf16.mxu0 0
    %2614 = vmatpush1.bf16.msra.mxu0 0
    %2615 = vmatprep.subr.bf16.mxu0 0
    %2616 = vmatpush1.bf16.msra.mxu0 0
    %2617 = vmatprep.subr.bf16.mxu0 0
    %2618 = vmatpush1.bf16.msra.mxu0 0
    %2619 = vmatprep.mubr.bf16.mxu0 0
    %2620 = vmatmul.mubr.bf16.gmra.mrb[0].mxu0 %v2582
    %v2621 = vpop.f32.mrb[0].mxu0
    %v2622 = vadd.f32 0.0, %v2621
    %v2623 = vpop.f32.mrb[0].mxu0
    %v2624 = vpop.f32.mrb[0].mxu0
    %v2625 = vpop.f32.mrb[0].mxu0
    %2626 = vdwg.mxu0
    %v2628 = vsel %vm1437, %v2349, 0
    %v2631 = vsel %vm1537, %v1925, 0
    %2633 = vmatprep.subr.bf16.mxu0 0
    %2634 = vmatpush1.bf16.msra.mxu0 %v2631
    %2635 = vmatprep.subr.bf16.mxu0 0
    %2636 = vmatpush1.bf16.msra.mxu0 0
    %2637 = vmatprep.subr.bf16.mxu0 0
    %2638 = vmatpush1.bf16.msra.mxu0 0
    %2639 = vmatprep.subr.bf16.mxu0 0
    %2640 = vmatpush1.bf16.msra.mxu0 0
    %2641 = vmatprep.subr.bf16.mxu0 0
    %2642 = vmatpush1.bf16.msra.mxu0 0
    %2643 = vmatprep.subr.bf16.mxu0 0
    %2644 = vmatpush1.bf16.msra.mxu0 0
    %2645 = vmatprep.subr.bf16.mxu0 0
    %2646 = vmatpush1.bf16.msra.mxu0 0
    %2647 = vmatprep.subr.bf16.mxu0 0
    %2648 = vmatpush1.bf16.msra.mxu0 0
    %2649 = vmatprep.subr.bf16.mxu0 0
    %2650 = vmatpush1.bf16.msra.mxu0 0
    %2651 = vmatprep.subr.bf16.mxu0 0
    %2652 = vmatpush1.bf16.msra.mxu0 0
    %2653 = vmatprep.subr.bf16.mxu0 0
    %2654 = vmatpush1.bf16.msra.mxu0 0
    %2655 = vmatprep.subr.bf16.mxu0 0
    %2656 = vmatpush1.bf16.msra.mxu0 0
    %2657 = vmatprep.subr.bf16.mxu0 0
    %2658 = vmatpush1.bf16.msra.mxu0 0
    %2659 = vmatprep.subr.bf16.mxu0 0
    %2660 = vmatpush1.bf16.msra.mxu0 0
    %2661 = vmatprep.subr.bf16.mxu0 0
    %2662 = vmatpush1.bf16.msra.mxu0 0
    %2663 = vmatprep.subr.bf16.mxu0 0
    %2664 = vmatpush1.bf16.msra.mxu0 0
    %2665 = vmatprep.mubr.bf16.mxu0 0
    %2666 = vmatmul.mubr.bf16.gmra.mrb[0].mxu0 %v2628
    %v2667 = vpop.f32.mrb[0].mxu0
    %v2668 = vadd.f32 0.0, %v2667
    %v2669 = vpop.f32.mrb[0].mxu0
    %v2670 = vpop.f32.mrb[0].mxu0
    %v2671 = vpop.f32.mrb[0].mxu0
    %2672 = vdwg.mxu0
    %v2674 = vsel %vm1437, %v2350, 0
    %v2677 = vsel %vm1537, %v1926, 0
    %2679 = vmatprep.subr.bf16.mxu0 0
    %2680 = vmatpush1.bf16.msra.mxu0 %v2677
    %2681 = vmatprep.subr.bf16.mxu0 0
    %2682 = vmatpush1.bf16.msra.mxu0 0
    %2683 = vmatprep.subr.bf16.mxu0 0
    %2684 = vmatpush1.bf16.msra.mxu0 0
    %2685 = vmatprep.subr.bf16.mxu0 0
    %2686 = vmatpush1.bf16.msra.mxu0 0
    %2687 = vmatprep.subr.bf16.mxu0 0
    %2688 = vmatpush1.bf16.msra.mxu0 0
    %2689 = vmatprep.subr.bf16.mxu0 0
    %2690 = vmatpush1.bf16.msra.mxu0 0
    %2691 = vmatprep.subr.bf16.mxu0 0
    %2692 = vmatpush1.bf16.msra.mxu0 0
    %2693 = vmatprep.subr.bf16.mxu0 0
    %2694 = vmatpush1.bf16.msra.mxu0 0
    %2695 = vmatprep.subr.bf16.mxu0 0
    %2696 = vmatpush1.bf16.msra.mxu0 0
    %2697 = vmatprep.subr.bf16.mxu0 0
    %2698 = vmatpush1.bf16.msra.mxu0 0
    %2699 = vmatprep.subr.bf16.mxu0 0
    %2700 = vmatpush1.bf16.msra.mxu0 0
    %2701 = vmatprep.subr.bf16.mxu0 0
    %2702 = vmatpush1.bf16.msra.mxu0 0
    %2703 = vmatprep.subr.bf16.mxu0 0
    %2704 = vmatpush1.bf16.msra.mxu0 0
    %2705 = vmatprep.subr.bf16.mxu0 0
    %2706 = vmatpush1.bf16.msra.mxu0 0
    %2707 = vmatprep.subr.bf16.mxu0 0
    %2708 = vmatpush1.bf16.msra.mxu0 0
    %2709 = vmatprep.subr.bf16.mxu0 0
    %2710 = vmatpush1.bf16.msra.mxu0 0
    %2711 = vmatprep.mubr.bf16.mxu0 0
    %2712 = vmatmul.mubr.bf16.gmra.mrb[0].mxu0 %v2674
    %v2713 = vpop.f32.mrb[0].mxu0
    %v2714 = vadd.f32 0.0, %v2713
    %v2715 = vpop.f32.mrb[0].mxu0
    %v2716 = vpop.f32.mrb[0].mxu0
    %v2717 = vpop.f32.mrb[0].mxu0
    %2718 = vdwg.mxu0
    %v2719 = vpack.c.bf16 %v1622, %v1576
    %v2720 = vpack.c.bf16 %v2438, %v2392
    %v2721 = vpack.c.bf16 %v1714, %v1668
    %v2722 = vpack.c.bf16 %v2530, %v2484
    %v2723 = vpack.c.bf16 %v1806, %v1760
    %v2724 = vpack.c.bf16 %v2622, %v2576
    %v2725 = vpack.c.bf16 %v1898, %v1852
    %v2726 = vpack.c.bf16 %v2714, %v2668
    %v2727 = vld [vmem:[%s7] sm:$0xff]
    %v2728 = vld [vmem:[%s7 + $0x8] sm:$0xff]
    %v2729 = vld [vmem:[%s7 + $0x10] sm:$0xff]
    %v2730 = vld [vmem:[%s7 + $0x18] sm:$0xff]
    %v2731 = vld [vmem:[%s7 + $0x20] sm:$0xff]
    %v2732 = vld [vmem:[%s7 + $0x28] sm:$0xff]
    %v2733 = vld [vmem:[%s7 + $0x30] sm:$0xff]
    %v2734 = vld [vmem:[%s7 + $0x38] sm:$0xff]
    %v2735 = vld [vmem:[%s7 + $0x40] sm:$0xff]
    %v2736 = vld [vmem:[%s7 + $0x48] sm:$0xff]
    %v2737 = vld [vmem:[%s7 + $0x50] sm:$0xff]
    %v2738 = vld [vmem:[%s7 + $0x58] sm:$0xff]
    %v2739 = vld [vmem:[%s7 + $0x60] sm:$0xff]
    %v2740 = vld [vmem:[%s7 + $0x68] sm:$0xff]
    %v2741 = vld [vmem:[%s7 + $0x70] sm:$0xff]
    %v2742 = vld [vmem:[%s7 + $0x78] sm:$0xff]
    %v2743 = vld [vmem:[%s7 + $0x80] sm:$0xff]
    %v2744 = vld [vmem:[%s7 + $0x88] sm:$0xff]
    %v2745 = vld [vmem:[%s7 + $0x90] sm:$0xff]
    %v2746 = vld [vmem:[%s7 + $0x98] sm:$0xff]
    %v2747 = vld [vmem:[%s7 + $0xa0] sm:$0xff]
    %v2748 = vld [vmem:[%s7 + $0xa8] sm:$0xff]
    %v2749 = vld [vmem:[%s7 + $0xb0] sm:$0xff]
    %v2750 = vld [vmem:[%s7 + $0xb8] sm:$0xff]
    %v2751 = vld [vmem:[%s7 + $0xc0] sm:$0xff]
    %v2752 = vld [vmem:[%s7 + $0xc8] sm:$0xff]
    %v2753 = vld [vmem:[%s7 + $0xd0] sm:$0xff]
    %v2754 = vld [vmem:[%s7 + $0xd8] sm:$0xff]
    %v2755 = vld [vmem:[%s7 + $0xe0] sm:$0xff]
    %v2756 = vld [vmem:[%s7 + $0xe8] sm:$0xff]
    %v2757 = vld [vmem:[%s7 + $0xf0] sm:$0xff]
    %v2758 = vld [vmem:[%s7 + $0xf8] sm:$0xff]
    %v2759 = vld [vmem:[%s8] sm:$0x3]
    %v2761 = vlaneseq
    %v2762 = vshrl.u32 %v2761, 7
    %v2763 = vsub.s32 0, %v2762
    %v2764 = vrot.slane %v2759, %v2763
    %v2765 = vlaneseq
    %v2766 = vshrl.u32 %v2765, 7
    %v2767 = vsub.s32 1, %v2766
    %v2768 = vrot.slane %v2759, %v2767
    %v2803 = vunpack.c.l.b16 %v2727
    %v2804 = vunpack.c.h.b16 %v2727
    %v2805 = vunpack.c.l.b16 %v2728
    %v2806 = vunpack.c.h.b16 %v2728
    %v2807 = vunpack.c.l.b16 %v2729
    %v2808 = vunpack.c.h.b16 %v2729
    %v2809 = vunpack.c.l.b16 %v2730
    %v2810 = vunpack.c.h.b16 %v2730
    %v2811 = vunpack.c.l.b16 %v2731
    %v2812 = vunpack.c.h.b16 %v2731
    %v2813 = vunpack.c.l.b16 %v2732
    %v2814 = vunpack.c.h.b16 %v2732
    %v2815 = vunpack.c.l.b16 %v2733
    %v2816 = vunpack.c.h.b16 %v2733
    %v2817 = vunpack.c.l.b16 %v2734
    %v2818 = vunpack.c.h.b16 %v2734
    %v2819 = vunpack.c.l.b16 %v2735
    %v2820 = vunpack.c.h.b16 %v2735
    %v2821 = vunpack.c.l.b16 %v2736
    %v2822 = vunpack.c.h.b16 %v2736
    %v2823 = vunpack.c.l.b16 %v2737
    %v2824 = vunpack.c.h.b16 %v2737
    %v2825 = vunpack.c.l.b16 %v2738
    %v2826 = vunpack.c.h.b16 %v2738
    %v2827 = vunpack.c.l.b16 %v2739
    %v2828 = vunpack.c.h.b16 %v2739
    %v2829 = vunpack.c.l.b16 %v2740
    %v2830 = vunpack.c.h.b16 %v2740
    %v2831 = vunpack.c.l.b16 %v2741
    %v2832 = vunpack.c.h.b16 %v2741
    %v2833 = vunpack.c.l.b16 %v2742
    %v2834 = vunpack.c.h.b16 %v2742
    %v2835 = vunpack.c.l.b16 %v2743
    %v2836 = vunpack.c.h.b16 %v2743
    %v2837 = vunpack.c.l.b16 %v2744
    %v2838 = vunpack.c.h.b16 %v2744
    %v2839 = vunpack.c.l.b16 %v2745
    %v2840 = vunpack.c.h.b16 %v2745
    %v2841 = vunpack.c.l.b16 %v2746
    %v2842 = vunpack.c.h.b16 %v2746
    %v2843 = vunpack.c.l.b16 %v2747
    %v2844 = vunpack.c.h.b16 %v2747
    %v2845 = vunpack.c.l.b16 %v2748
    %v2846 = vunpack.c.h.b16 %v2748
    %v2847 = vunpack.c.l.b16 %v2749
    %v2848 = vunpack.c.h.b16 %v2749
    %v2849 = vunpack.c.l.b16 %v2750
    %v2850 = vunpack.c.h.b16 %v2750
    %v2851 = vunpack.c.l.b16 %v2751
    %v2852 = vunpack.c.h.b16 %v2751
    %v2853 = vunpack.c.l.b16 %v2752
    %v2854 = vunpack.c.h.b16 %v2752
    %v2855 = vunpack.c.l.b16 %v2753
    %v2856 = vunpack.c.h.b16 %v2753
    %v2857 = vunpack.c.l.b16 %v2754
    %v2858 = vunpack.c.h.b16 %v2754
    %v2859 = vunpack.c.l.b16 %v2755
    %v2860 = vunpack.c.h.b16 %v2755
    %v2861 = vunpack.c.l.b16 %v2756
    %v2862 = vunpack.c.h.b16 %v2756
    %v2863 = vunpack.c.l.b16 %v2757
    %v2864 = vunpack.c.h.b16 %v2757
    %v2865 = vunpack.c.l.b16 %v2758
    %v2866 = vunpack.c.h.b16 %v2758
    %v2867 = vpack.c.b16 %v2805, %v2803
    %v2868 = vpack.c.b16 %v2806, %v2804
    %v2869 = vpack.c.b16 %v2809, %v2807
    %v2870 = vpack.c.b16 %v2810, %v2808
    %v2871 = vpack.c.b16 %v2813, %v2811
    %v2872 = vpack.c.b16 %v2814, %v2812
    %v2873 = vpack.c.b16 %v2817, %v2815
    %v2874 = vpack.c.b16 %v2818, %v2816
    %v2875 = vpack.c.b16 %v2821, %v2819
    %v2876 = vpack.c.b16 %v2822, %v2820
    %v2877 = vpack.c.b16 %v2825, %v2823
    %v2878 = vpack.c.b16 %v2826, %v2824
    %v2879 = vpack.c.b16 %v2829, %v2827
    %v2880 = vpack.c.b16 %v2830, %v2828
    %v2881 = vpack.c.b16 %v2833, %v2831
    %v2882 = vpack.c.b16 %v2834, %v2832
    %v2883 = vpack.c.b16 %v2837, %v2835
    %v2884 = vpack.c.b16 %v2838, %v2836
    %v2885 = vpack.c.b16 %v2841, %v2839
    %v2886 = vpack.c.b16 %v2842, %v2840
    %v2887 = vpack.c.b16 %v2845, %v2843
    %v2888 = vpack.c.b16 %v2846, %v2844
    %v2889 = vpack.c.b16 %v2849, %v2847
    %v2890 = vpack.c.b16 %v2850, %v2848
    %v2891 = vpack.c.b16 %v2853, %v2851
    %v2892 = vpack.c.b16 %v2854, %v2852
    %v2893 = vpack.c.b16 %v2857, %v2855
    %v2894 = vpack.c.b16 %v2858, %v2856
    %v2895 = vpack.c.b16 %v2861, %v2859
    %v2896 = vpack.c.b16 %v2862, %v2860
    %v2897 = vpack.c.b16 %v2865, %v2863
    %v2898 = vpack.c.b16 %v2866, %v2864
    %2931 = vmatprep.subr.bf16.mxu0 %v2868
    %2932 = vmatpush1.bf16.msra.mxu0 %v2867
    %2933 = vmatprep.subr.bf16.mxu0 %v2870
    %2934 = vmatpush1.bf16.msra.mxu0 %v2869
    %2935 = vmatprep.subr.bf16.mxu0 %v2872
    %2936 = vmatpush1.bf16.msra.mxu0 %v2871
    %2937 = vmatprep.subr.bf16.mxu0 %v2874
    %2938 = vmatpush1.bf16.msra.mxu0 %v2873
    %2939 = vmatprep.subr.bf16.mxu0 %v2876
    %2940 = vmatpush1.bf16.msra.mxu0 %v2875
    %2941 = vmatprep.subr.bf16.mxu0 %v2878
    %2942 = vmatpush1.bf16.msra.mxu0 %v2877
    %2943 = vmatprep.subr.bf16.mxu0 %v2880
    %2944 = vmatpush1.bf16.msra.mxu0 %v2879
    %2945 = vmatprep.subr.bf16.mxu0 %v2882
    %2946 = vmatpush1.bf16.msra.mxu0 %v2881
    %2947 = vmatprep.subr.bf16.mxu0 %v2884
    %2948 = vmatpush1.bf16.msra.mxu0 %v2883
    %2949 = vmatprep.subr.bf16.mxu0 %v2886
    %2950 = vmatpush1.bf16.msra.mxu0 %v2885
    %2951 = vmatprep.subr.bf16.mxu0 %v2888
    %2952 = vmatpush1.bf16.msra.mxu0 %v2887
    %2953 = vmatprep.subr.bf16.mxu0 %v2890
    %2954 = vmatpush1.bf16.msra.mxu0 %v2889
    %2955 = vmatprep.subr.bf16.mxu0 %v2892
    %2956 = vmatpush1.bf16.msra.mxu0 %v2891
    %2957 = vmatprep.subr.bf16.mxu0 %v2894
    %2958 = vmatpush1.bf16.msra.mxu0 %v2893
    %2959 = vmatprep.subr.bf16.mxu0 %v2896
    %2960 = vmatpush1.bf16.msra.mxu0 %v2895
    %2961 = vmatprep.subr.bf16.mxu0 %v2898
    %2962 = vmatpush1.bf16.msra.mxu0 %v2897
    %2963 = vmatprep.mubr.bf16.mxu0 %v2720
    %2964 = vmatmul.mubr.bf16.gmra.mrb[0].mxu0 %v2719
    %v2965 = vpop.f32.mrb[0].mxu0
    %v2966 = vadd.f32 %v2764, %v2965
    %v2967 = vpop.f32.mrb[0].mxu0
    %v2968 = vadd.f32 %v2768, %v2967
    %v2969 = vpop.f32.mrb[0].mxu0
    %v2970 = vadd.f32 %v2764, %v2969
    %v2971 = vpop.f32.mrb[0].mxu0
    %v2972 = vadd.f32 %v2768, %v2971
    %2973 = vmatprep.mubr.bf16.mxu0 %v2722
    %2974 = vmatmul.mubr.bf16.gmra.mrb[0].mxu0 %v2721
    %v2975 = vpop.f32.mrb[0].mxu0
    %v2976 = vadd.f32 %v2764, %v2975
    %v2977 = vpop.f32.mrb[0].mxu0
    %v2978 = vadd.f32 %v2768, %v2977
    %v2979 = vpop.f32.mrb[0].mxu0
    %v2980 = vadd.f32 %v2764, %v2979
    %v2981 = vpop.f32.mrb[0].mxu0
    %v2982 = vadd.f32 %v2768, %v2981
    %2983 = vmatprep.mubr.bf16.mxu0 %v2724
    %2984 = vmatmul.mubr.bf16.gmra.mrb[0].mxu0 %v2723
    %v2985 = vpop.f32.mrb[0].mxu0
    %v2986 = vadd.f32 %v2764, %v2985
    %v2987 = vpop.f32.mrb[0].mxu0
    %v2988 = vadd.f32 %v2768, %v2987
    %v2989 = vpop.f32.mrb[0].mxu0
    %v2990 = vadd.f32 %v2764, %v2989
    %v2991 = vpop.f32.mrb[0].mxu0
    %v2992 = vadd.f32 %v2768, %v2991
    %2993 = vmatprep.mubr.bf16.mxu0 %v2726
    %2994 = vmatmul.mubr.bf16.gmra.mrb[0].mxu0 %v2725
    %v2995 = vpop.f32.mrb[0].mxu0
    %v2996 = vadd.f32 %v2764, %v2995
    %v2997 = vpop.f32.mrb[0].mxu0
    %v2998 = vadd.f32 %v2768, %v2997
    %v2999 = vpop.f32.mrb[0].mxu0
    %v3000 = vadd.f32 %v2764, %v2999
    %v3001 = vpop.f32.mrb[0].mxu0
    %v3002 = vadd.f32 %v2768, %v3001
    %3003 = vdwg.mxu0
    %v3004 = vadd.f32 %v212, %v2966
    %v3005 = vadd.f32 %v214, %v2968
    %v3006 = vadd.f32 %v216, %v2970
    %v3007 = vadd.f32 %v218, %v2972
    %v3008 = vadd.f32 %v222, %v2976
    %v3009 = vadd.f32 %v224, %v2978
    %v3010 = vadd.f32 %v226, %v2980
    %v3011 = vadd.f32 %v228, %v2982
    %v3012 = vadd.f32 %v232, %v2986
    %v3013 = vadd.f32 %v234, %v2988
    %v3014 = vadd.f32 %v236, %v2990
    %v3015 = vadd.f32 %v238, %v2992
    %v3016 = vadd.f32 %v242, %v2996
    %v3017 = vadd.f32 %v244, %v2998
    %v3018 = vadd.f32 %v246, %v3000
    %v3019 = vadd.f32 %v248, %v3002
    %v3020 = vld [vmem:[%s9] sm:$0x3]
    %v3021 = vld [vmem:[%s10] sm:$0x3]
    %v3022 = vadd.f32 %v3004, %v3005
    %3023 = vadd.xlane.f32.xlu0 %v3022
    %v3024 = vpop.xlane.xlu0 %3023
    %v3025 = vadd.f32 %v3006, %v3007
    %3026 = vadd.xlane.f32.xlu0 %v3025
    %v3027 = vpop.xlane.xlu0 %3026
    %v3028 = vadd.f32 %v3008, %v3009
    %3029 = vadd.xlane.f32.xlu0 %v3028
    %v3030 = vpop.xlane.xlu0 %3029
    %v3031 = vadd.f32 %v3010, %v3011
    %3032 = vadd.xlane.f32.xlu0 %v3031
    %v3033 = vpop.xlane.xlu0 %3032
    %v3034 = vadd.f32 %v3012, %v3013
    %3035 = vadd.xlane.f32.xlu0 %v3034
    %v3036 = vpop.xlane.xlu0 %3035
    %v3037 = vadd.f32 %v3014, %v3015
    %3038 = vadd.xlane.f32.xlu0 %v3037
    %v3039 = vpop.xlane.xlu0 %3038
    %v3040 = vadd.f32 %v3016, %v3017
    %3041 = vadd.xlane.f32.xlu0 %v3040
    %v3042 = vpop.xlane.xlu0 %3041
    %v3043 = vadd.f32 %v3018, %v3019
    %3044 = vadd.xlane.f32.xlu0 %v3043
    %v3045 = vpop.xlane.xlu0 %3044
    %v3046 = vrcp.pop 256.0
    %v3047 = vmul.f32 %v3024, %v3046
    %v3048 = vmul.f32 %v3027, %v3046
    %v3049 = vmul.f32 %v3030, %v3046
    %v3050 = vmul.f32 %v3033, %v3046
    %v3051 = vmul.f32 %v3036, %v3046
    %v3052 = vmul.f32 %v3039, %v3046
    %v3053 = vmul.f32 %v3042, %v3046
    %v3054 = vmul.f32 %v3045, %v3046
    %v3055 = vsub.f32 %v3004, %v3047
    %v3056 = vsub.f32 %v3005, %v3047
    %v3057 = vsub.f32 %v3006, %v3048
    %v3058 = vsub.f32 %v3007, %v3048
    %v3059 = vsub.f32 %v3008, %v3049
    %v3060 = vsub.f32 %v3009, %v3049
    %v3061 = vsub.f32 %v3010, %v3050
    %v3062 = vsub.f32 %v3011, %v3050
    %v3063 = vsub.f32 %v3012, %v3051
    %v3064 = vsub.f32 %v3013, %v3051
    %v3065 = vsub.f32 %v3014, %v3052
    %v3066 = vsub.f32 %v3015, %v3052
    %v3067 = vsub.f32 %v3016, %v3053
    %v3068 = vsub.f32 %v3017, %v3053
    %v3069 = vsub.f32 %v3018, %v3054
    %v3070 = vsub.f32 %v3019, %v3054
    %v3071 = vmul.f32 %v3055, %v3055
    %v3072 = vmul.f32 %v3056, %v3056
    %v3073 = vmul.f32 %v3057, %v3057
    %v3074 = vmul.f32 %v3058, %v3058
    %v3075 = vmul.f32 %v3059, %v3059
    %v3076 = vmul.f32 %v3060, %v3060
    %v3077 = vmul.f32 %v3061, %v3061
    %v3078 = vmul.f32 %v3062, %v3062
    %v3079 = vmul.f32 %v3063, %v3063
    %v3080 = vmul.f32 %v3064, %v3064
    %v3081 = vmul.f32 %v3065, %v3065
    %v3082 = vmul.f32 %v3066, %v3066
    %v3083 = vmul.f32 %v3067, %v3067
    %v3084 = vmul.f32 %v3068, %v3068
    %v3085 = vmul.f32 %v3069, %v3069
    %v3086 = vmul.f32 %v3070, %v3070
    %v3087 = vadd.f32 %v3071, %v3072
    %3088 = vadd.xlane.f32.xlu0 %v3087
    %v3089 = vpop.xlane.xlu0 %3088
    %v3090 = vadd.f32 %v3073, %v3074
    %3091 = vadd.xlane.f32.xlu0 %v3090
    %v3092 = vpop.xlane.xlu0 %3091
    %v3093 = vadd.f32 %v3075, %v3076
    %3094 = vadd.xlane.f32.xlu0 %v3093
    %v3095 = vpop.xlane.xlu0 %3094
    %v3096 = vadd.f32 %v3077, %v3078
    %3097 = vadd.xlane.f32.xlu0 %v3096
    %v3098 = vpop.xlane.xlu0 %3097
    %v3099 = vadd.f32 %v3079, %v3080
    %3100 = vadd.xlane.f32.xlu0 %v3099
    %v3101 = vpop.xlane.xlu0 %3100
    %v3102 = vadd.f32 %v3081, %v3082
    %3103 = vadd.xlane.f32.xlu0 %v3102
    %v3104 = vpop.xlane.xlu0 %3103
    %v3105 = vadd.f32 %v3083, %v3084
    %3106 = vadd.xlane.f32.xlu0 %v3105
    %v3107 = vpop.xlane.xlu0 %3106
    %v3108 = vadd.f32 %v3085, %v3086
    %3109 = vadd.xlane.f32.xlu0 %v3108
    %v3110 = vpop.xlane.xlu0 %3109
    %v3111 = vmul.f32 %v3089, %v3046
    %v3112 = vmul.f32 %v3092, %v3046
    %v3113 = vmul.f32 %v3095, %v3046
    %v3114 = vmul.f32 %v3098, %v3046
    %v3115 = vmul.f32 %v3101, %v3046
    %v3116 = vmul.f32 %v3104, %v3046
    %v3117 = vmul.f32 %v3107, %v3046
    %v3118 = vmul.f32 %v3110, %v3046
    %v3119 = vadd.f32 %v3111, 1e-05
    %v3120 = vadd.f32 %v3112, 1e-05
    %v3121 = vadd.f32 %v3113, 1e-05
    %v3122 = vadd.f32 %v3114, 1e-05
    %v3123 = vadd.f32 %v3115, 1e-05
    %v3124 = vadd.f32 %v3116, 1e-05
    %v3125 = vadd.f32 %v3117, 1e-05
    %v3126 = vadd.f32 %v3118, 1e-05
    %v3127 = vrsqrt.pop %v3119
    %v3128 = vrsqrt.pop %v3120
    %v3129 = vrsqrt.pop %v3121
    %v3130 = vrsqrt.pop %v3122
    %v3131 = vrsqrt.pop %v3123
    %v3132 = vrsqrt.pop %v3124
    %v3133 = vrsqrt.pop %v3125
    %v3134 = vrsqrt.pop %v3126
    %v3135 = vmul.f32 %v3055, %v3127
    %v3136 = vmul.f32 %v3056, %v3127
    %v3137 = vmul.f32 %v3057, %v3128
    %v3138 = vmul.f32 %v3058, %v3128
    %v3139 = vmul.f32 %v3059, %v3129
    %v3140 = vmul.f32 %v3060, %v3129
    %v3141 = vmul.f32 %v3061, %v3130
    %v3142 = vmul.f32 %v3062, %v3130
    %v3143 = vmul.f32 %v3063, %v3131
    %v3144 = vmul.f32 %v3064, %v3131
    %v3145 = vmul.f32 %v3065, %v3132
    %v3146 = vmul.f32 %v3066, %v3132
    %v3147 = vmul.f32 %v3067, %v3133
    %v3148 = vmul.f32 %v3068, %v3133
    %v3149 = vmul.f32 %v3069, %v3134
    %v3150 = vmul.f32 %v3070, %v3134
    %v3152 = vlaneseq
    %v3153 = vshrl.u32 %v3152, 7
    %v3154 = vsub.s32 0, %v3153
    %v3155 = vrot.slane %v3020, %v3154
    %v3156 = vlaneseq
    %v3157 = vshrl.u32 %v3156, 7
    %v3158 = vsub.s32 1, %v3157
    %v3159 = vrot.slane %v3020, %v3158
    %v3162 = vmul.f32 %v3135, %v3155
    %v3163 = vmul.f32 %v3136, %v3159
    %v3164 = vmul.f32 %v3137, %v3155
    %v3165 = vmul.f32 %v3138, %v3159
    %v3166 = vmul.f32 %v3139, %v3155
    %v3167 = vmul.f32 %v3140, %v3159
    %v3168 = vmul.f32 %v3141, %v3155
    %v3169 = vmul.f32 %v3142, %v3159
    %v3170 = vmul.f32 %v3143, %v3155
    %v3171 = vmul.f32 %v3144, %v3159
    %v3172 = vmul.f32 %v3145, %v3155
    %v3173 = vmul.f32 %v3146, %v3159
    %v3174 = vmul.f32 %v3147, %v3155
    %v3175 = vmul.f32 %v3148, %v3159
    %v3176 = vmul.f32 %v3149, %v3155
    %v3177 = vmul.f32 %v3150, %v3159
    %v3179 = vlaneseq
    %v3180 = vshrl.u32 %v3179, 7
    %v3181 = vsub.s32 0, %v3180
    %v3182 = vrot.slane %v3021, %v3181
    %v3183 = vlaneseq
    %v3184 = vshrl.u32 %v3183, 7
    %v3185 = vsub.s32 1, %v3184
    %v3186 = vrot.slane %v3021, %v3185
    %v3189 = vadd.f32 %v3162, %v3182
    %v3190 = vadd.f32 %v3163, %v3186
    %v3191 = vadd.f32 %v3164, %v3182
    %v3192 = vadd.f32 %v3165, %v3186
    %v3193 = vadd.f32 %v3166, %v3182
    %v3194 = vadd.f32 %v3167, %v3186
    %v3195 = vadd.f32 %v3168, %v3182
    %v3196 = vadd.f32 %v3169, %v3186
    %v3197 = vadd.f32 %v3170, %v3182
    %v3198 = vadd.f32 %v3171, %v3186
    %v3199 = vadd.f32 %v3172, %v3182
    %v3200 = vadd.f32 %v3173, %v3186
    %v3201 = vadd.f32 %v3174, %v3182
    %v3202 = vadd.f32 %v3175, %v3186
    %v3203 = vadd.f32 %v3176, %v3182
    %v3204 = vadd.f32 %v3177, %v3186
    %v3205 = vpack.c.bf16 %v3191, %v3189
    %v3206 = vpack.c.bf16 %v3192, %v3190
    %v3207 = vpack.c.bf16 %v3195, %v3193
    %v3208 = vpack.c.bf16 %v3196, %v3194
    %v3209 = vpack.c.bf16 %v3199, %v3197
    %v3210 = vpack.c.bf16 %v3200, %v3198
    %v3211 = vpack.c.bf16 %v3203, %v3201
    %v3212 = vpack.c.bf16 %v3204, %v3202
    %v3213 = vld [vmem:[#allocation5] sm:$0xff]
    %v3214 = vld [vmem:[#allocation5 + $0x8] sm:$0xff]
    %v3215 = vld [vmem:[#allocation5 + $0x10] sm:$0xff]
    %v3216 = vld [vmem:[#allocation5 + $0x18] sm:$0xff]
    %v3217 = vld [vmem:[#allocation5 + $0x20] sm:$0xff]
    %v3218 = vld [vmem:[#allocation5 + $0x28] sm:$0xff]
    %v3219 = vld [vmem:[#allocation5 + $0x30] sm:$0xff]
    %v3220 = vld [vmem:[#allocation5 + $0x38] sm:$0xff]
    %v3221 = vld [vmem:[#allocation5 + $0x40] sm:$0xff]
    %v3222 = vld [vmem:[#allocation5 + $0x48] sm:$0xff]
    %v3223 = vld [vmem:[#allocation5 + $0x50] sm:$0xff]
    %v3224 = vld [vmem:[#allocation5 + $0x58] sm:$0xff]
    %v3225 = vld [vmem:[#allocation5 + $0x60] sm:$0xff]
    %v3226 = vld [vmem:[#allocation5 + $0x68] sm:$0xff]
    %v3227 = vld [vmem:[#allocation5 + $0x70] sm:$0xff]
    %v3228 = vld [vmem:[#allocation5 + $0x78] sm:$0xff]
    %v3229 = vld [vmem:[#allocation5 + $0x80] sm:$0xff]
    %v3230 = vld [vmem:[#allocation5 + $0x88] sm:$0xff]
    %v3231 = vld [vmem:[#allocation5 + $0x90] sm:$0xff]
    %v3232 = vld [vmem:[#allocation5 + $0x98] sm:$0xff]
    %v3233 = vld [vmem:[#allocation5 + $0xa0] sm:$0xff]
    %v3234 = vld [vmem:[#allocation5 + $0xa8] sm:$0xff]
    %v3235 = vld [vmem:[#allocation5 + $0xb0] sm:$0xff]
    %v3236 = vld [vmem:[#allocation5 + $0xb8] sm:$0xff]
    %v3237 = vld [vmem:[#allocation5 + $0xc0] sm:$0xff]
    %v3238 = vld [vmem:[#allocation5 + $0xc8] sm:$0xff]
    %v3239 = vld [vmem:[#allocation5 + $0xd0] sm:$0xff]
    %v3240 = vld [vmem:[#allocation5 + $0xd8] sm:$0xff]
    %v3241 = vld [vmem:[#allocation5 + $0xe0] sm:$0xff]
    %v3242 = vld [vmem:[#allocation5 + $0xe8] sm:$0xff]
    %v3243 = vld [vmem:[#allocation5 + $0xf0] sm:$0xff]
    %v3244 = vld [vmem:[#allocation5 + $0xf8] sm:$0xff]
    %v3245 = vld [vmem:[#allocation5 + $0x100] sm:$0xff]
    %v3246 = vld [vmem:[#allocation5 + $0x108] sm:$0xff]
    %v3247 = vld [vmem:[#allocation5 + $0x110] sm:$0xff]
    %v3248 = vld [vmem:[#allocation5 + $0x118] sm:$0xff]
    %v3249 = vld [vmem:[#allocation5 + $0x120] sm:$0xff]
    %v3250 = vld [vmem:[#allocation5 + $0x128] sm:$0xff]
    %v3251 = vld [vmem:[#allocation5 + $0x130] sm:$0xff]
    %v3252 = vld [vmem:[#allocation5 + $0x138] sm:$0xff]
    %v3253 = vld [vmem:[#allocation5 + $0x140] sm:$0xff]
    %v3254 = vld [vmem:[#allocation5 + $0x148] sm:$0xff]
    %v3255 = vld [vmem:[#allocation5 + $0x150] sm:$0xff]
    %v3256 = vld [vmem:[#allocation5 + $0x158] sm:$0xff]
    %v3257 = vld [vmem:[#allocation5 + $0x160] sm:$0xff]
    %v3258 = vld [vmem:[#allocation5 + $0x168] sm:$0xff]
    %v3259 = vld [vmem:[#allocation5 + $0x170] sm:$0xff]
    %v3260 = vld [vmem:[#allocation5 + $0x178] sm:$0xff]
    %v3261 = vld [vmem:[#allocation5 + $0x180] sm:$0xff]
    %v3262 = vld [vmem:[#allocation5 + $0x188] sm:$0xff]
    %v3263 = vld [vmem:[#allocation5 + $0x190] sm:$0xff]
    %v3264 = vld [vmem:[#allocation5 + $0x198] sm:$0xff]
    %v3265 = vld [vmem:[#allocation5 + $0x1a0] sm:$0xff]
    %v3266 = vld [vmem:[#allocation5 + $0x1a8] sm:$0xff]
    %v3267 = vld [vmem:[#allocation5 + $0x1b0] sm:$0xff]
    %v3268 = vld [vmem:[#allocation5 + $0x1b8] sm:$0xff]
    %v3269 = vld [vmem:[#allocation5 + $0x1c0] sm:$0xff]
    %v3270 = vld [vmem:[#allocation5 + $0x1c8] sm:$0xff]
    %v3271 = vld [vmem:[#allocation5 + $0x1d0] sm:$0xff]
    %v3272 = vld [vmem:[#allocation5 + $0x1d8] sm:$0xff]
    %v3273 = vld [vmem:[#allocation5 + $0x1e0] sm:$0xff]
    %v3274 = vld [vmem:[#allocation5 + $0x1e8] sm:$0xff]
    %v3275 = vld [vmem:[#allocation5 + $0x1f0] sm:$0xff]
    %v3276 = vld [vmem:[#allocation5 + $0x1f8] sm:$0xff]
    %v3277 = vld [vmem:[%s12] sm:$0xf]
    %v3279 = vlaneseq
    %v3280 = vshrl.u32 %v3279, 7
    %v3281 = vsub.s32 0, %v3280
    %v3282 = vrot.slane %v3277, %v3281
    %v3283 = vlaneseq
    %v3284 = vshrl.u32 %v3283, 7
    %v3285 = vsub.s32 1, %v3284
    %v3286 = vrot.slane %v3277, %v3285
    %v3287 = vlaneseq
    %v3288 = vshrl.u32 %v3287, 7
    %v3289 = vsub.s32 2, %v3288
    %v3290 = vrot.slane %v3277, %v3289
    %v3291 = vlaneseq
    %v3292 = vshrl.u32 %v3291, 7
    %v3293 = vsub.s32 3, %v3292
    %v3294 = vrot.slane %v3277, %v3293
    %v3363 = vunpack.c.l.b16 %v3213
    %v3364 = vunpack.c.h.b16 %v3213
    %v3365 = vunpack.c.l.b16 %v3214
    %v3366 = vunpack.c.h.b16 %v3214
    %v3367 = vunpack.c.l.b16 %v3215
    %v3368 = vunpack.c.h.b16 %v3215
    %v3369 = vunpack.c.l.b16 %v3216
    %v3370 = vunpack.c.h.b16 %v3216
    %v3371 = vunpack.c.l.b16 %v3217
    %v3372 = vunpack.c.h.b16 %v3217
    %v3373 = vunpack.c.l.b16 %v3218
    %v3374 = vunpack.c.h.b16 %v3218
    %v3375 = vunpack.c.l.b16 %v3219
    %v3376 = vunpack.c.h.b16 %v3219
    %v3377 = vunpack.c.l.b16 %v3220
    %v3378 = vunpack.c.h.b16 %v3220
    %v3379 = vunpack.c.l.b16 %v3221
    %v3380 = vunpack.c.h.b16 %v3221
    %v3381 = vunpack.c.l.b16 %v3222
    %v3382 = vunpack.c.h.b16 %v3222
    %v3383 = vunpack.c.l.b16 %v3223
    %v3384 = vunpack.c.h.b16 %v3223
    %v3385 = vunpack.c.l.b16 %v3224
    %v3386 = vunpack.c.h.b16 %v3224
    %v3387 = vunpack.c.l.b16 %v3225
    %v3388 = vunpack.c.h.b16 %v3225
    %v3389 = vunpack.c.l.b16 %v3226
    %v3390 = vunpack.c.h.b16 %v3226
    %v3391 = vunpack.c.l.b16 %v3227
    %v3392 = vunpack.c.h.b16 %v3227
    %v3393 = vunpack.c.l.b16 %v3228
    %v3394 = vunpack.c.h.b16 %v3228
    %v3395 = vunpack.c.l.b16 %v3229
    %v3396 = vunpack.c.h.b16 %v3229
    %v3397 = vunpack.c.l.b16 %v3230
    %v3398 = vunpack.c.h.b16 %v3230
    %v3399 = vunpack.c.l.b16 %v3231
    %v3400 = vunpack.c.h.b16 %v3231
    %v3401 = vunpack.c.l.b16 %v3232
    %v3402 = vunpack.c.h.b16 %v3232
    %v3403 = vunpack.c.l.b16 %v3233
    %v3404 = vunpack.c.h.b16 %v3233
    %v3405 = vunpack.c.l.b16 %v3234
    %v3406 = vunpack.c.h.b16 %v3234
    %v3407 = vunpack.c.l.b16 %v3235
    %v3408 = vunpack.c.h.b16 %v3235
    %v3409 = vunpack.c.l.b16 %v3236
    %v3410 = vunpack.c.h.b16 %v3236
    %v3411 = vunpack.c.l.b16 %v3237
    %v3412 = vunpack.c.h.b16 %v3237
    %v3413 = vunpack.c.l.b16 %v3238
    %v3414 = vunpack.c.h.b16 %v3238
    %v3415 = vunpack.c.l.b16 %v3239
    %v3416 = vunpack.c.h.b16 %v3239
    %v3417 = vunpack.c.l.b16 %v3240
    %v3418 = vunpack.c.h.b16 %v3240
    %v3419 = vunpack.c.l.b16 %v3241
    %v3420 = vunpack.c.h.b16 %v3241
    %v3421 = vunpack.c.l.b16 %v3242
    %v3422 = vunpack.c.h.b16 %v3242
    %v3423 = vunpack.c.l.b16 %v3243
    %v3424 = vunpack.c.h.b16 %v3243
    %v3425 = vunpack.c.l.b16 %v3244
    %v3426 = vunpack.c.h.b16 %v3244
    %v3427 = vunpack.c.l.b16 %v3245
    %v3428 = vunpack.c.h.b16 %v3245
    %v3429 = vunpack.c.l.b16 %v3246
    %v3430 = vunpack.c.h.b16 %v3246
    %v3431 = vunpack.c.l.b16 %v3247
    %v3432 = vunpack.c.h.b16 %v3247
    %v3433 = vunpack.c.l.b16 %v3248
    %v3434 = vunpack.c.h.b16 %v3248
    %v3435 = vunpack.c.l.b16 %v3249
    %v3436 = vunpack.c.h.b16 %v3249
    %v3437 = vunpack.c.l.b16 %v3250
    %v3438 = vunpack.c.h.b16 %v3250
    %v3439 = vunpack.c.l.b16 %v3251
    %v3440 = vunpack.c.h.b16 %v3251
    %v3441 = vunpack.c.l.b16 %v3252
    %v3442 = vunpack.c.h.b16 %v3252
    %v3443 = vunpack.c.l.b16 %v3253
    %v3444 = vunpack.c.h.b16 %v3253
    %v3445 = vunpack.c.l.b16 %v3254
    %v3446 = vunpack.c.h.b16 %v3254
    %v3447 = vunpack.c.l.b16 %v3255
    %v3448 = vunpack.c.h.b16 %v3255
    %v3449 = vunpack.c.l.b16 %v3256
    %v3450 = vunpack.c.h.b16 %v3256
    %v3451 = vunpack.c.l.b16 %v3257
    %v3452 = vunpack.c.h.b16 %v3257
    %v3453 = vunpack.c.l.b16 %v3258
    %v3454 = vunpack.c.h.b16 %v3258
    %v3455 = vunpack.c.l.b16 %v3259
    %v3456 = vunpack.c.h.b16 %v3259
    %v3457 = vunpack.c.l.b16 %v3260
    %v3458 = vunpack.c.h.b16 %v3260
    %v3459 = vunpack.c.l.b16 %v3261
    %v3460 = vunpack.c.h.b16 %v3261
    %v3461 = vunpack.c.l.b16 %v3262
    %v3462 = vunpack.c.h.b16 %v3262
    %v3463 = vunpack.c.l.b16 %v3263
    %v3464 = vunpack.c.h.b16 %v3263
    %v3465 = vunpack.c.l.b16 %v3264
    %v3466 = vunpack.c.h.b16 %v3264
    %v3467 = vunpack.c.l.b16 %v3265
    %v3468 = vunpack.c.h.b16 %v3265
    %v3469 = vunpack.c.l.b16 %v3266
    %v3470 = vunpack.c.h.b16 %v3266
    %v3471 = vunpack.c.l.b16 %v3267
    %v3472 = vunpack.c.h.b16 %v3267
    %v3473 = vunpack.c.l.b16 %v3268
    %v3474 = vunpack.c.h.b16 %v3268
    %v3475 = vunpack.c.l.b16 %v3269
    %v3476 = vunpack.c.h.b16 %v3269
    %v3477 = vunpack.c.l.b16 %v3270
    %v3478 = vunpack.c.h.b16 %v3270
    %v3479 = vunpack.c.l.b16 %v3271
    %v3480 = vunpack.c.h.b16 %v3271
    %v3481 = vunpack.c.l.b16 %v3272
    %v3482 = vunpack.c.h.b16 %v3272
    %v3483 = vunpack.c.l.b16 %v3273
    %v3484 = vunpack.c.h.b16 %v3273
    %v3485 = vunpack.c.l.b16 %v3274
    %v3486 = vunpack.c.h.b16 %v3274
    %v3487 = vunpack.c.l.b16 %v3275
    %v3488 = vunpack.c.h.b16 %v3275
    %v3489 = vunpack.c.l.b16 %v3276
    %v3490 = vunpack.c.h.b16 %v3276
    %v3491 = vpack.c.b16 %v3367, %v3363
    %v3492 = vpack.c.b16 %v3368, %v3364
    %v3493 = vpack.c.b16 %v3369, %v3365
    %v3494 = vpack.c.b16 %v3370, %v3366
    %v3495 = vpack.c.b16 %v3375, %v3371
    %v3496 = vpack.c.b16 %v3376, %v3372
    %v3497 = vpack.c.b16 %v3377, %v3373
    %v3498 = vpack.c.b16 %v3378, %v3374
    %v3499 = vpack.c.b16 %v3383, %v3379
    %v3500 = vpack.c.b16 %v3384, %v3380
    %v3501 = vpack.c.b16 %v3385, %v3381
    %v3502 = vpack.c.b16 %v3386, %v3382
    %v3503 = vpack.c.b16 %v3391, %v3387
    %v3504 = vpack.c.b16 %v3392, %v3388
    %v3505 = vpack.c.b16 %v3393, %v3389
    %v3506 = vpack.c.b16 %v3394, %v3390
    %v3507 = vpack.c.b16 %v3399, %v3395
    %v3508 = vpack.c.b16 %v3400, %v3396
    %v3509 = vpack.c.b16 %v3401, %v3397
    %v3510 = vpack.c.b16 %v3402, %v3398
    %v3511 = vpack.c.b16 %v3407, %v3403
    %v3512 = vpack.c.b16 %v3408, %v3404
    %v3513 = vpack.c.b16 %v3409, %v3405
    %v3514 = vpack.c.b16 %v3410, %v3406
    %v3515 = vpack.c.b16 %v3415, %v3411
    %v3516 = vpack.c.b16 %v3416, %v3412
    %v3517 = vpack.c.b16 %v3417, %v3413
    %v3518 = vpack.c.b16 %v3418, %v3414
    %v3519 = vpack.c.b16 %v3423, %v3419
    %v3520 = vpack.c.b16 %v3424, %v3420
    %v3521 = vpack.c.b16 %v3425, %v3421
    %v3522 = vpack.c.b16 %v3426, %v3422
    %v3523 = vpack.c.b16 %v3431, %v3427
    %v3524 = vpack.c.b16 %v3432, %v3428
    %v3525 = vpack.c.b16 %v3433, %v3429
    %v3526 = vpack.c.b16 %v3434, %v3430
    %v3527 = vpack.c.b16 %v3439, %v3435
    %v3528 = vpack.c.b16 %v3440, %v3436
    %v3529 = vpack.c.b16 %v3441, %v3437
    %v3530 = vpack.c.b16 %v3442, %v3438
    %v3531 = vpack.c.b16 %v3447, %v3443
    %v3532 = vpack.c.b16 %v3448, %v3444
    %v3533 = vpack.c.b16 %v3449, %v3445
    %v3534 = vpack.c.b16 %v3450, %v3446
    %v3535 = vpack.c.b16 %v3455, %v3451
    %v3536 = vpack.c.b16 %v3456, %v3452
    %v3537 = vpack.c.b16 %v3457, %v3453
    %v3538 = vpack.c.b16 %v3458, %v3454
    %v3539 = vpack.c.b16 %v3463, %v3459
    %v3540 = vpack.c.b16 %v3464, %v3460
    %v3541 = vpack.c.b16 %v3465, %v3461
    %v3542 = vpack.c.b16 %v3466, %v3462
    %v3543 = vpack.c.b16 %v3471, %v3467
    %v3544 = vpack.c.b16 %v3472, %v3468
    %v3545 = vpack.c.b16 %v3473, %v3469
    %v3546 = vpack.c.b16 %v3474, %v3470
    %v3547 = vpack.c.b16 %v3479, %v3475
    %v3548 = vpack.c.b16 %v3480, %v3476
    %v3549 = vpack.c.b16 %v3481, %v3477
    %v3550 = vpack.c.b16 %v3482, %v3478
    %v3551 = vpack.c.b16 %v3487, %v3483
    %v3552 = vpack.c.b16 %v3488, %v3484
    %v3553 = vpack.c.b16 %v3489, %v3485
    %v3554 = vpack.c.b16 %v3490, %v3486
    %3619 = vmatprep.subr.bf16.mxu0 %v3492
    %3620 = vmatpush1.bf16.msra.mxu0 %v3491
    %3621 = vmatprep.subr.bf16.mxu0 %v3496
    %3622 = vmatpush1.bf16.msra.mxu0 %v3495
    %3623 = vmatprep.subr.bf16.mxu0 %v3500
    %3624 = vmatpush1.bf16.msra.mxu0 %v3499
    %3625 = vmatprep.subr.bf16.mxu0 %v3504
    %3626 = vmatpush1.bf16.msra.mxu0 %v3503
    %3627 = vmatprep.subr.bf16.mxu0 %v3508
    %3628 = vmatpush1.bf16.msra.mxu0 %v3507
    %3629 = vmatprep.subr.bf16.mxu0 %v3512
    %3630 = vmatpush1.bf16.msra.mxu0 %v3511
    %3631 = vmatprep.subr.bf16.mxu0 %v3516
    %3632 = vmatpush1.bf16.msra.mxu0 %v3515
    %3633 = vmatprep.subr.bf16.mxu0 %v3520
    %3634 = vmatpush1.bf16.msra.mxu0 %v3519
    %3635 = vmatprep.subr.bf16.mxu0 %v3524
    %3636 = vmatpush1.bf16.msra.mxu0 %v3523
    %3637 = vmatprep.subr.bf16.mxu0 %v3528
    %3638 = vmatpush1.bf16.msra.mxu0 %v3527
    %3639 = vmatprep.subr.bf16.mxu0 %v3532
    %3640 = vmatpush1.bf16.msra.mxu0 %v3531
    %3641 = vmatprep.subr.bf16.mxu0 %v3536
    %3642 = vmatpush1.bf16.msra.mxu0 %v3535
    %3643 = vmatprep.subr.bf16.mxu0 %v3540
    %3644 = vmatpush1.bf16.msra.mxu0 %v3539
    %3645 = vmatprep.subr.bf16.mxu0 %v3544
    %3646 = vmatpush1.bf16.msra.mxu0 %v3543
    %3647 = vmatprep.subr.bf16.mxu0 %v3548
    %3648 = vmatpush1.bf16.msra.mxu0 %v3547
    %3649 = vmatprep.subr.bf16.mxu0 %v3552
    %3650 = vmatpush1.bf16.msra.mxu0 %v3551
    %3651 = vmatprep.mubr.bf16.mxu0 %v3206
    %3652 = vmatmul.mubr.bf16.gmra.mrb[0].mxu0 %v3205
    %v3653 = vpop.f32.mrb[0].mxu0
    %v3654 = vadd.f32 %v3282, %v3653
    %v3655 = vpop.f32.mrb[0].mxu0
    %v3656 = vadd.f32 %v3286, %v3655
    %v3657 = vpop.f32.mrb[0].mxu0
    %v3658 = vadd.f32 %v3282, %v3657
    %v3659 = vpop.f32.mrb[0].mxu0
    %v3660 = vadd.f32 %v3286, %v3659
    %3661 = vmatprep.mubr.bf16.mxu0 %v3208
    %3662 = vmatmul.mubr.bf16.gmra.mrb[0].mxu0 %v3207
    %v3663 = vpop.f32.mrb[0].mxu0
    %v3664 = vadd.f32 %v3282, %v3663
    %v3665 = vpop.f32.mrb[0].mxu0
    %v3666 = vadd.f32 %v3286, %v3665
    %v3667 = vpop.f32.mrb[0].mxu0
    %v3668 = vadd.f32 %v3282, %v3667
    %v3669 = vpop.f32.mrb[0].mxu0
    %v3670 = vadd.f32 %v3286, %v3669
    %3671 = vmatprep.mubr.bf16.mxu0 %v3210
    %3672 = vmatmul.mubr.bf16.gmra.mrb[0].mxu0 %v3209
    %v3673 = vpop.f32.mrb[0].mxu0
    %v3674 = vadd.f32 %v3282, %v3673
    %v3675 = vpop.f32.mrb[0].mxu0
    %v3676 = vadd.f32 %v3286, %v3675
    %v3677 = vpop.f32.mrb[0].mxu0
    %v3678 = vadd.f32 %v3282, %v3677
    %v3679 = vpop.f32.mrb[0].mxu0
    %v3680 = vadd.f32 %v3286, %v3679
    %3681 = vmatprep.mubr.bf16.mxu0 %v3212
    %3682 = vmatmul.mubr.bf16.gmra.mrb[0].mxu0 %v3211
    %v3683 = vpop.f32.mrb[0].mxu0
    %v3684 = vadd.f32 %v3282, %v3683
    %v3685 = vpop.f32.mrb[0].mxu0
    %v3686 = vadd.f32 %v3286, %v3685
    %v3687 = vpop.f32.mrb[0].mxu0
    %v3688 = vadd.f32 %v3282, %v3687
    %v3689 = vpop.f32.mrb[0].mxu0
    %v3690 = vadd.f32 %v3286, %v3689
    %3691 = vdwg.mxu0
    %3692 = vmatprep.subr.bf16.mxu0 %v3494
    %3693 = vmatpush1.bf16.msra.mxu0 %v3493
    %3694 = vmatprep.subr.bf16.mxu0 %v3498
    %3695 = vmatpush1.bf16.msra.mxu0 %v3497
    %3696 = vmatprep.subr.bf16.mxu0 %v3502
    %3697 = vmatpush1.bf16.msra.mxu0 %v3501
    %3698 = vmatprep.subr.bf16.mxu0 %v3506
    %3699 = vmatpush1.bf16.msra.mxu0 %v3505
    %3700 = vmatprep.subr.bf16.mxu0 %v3510
    %3701 = vmatpush1.bf16.msra.mxu0 %v3509
    %3702 = vmatprep.subr.bf16.mxu0 %v3514
    %3703 = vmatpush1.bf16.msra.mxu0 %v3513
    %3704 = vmatprep.subr.bf16.mxu0 %v3518
    %3705 = vmatpush1.bf16.msra.mxu0 %v3517
    %3706 = vmatprep.subr.bf16.mxu0 %v3522
    %3707 = vmatpush1.bf16.msra.mxu0 %v3521
    %3708 = vmatprep.subr.bf16.mxu0 %v3526
    %3709 = vmatpush1.bf16.msra.mxu0 %v3525
    %3710 = vmatprep.subr.bf16.mxu0 %v3530
    %3711 = vmatpush1.bf16.msra.mxu0 %v3529
    %3712 = vmatprep.subr.bf16.mxu0 %v3534
    %3713 = vmatpush1.bf16.msra.mxu0 %v3533
    %3714 = vmatprep.subr.bf16.mxu0 %v3538
    %3715 = vmatpush1.bf16.msra.mxu0 %v3537
    %3716 = vmatprep.subr.bf16.mxu0 %v3542
    %3717 = vmatpush1.bf16.msra.mxu0 %v3541
    %3718 = vmatprep.subr.bf16.mxu0 %v3546
    %3719 = vmatpush1.bf16.msra.mxu0 %v3545
    %3720 = vmatprep.subr.bf16.mxu0 %v3550
    %3721 = vmatpush1.bf16.msra.mxu0 %v3549
    %3722 = vmatprep.subr.bf16.mxu0 %v3554
    %3723 = vmatpush1.bf16.msra.mxu0 %v3553
    %3724 = vmatprep.mubr.bf16.mxu0 %v3206
    %3725 = vmatmul.mubr.bf16.gmra.mrb[0].mxu0 %v3205
    %v3726 = vpop.f32.mrb[0].mxu0
    %v3727 = vadd.f32 %v3290, %v3726
    %v3728 = vpop.f32.mrb[0].mxu0
    %v3729 = vadd.f32 %v3294, %v3728
    %v3730 = vpop.f32.mrb[0].mxu0
    %v3731 = vadd.f32 %v3290, %v3730
    %v3732 = vpop.f32.mrb[0].mxu0
    %v3733 = vadd.f32 %v3294, %v3732
    %3734 = vmatprep.mubr.bf16.mxu0 %v3208
    %3735 = vmatmul.mubr.bf16.gmra.mrb[0].mxu0 %v3207
    %v3736 = vpop.f32.mrb[0].mxu0
    %v3737 = vadd.f32 %v3290, %v3736
    %v3738 = vpop.f32.mrb[0].mxu0
    %v3739 = vadd.f32 %v3294, %v3738
    %v3740 = vpop.f32.mrb[0].mxu0
    %v3741 = vadd.f32 %v3290, %v3740
    %v3742 = vpop.f32.mrb[0].mxu0
    %v3743 = vadd.f32 %v3294, %v3742
    %3744 = vmatprep.mubr.bf16.mxu0 %v3210
    %3745 = vmatmul.mubr.bf16.gmra.mrb[0].mxu0 %v3209
    %v3746 = vpop.f32.mrb[0].mxu0
    %v3747 = vadd.f32 %v3290, %v3746
    %v3748 = vpop.f32.mrb[0].mxu0
    %v3749 = vadd.f32 %v3294, %v3748
    %v3750 = vpop.f32.mrb[0].mxu0
    %v3751 = vadd.f32 %v3290, %v3750
    %v3752 = vpop.f32.mrb[0].mxu0
    %v3753 = vadd.f32 %v3294, %v3752
    %3754 = vmatprep.mubr.bf16.mxu0 %v3212
    %3755 = vmatmul.mubr.bf16.gmra.mrb[0].mxu0 %v3211
    %v3756 = vpop.f32.mrb[0].mxu0
    %v3757 = vadd.f32 %v3290, %v3756
    %v3758 = vpop.f32.mrb[0].mxu0
    %v3759 = vadd.f32 %v3294, %v3758
    %v3760 = vpop.f32.mrb[0].mxu0
    %v3761 = vadd.f32 %v3290, %v3760
    %v3762 = vpop.f32.mrb[0].mxu0
    %v3763 = vadd.f32 %v3294, %v3762
    %3764 = vdwg.mxu0
    %v3765 = vmax.f32 %v3654, 0.0
    %v3766 = vmax.f32 %v3656, 0.0
    %v3767 = vmax.f32 %v3727, 0.0
    %v3768 = vmax.f32 %v3729, 0.0
    %v3769 = vmax.f32 %v3658, 0.0
    %v3770 = vmax.f32 %v3660, 0.0
    %v3771 = vmax.f32 %v3731, 0.0
    %v3772 = vmax.f32 %v3733, 0.0
    %v3773 = vmax.f32 %v3664, 0.0
    %v3774 = vmax.f32 %v3666, 0.0
    %v3775 = vmax.f32 %v3737, 0.0
    %v3776 = vmax.f32 %v3739, 0.0
    %v3777 = vmax.f32 %v3668, 0.0
    %v3778 = vmax.f32 %v3670, 0.0
    %v3779 = vmax.f32 %v3741, 0.0
    %v3780 = vmax.f32 %v3743, 0.0
    %v3781 = vmax.f32 %v3674, 0.0
    %v3782 = vmax.f32 %v3676, 0.0
    %v3783 = vmax.f32 %v3747, 0.0
    %v3784 = vmax.f32 %v3749, 0.0
    %v3785 = vmax.f32 %v3678, 0.0
    %v3786 = vmax.f32 %v3680, 0.0
    %v3787 = vmax.f32 %v3751, 0.0
    %v3788 = vmax.f32 %v3753, 0.0
    %v3789 = vmax.f32 %v3684, 0.0
    %v3790 = vmax.f32 %v3686, 0.0
    %v3791 = vmax.f32 %v3757, 0.0
    %v3792 = vmax.f32 %v3759, 0.0
    %v3793 = vmax.f32 %v3688, 0.0
    %v3794 = vmax.f32 %v3690, 0.0
    %v3795 = vmax.f32 %v3761, 0.0
    %v3796 = vmax.f32 %v3763, 0.0
    %v3797 = vpack.c.bf16 %v3769, %v3765
    %v3798 = vpack.c.bf16 %v3770, %v3766
    %v3799 = vpack.c.bf16 %v3771, %v3767
    %v3800 = vpack.c.bf16 %v3772, %v3768
    %v3801 = vpack.c.bf16 %v3777, %v3773
    %v3802 = vpack.c.bf16 %v3778, %v3774
    %v3803 = vpack.c.bf16 %v3779, %v3775
    %v3804 = vpack.c.bf16 %v3780, %v3776
    %v3805 = vpack.c.bf16 %v3785, %v3781
    %v3806 = vpack.c.bf16 %v3786, %v3782
    %v3807 = vpack.c.bf16 %v3787, %v3783
    %v3808 = vpack.c.bf16 %v3788, %v3784
    %v3809 = vpack.c.bf16 %v3793, %v3789
    %v3810 = vpack.c.bf16 %v3794, %v3790
    %v3811 = vpack.c.bf16 %v3795, %v3791
    %v3812 = vpack.c.bf16 %v3796, %v3792
    %v3813 = vld [vmem:[#allocation7] sm:$0xff]
    %v3814 = vld [vmem:[#allocation7 + $0x8] sm:$0xff]
    %v3815 = vld [vmem:[#allocation7 + $0x10] sm:$0xff]
    %v3816 = vld [vmem:[#allocation7 + $0x18] sm:$0xff]
    %v3817 = vld [vmem:[#allocation7 + $0x20] sm:$0xff]
    %v3818 = vld [vmem:[#allocation7 + $0x28] sm:$0xff]
    %v3819 = vld [vmem:[#allocation7 + $0x30] sm:$0xff]
    %v3820 = vld [vmem:[#allocation7 + $0x38] sm:$0xff]
    %v3821 = vld [vmem:[#allocation7 + $0x40] sm:$0xff]
    %v3822 = vld [vmem:[#allocation7 + $0x48] sm:$0xff]
    %v3823 = vld [vmem:[#allocation7 + $0x50] sm:$0xff]
    %v3824 = vld [vmem:[#allocation7 + $0x58] sm:$0xff]
    %v3825 = vld [vmem:[#allocation7 + $0x60] sm:$0xff]
    %v3826 = vld [vmem:[#allocation7 + $0x68] sm:$0xff]
    %v3827 = vld [vmem:[#allocation7 + $0x70] sm:$0xff]
    %v3828 = vld [vmem:[#allocation7 + $0x78] sm:$0xff]
    %v3829 = vld [vmem:[#allocation7 + $0x80] sm:$0xff]
    %v3830 = vld [vmem:[#allocation7 + $0x88] sm:$0xff]
    %v3831 = vld [vmem:[#allocation7 + $0x90] sm:$0xff]
    %v3832 = vld [vmem:[#allocation7 + $0x98] sm:$0xff]
    %v3833 = vld [vmem:[#allocation7 + $0xa0] sm:$0xff]
    %v3834 = vld [vmem:[#allocation7 + $0xa8] sm:$0xff]
    %v3835 = vld [vmem:[#allocation7 + $0xb0] sm:$0xff]
    %v3836 = vld [vmem:[#allocation7 + $0xb8] sm:$0xff]
    %v3837 = vld [vmem:[#allocation7 + $0xc0] sm:$0xff]
    %v3838 = vld [vmem:[#allocation7 + $0xc8] sm:$0xff]
    %v3839 = vld [vmem:[#allocation7 + $0xd0] sm:$0xff]
    %v3840 = vld [vmem:[#allocation7 + $0xd8] sm:$0xff]
    %v3841 = vld [vmem:[#allocation7 + $0xe0] sm:$0xff]
    %v3842 = vld [vmem:[#allocation7 + $0xe8] sm:$0xff]
    %v3843 = vld [vmem:[#allocation7 + $0xf0] sm:$0xff]
    %v3844 = vld [vmem:[#allocation7 + $0xf8] sm:$0xff]
    %v3845 = vld [vmem:[#allocation7 + $0x100] sm:$0xff]
    %v3846 = vld [vmem:[#allocation7 + $0x108] sm:$0xff]
    %v3847 = vld [vmem:[#allocation7 + $0x110] sm:$0xff]
    %v3848 = vld [vmem:[#allocation7 + $0x118] sm:$0xff]
    %v3849 = vld [vmem:[#allocation7 + $0x120] sm:$0xff]
    %v3850 = vld [vmem:[#allocation7 + $0x128] sm:$0xff]
    %v3851 = vld [vmem:[#allocation7 + $0x130] sm:$0xff]
    %v3852 = vld [vmem:[#allocation7 + $0x138] sm:$0xff]
    %v3853 = vld [vmem:[#allocation7 + $0x140] sm:$0xff]
    %v3854 = vld [vmem:[#allocation7 + $0x148] sm:$0xff]
    %v3855 = vld [vmem:[#allocation7 + $0x150] sm:$0xff]
    %v3856 = vld [vmem:[#allocation7 + $0x158] sm:$0xff]
    %v3857 = vld [vmem:[#allocation7 + $0x160] sm:$0xff]
    %v3858 = vld [vmem:[#allocation7 + $0x168] sm:$0xff]
    %v3859 = vld [vmem:[#allocation7 + $0x170] sm:$0xff]
    %v3860 = vld [vmem:[#allocation7 + $0x178] sm:$0xff]
    %v3861 = vld [vmem:[#allocation7 + $0x180] sm:$0xff]
    %v3862 = vld [vmem:[#allocation7 + $0x188] sm:$0xff]
    %v3863 = vld [vmem:[#allocation7 + $0x190] sm:$0xff]
    %v3864 = vld [vmem:[#allocation7 + $0x198] sm:$0xff]
    %v3865 = vld [vmem:[#allocation7 + $0x1a0] sm:$0xff]
    %v3866 = vld [vmem:[#allocation7 + $0x1a8] sm:$0xff]
    %v3867 = vld [vmem:[#allocation7 + $0x1b0] sm:$0xff]
    %v3868 = vld [vmem:[#allocation7 + $0x1b8] sm:$0xff]
    %v3869 = vld [vmem:[#allocation7 + $0x1c0] sm:$0xff]
    %v3870 = vld [vmem:[#allocation7 + $0x1c8] sm:$0xff]
    %v3871 = vld [vmem:[#allocation7 + $0x1d0] sm:$0xff]
    %v3872 = vld [vmem:[#allocation7 + $0x1d8] sm:$0xff]
    %v3873 = vld [vmem:[#allocation7 + $0x1e0] sm:$0xff]
    %v3874 = vld [vmem:[#allocation7 + $0x1e8] sm:$0xff]
    %v3875 = vld [vmem:[#allocation7 + $0x1f0] sm:$0xff]
    %v3876 = vld [vmem:[#allocation7 + $0x1f8] sm:$0xff]
    %v3877 = vld [vmem:[%s14] sm:$0x3]
    %v3879 = vlaneseq
    %v3880 = vshrl.u32 %v3879, 7
    %v3881 = vsub.s32 0, %v3880
    %v3882 = vrot.slane %v3877, %v3881
    %v3883 = vlaneseq
    %v3884 = vshrl.u32 %v3883, 7
    %v3885 = vsub.s32 1, %v3884
    %v3886 = vrot.slane %v3877, %v3885
    %v3953 = vunpack.c.l.b16 %v3813
    %v3954 = vunpack.c.h.b16 %v3813
    %v3955 = vunpack.c.l.b16 %v3814
    %v3956 = vunpack.c.h.b16 %v3814
    %v3957 = vunpack.c.l.b16 %v3815
    %v3958 = vunpack.c.h.b16 %v3815
    %v3959 = vunpack.c.l.b16 %v3816
    %v3960 = vunpack.c.h.b16 %v3816
    %v3961 = vunpack.c.l.b16 %v3817
    %v3962 = vunpack.c.h.b16 %v3817
    %v3963 = vunpack.c.l.b16 %v3818
    %v3964 = vunpack.c.h.b16 %v3818
    %v3965 = vunpack.c.l.b16 %v3819
    %v3966 = vunpack.c.h.b16 %v3819
    %v3967 = vunpack.c.l.b16 %v3820
    %v3968 = vunpack.c.h.b16 %v3820
    %v3969 = vunpack.c.l.b16 %v3821
    %v3970 = vunpack.c.h.b16 %v3821
    %v3971 = vunpack.c.l.b16 %v3822
    %v3972 = vunpack.c.h.b16 %v3822
    %v3973 = vunpack.c.l.b16 %v3823
    %v3974 = vunpack.c.h.b16 %v3823
    %v3975 = vunpack.c.l.b16 %v3824
    %v3976 = vunpack.c.h.b16 %v3824
    %v3977 = vunpack.c.l.b16 %v3825
    %v3978 = vunpack.c.h.b16 %v3825
    %v3979 = vunpack.c.l.b16 %v3826
    %v3980 = vunpack.c.h.b16 %v3826
    %v3981 = vunpack.c.l.b16 %v3827
    %v3982 = vunpack.c.h.b16 %v3827
    %v3983 = vunpack.c.l.b16 %v3828
    %v3984 = vunpack.c.h.b16 %v3828
    %v3985 = vunpack.c.l.b16 %v3829
    %v3986 = vunpack.c.h.b16 %v3829
    %v3987 = vunpack.c.l.b16 %v3830
    %v3988 = vunpack.c.h.b16 %v3830
    %v3989 = vunpack.c.l.b16 %v3831
    %v3990 = vunpack.c.h.b16 %v3831
    %v3991 = vunpack.c.l.b16 %v3832
    %v3992 = vunpack.c.h.b16 %v3832
    %v3993 = vunpack.c.l.b16 %v3833
    %v3994 = vunpack.c.h.b16 %v3833
    %v3995 = vunpack.c.l.b16 %v3834
    %v3996 = vunpack.c.h.b16 %v3834
    %v3997 = vunpack.c.l.b16 %v3835
    %v3998 = vunpack.c.h.b16 %v3835
    %v3999 = vunpack.c.l.b16 %v3836
    %v4000 = vunpack.c.h.b16 %v3836
    %v4001 = vunpack.c.l.b16 %v3837
    %v4002 = vunpack.c.h.b16 %v3837
    %v4003 = vunpack.c.l.b16 %v3838
    %v4004 = vunpack.c.h.b16 %v3838
    %v4005 = vunpack.c.l.b16 %v3839
    %v4006 = vunpack.c.h.b16 %v3839
    %v4007 = vunpack.c.l.b16 %v3840
    %v4008 = vunpack.c.h.b16 %v3840
    %v4009 = vunpack.c.l.b16 %v3841
    %v4010 = vunpack.c.h.b16 %v3841
    %v4011 = vunpack.c.l.b16 %v3842
    %v4012 = vunpack.c.h.b16 %v3842
    %v4013 = vunpack.c.l.b16 %v3843
    %v4014 = vunpack.c.h.b16 %v3843
    %v4015 = vunpack.c.l.b16 %v3844
    %v4016 = vunpack.c.h.b16 %v3844
    %v4017 = vunpack.c.l.b16 %v3845
    %v4018 = vunpack.c.h.b16 %v3845
    %v4019 = vunpack.c.l.b16 %v3846
    %v4020 = vunpack.c.h.b16 %v3846
    %v4021 = vunpack.c.l.b16 %v3847
    %v4022 = vunpack.c.h.b16 %v3847
    %v4023 = vunpack.c.l.b16 %v3848
    %v4024 = vunpack.c.h.b16 %v3848
    %v4025 = vunpack.c.l.b16 %v3849
    %v4026 = vunpack.c.h.b16 %v3849
    %v4027 = vunpack.c.l.b16 %v3850
    %v4028 = vunpack.c.h.b16 %v3850
    %v4029 = vunpack.c.l.b16 %v3851
    %v4030 = vunpack.c.h.b16 %v3851
    %v4031 = vunpack.c.l.b16 %v3852
    %v4032 = vunpack.c.h.b16 %v3852
    %v4033 = vunpack.c.l.b16 %v3853
    %v4034 = vunpack.c.h.b16 %v3853
    %v4035 = vunpack.c.l.b16 %v3854
    %v4036 = vunpack.c.h.b16 %v3854
    %v4037 = vunpack.c.l.b16 %v3855
    %v4038 = vunpack.c.h.b16 %v3855
    %v4039 = vunpack.c.l.b16 %v3856
    %v4040 = vunpack.c.h.b16 %v3856
    %v4041 = vunpack.c.l.b16 %v3857
    %v4042 = vunpack.c.h.b16 %v3857
    %v4043 = vunpack.c.l.b16 %v3858
    %v4044 = vunpack.c.h.b16 %v3858
    %v4045 = vunpack.c.l.b16 %v3859
    %v4046 = vunpack.c.h.b16 %v3859
    %v4047 = vunpack.c.l.b16 %v3860
    %v4048 = vunpack.c.h.b16 %v3860
    %v4049 = vunpack.c.l.b16 %v3861
    %v4050 = vunpack.c.h.b16 %v3861
    %v4051 = vunpack.c.l.b16 %v3862
    %v4052 = vunpack.c.h.b16 %v3862
    %v4053 = vunpack.c.l.b16 %v3863
    %v4054 = vunpack.c.h.b16 %v3863
    %v4055 = vunpack.c.l.b16 %v3864
    %v4056 = vunpack.c.h.b16 %v3864
    %v4057 = vunpack.c.l.b16 %v3865
    %v4058 = vunpack.c.h.b16 %v3865
    %v4059 = vunpack.c.l.b16 %v3866
    %v4060 = vunpack.c.h.b16 %v3866
    %v4061 = vunpack.c.l.b16 %v3867
    %v4062 = vunpack.c.h.b16 %v3867
    %v4063 = vunpack.c.l.b16 %v3868
    %v4064 = vunpack.c.h.b16 %v3868
    %v4065 = vunpack.c.l.b16 %v3869
    %v4066 = vunpack.c.h.b16 %v3869
    %v4067 = vunpack.c.l.b16 %v3870
    %v4068 = vunpack.c.h.b16 %v3870
    %v4069 = vunpack.c.l.b16 %v3871
    %v4070 = vunpack.c.h.b16 %v3871
    %v4071 = vunpack.c.l.b16 %v3872
    %v4072 = vunpack.c.h.b16 %v3872
    %v4073 = vunpack.c.l.b16 %v3873
    %v4074 = vunpack.c.h.b16 %v3873
    %v4075 = vunpack.c.l.b16 %v3874
    %v4076 = vunpack.c.h.b16 %v3874
    %v4077 = vunpack.c.l.b16 %v3875
    %v4078 = vunpack.c.h.b16 %v3875
    %v4079 = vunpack.c.l.b16 %v3876
    %v4080 = vunpack.c.h.b16 %v3876
    %v4081 = vpack.c.b16 %v3955, %v3953
    %v4082 = vpack.c.b16 %v3956, %v3954
    %v4083 = vpack.c.b16 %v3959, %v3957
    %v4084 = vpack.c.b16 %v3960, %v3958
    %v4085 = vpack.c.b16 %v3963, %v3961
    %v4086 = vpack.c.b16 %v3964, %v3962
    %v4087 = vpack.c.b16 %v3967, %v3965
    %v4088 = vpack.c.b16 %v3968, %v3966
    %v4089 = vpack.c.b16 %v3971, %v3969
    %v4090 = vpack.c.b16 %v3972, %v3970
    %v4091 = vpack.c.b16 %v3975, %v3973
    %v4092 = vpack.c.b16 %v3976, %v3974
    %v4093 = vpack.c.b16 %v3979, %v3977
    %v4094 = vpack.c.b16 %v3980, %v3978
    %v4095 = vpack.c.b16 %v3983, %v3981
    %v4096 = vpack.c.b16 %v3984, %v3982
    %v4097 = vpack.c.b16 %v3987, %v3985
    %v4098 = vpack.c.b16 %v3988, %v3986
    %v4099 = vpack.c.b16 %v3991, %v3989
    %v4100 = vpack.c.b16 %v3992, %v3990
    %v4101 = vpack.c.b16 %v3995, %v3993
    %v4102 = vpack.c.b16 %v3996, %v3994
    %v4103 = vpack.c.b16 %v3999, %v3997
    %v4104 = vpack.c.b16 %v4000, %v3998
    %v4105 = vpack.c.b16 %v4003, %v4001
    %v4106 = vpack.c.b16 %v4004, %v4002
    %v4107 = vpack.c.b16 %v4007, %v4005
    %v4108 = vpack.c.b16 %v4008, %v4006
    %v4109 = vpack.c.b16 %v4011, %v4009
    %v4110 = vpack.c.b16 %v4012, %v4010
    %v4111 = vpack.c.b16 %v4015, %v4013
    %v4112 = vpack.c.b16 %v4016, %v4014
    %v4113 = vpack.c.b16 %v4019, %v4017
    %v4114 = vpack.c.b16 %v4020, %v4018
    %v4115 = vpack.c.b16 %v4023, %v4021
    %v4116 = vpack.c.b16 %v4024, %v4022
    %v4117 = vpack.c.b16 %v4027, %v4025
    %v4118 = vpack.c.b16 %v4028, %v4026
    %v4119 = vpack.c.b16 %v4031, %v4029
    %v4120 = vpack.c.b16 %v4032, %v4030
    %v4121 = vpack.c.b16 %v4035, %v4033
    %v4122 = vpack.c.b16 %v4036, %v4034
    %v4123 = vpack.c.b16 %v4039, %v4037
    %v4124 = vpack.c.b16 %v4040, %v4038
    %v4125 = vpack.c.b16 %v4043, %v4041
    %v4126 = vpack.c.b16 %v4044, %v4042
    %v4127 = vpack.c.b16 %v4047, %v4045
    %v4128 = vpack.c.b16 %v4048, %v4046
    %v4129 = vpack.c.b16 %v4051, %v4049
    %v4130 = vpack.c.b16 %v4052, %v4050
    %v4131 = vpack.c.b16 %v4055, %v4053
    %v4132 = vpack.c.b16 %v4056, %v4054
    %v4133 = vpack.c.b16 %v4059, %v4057
    %v4134 = vpack.c.b16 %v4060, %v4058
    %v4135 = vpack.c.b16 %v4063, %v4061
    %v4136 = vpack.c.b16 %v4064, %v4062
    %v4137 = vpack.c.b16 %v4067, %v4065
    %v4138 = vpack.c.b16 %v4068, %v4066
    %v4139 = vpack.c.b16 %v4071, %v4069
    %v4140 = vpack.c.b16 %v4072, %v4070
    %v4141 = vpack.c.b16 %v4075, %v4073
    %v4142 = vpack.c.b16 %v4076, %v4074
    %v4143 = vpack.c.b16 %v4079, %v4077
    %v4144 = vpack.c.b16 %v4080, %v4078
    %4209 = vmatprep.subr.bf16.mxu0 %v4082
    %4210 = vmatpush1.bf16.msra.mxu0 %v4081
    %4211 = vmatprep.subr.bf16.mxu0 %v4084
    %4212 = vmatpush1.bf16.msra.mxu0 %v4083
    %4213 = vmatprep.subr.bf16.mxu0 %v4086
    %4214 = vmatpush1.bf16.msra.mxu0 %v4085
    %4215 = vmatprep.subr.bf16.mxu0 %v4088
    %4216 = vmatpush1.bf16.msra.mxu0 %v4087
    %4217 = vmatprep.subr.bf16.mxu0 %v4090
    %4218 = vmatpush1.bf16.msra.mxu0 %v4089
    %4219 = vmatprep.subr.bf16.mxu0 %v4092
    %4220 = vmatpush1.bf16.msra.mxu0 %v4091
    %4221 = vmatprep.subr.bf16.mxu0 %v4094
    %4222 = vmatpush1.bf16.msra.mxu0 %v4093
    %4223 = vmatprep.subr.bf16.mxu0 %v4096
    %4224 = vmatpush1.bf16.msra.mxu0 %v4095
    %4225 = vmatprep.subr.bf16.mxu0 %v4098
    %4226 = vmatpush1.bf16.msra.mxu0 %v4097
    %4227 = vmatprep.subr.bf16.mxu0 %v4100
    %4228 = vmatpush1.bf16.msra.mxu0 %v4099
    %4229 = vmatprep.subr.bf16.mxu0 %v4102
    %4230 = vmatpush1.bf16.msra.mxu0 %v4101
    %4231 = vmatprep.subr.bf16.mxu0 %v4104
    %4232 = vmatpush1.bf16.msra.mxu0 %v4103
    %4233 = vmatprep.subr.bf16.mxu0 %v4106
    %4234 = vmatpush1.bf16.msra.mxu0 %v4105
    %4235 = vmatprep.subr.bf16.mxu0 %v4108
    %4236 = vmatpush1.bf16.msra.mxu0 %v4107
    %4237 = vmatprep.subr.bf16.mxu0 %v4110
    %4238 = vmatpush1.bf16.msra.mxu0 %v4109
    %4239 = vmatprep.subr.bf16.mxu0 %v4112
    %4240 = vmatpush1.bf16.msra.mxu0 %v4111
    %4241 = vmatprep.mubr.bf16.mxu0 %v3798
    %4242 = vmatmul.mubr.bf16.gmra.mrb[0].mxu0 %v3797
    %v4243 = vpop.f32.mrb[0].mxu0
    %v4244 = vadd.f32 %v3882, %v4243
    %v4245 = vpop.f32.mrb[0].mxu0
    %v4246 = vadd.f32 %v3886, %v4245
    %v4247 = vpop.f32.mrb[0].mxu0
    %v4248 = vadd.f32 %v3882, %v4247
    %v4249 = vpop.f32.mrb[0].mxu0
    %v4250 = vadd.f32 %v3886, %v4249
    %4251 = vmatprep.mubr.bf16.mxu0 %v3802
    %4252 = vmatmul.mubr.bf16.gmra.mrb[0].mxu0 %v3801
    %v4253 = vpop.f32.mrb[0].mxu0
    %v4254 = vadd.f32 %v3882, %v4253
    %v4255 = vpop.f32.mrb[0].mxu0
    %v4256 = vadd.f32 %v3886, %v4255
    %v4257 = vpop.f32.mrb[0].mxu0
    %v4258 = vadd.f32 %v3882, %v4257
    %v4259 = vpop.f32.mrb[0].mxu0
    %v4260 = vadd.f32 %v3886, %v4259
    %4261 = vmatprep.mubr.bf16.mxu0 %v3806
    %4262 = vmatmul.mubr.bf16.gmra.mrb[0].mxu0 %v3805
    %v4263 = vpop.f32.mrb[0].mxu0
    %v4264 = vadd.f32 %v3882, %v4263
    %v4265 = vpop.f32.mrb[0].mxu0
    %v4266 = vadd.f32 %v3886, %v4265
    %v4267 = vpop.f32.mrb[0].mxu0
    %v4268 = vadd.f32 %v3882, %v4267
    %v4269 = vpop.f32.mrb[0].mxu0
    %v4270 = vadd.f32 %v3886, %v4269
    %4271 = vmatprep.mubr.bf16.mxu0 %v3810
    %4272 = vmatmul.mubr.bf16.gmra.mrb[0].mxu0 %v3809
    %v4273 = vpop.f32.mrb[0].mxu0
    %v4274 = vadd.f32 %v3882, %v4273
    %v4275 = vpop.f32.mrb[0].mxu0
    %v4276 = vadd.f32 %v3886, %v4275
    %v4277 = vpop.f32.mrb[0].mxu0
    %v4278 = vadd.f32 %v3882, %v4277
    %v4279 = vpop.f32.mrb[0].mxu0
    %v4280 = vadd.f32 %v3886, %v4279
    %4281 = vdwg.mxu0
    %4282 = vmatprep.subr.bf16.mxu0 %v4114
    %4283 = vmatpush1.bf16.msra.mxu0 %v4113
    %4284 = vmatprep.subr.bf16.mxu0 %v4116
    %4285 = vmatpush1.bf16.msra.mxu0 %v4115
    %4286 = vmatprep.subr.bf16.mxu0 %v4118
    %4287 = vmatpush1.bf16.msra.mxu0 %v4117
    %4288 = vmatprep.subr.bf16.mxu0 %v4120
    %4289 = vmatpush1.bf16.msra.mxu0 %v4119
    %4290 = vmatprep.subr.bf16.mxu0 %v4122
    %4291 = vmatpush1.bf16.msra.mxu0 %v4121
    %4292 = vmatprep.subr.bf16.mxu0 %v4124
    %4293 = vmatpush1.bf16.msra.mxu0 %v4123
    %4294 = vmatprep.subr.bf16.mxu0 %v4126
    %4295 = vmatpush1.bf16.msra.mxu0 %v4125
    %4296 = vmatprep.subr.bf16.mxu0 %v4128
    %4297 = vmatpush1.bf16.msra.mxu0 %v4127
    %4298 = vmatprep.subr.bf16.mxu0 %v4130
    %4299 = vmatpush1.bf16.msra.mxu0 %v4129
    %4300 = vmatprep.subr.bf16.mxu0 %v4132
    %4301 = vmatpush1.bf16.msra.mxu0 %v4131
    %4302 = vmatprep.subr.bf16.mxu0 %v4134
    %4303 = vmatpush1.bf16.msra.mxu0 %v4133
    %4304 = vmatprep.subr.bf16.mxu0 %v4136
    %4305 = vmatpush1.bf16.msra.mxu0 %v4135
    %4306 = vmatprep.subr.bf16.mxu0 %v4138
    %4307 = vmatpush1.bf16.msra.mxu0 %v4137
    %4308 = vmatprep.subr.bf16.mxu0 %v4140
    %4309 = vmatpush1.bf16.msra.mxu0 %v4139
    %4310 = vmatprep.subr.bf16.mxu0 %v4142
    %4311 = vmatpush1.bf16.msra.mxu0 %v4141
    %4312 = vmatprep.subr.bf16.mxu0 %v4144
    %4313 = vmatpush1.bf16.msra.mxu0 %v4143
    %4314 = vmatprep.mubr.bf16.mxu0 %v3800
    %4315 = vmatmul.mubr.bf16.gmra.mrb[0].mxu0 %v3799
    %v4316 = vpop.f32.mrb[0].mxu0
    %v4317 = vadd.f32 %v4244, %v4316
    %v4318 = vpop.f32.mrb[0].mxu0
    %v4319 = vadd.f32 %v4246, %v4318
    %v4320 = vpop.f32.mrb[0].mxu0
    %v4321 = vadd.f32 %v4248, %v4320
    %v4322 = vpop.f32.mrb[0].mxu0
    %v4323 = vadd.f32 %v4250, %v4322
    %4324 = vmatprep.mubr.bf16.mxu0 %v3804
    %4325 = vmatmul.mubr.bf16.gmra.mrb[0].mxu0 %v3803
    %v4326 = vpop.f32.mrb[0].mxu0
    %v4327 = vadd.f32 %v4254, %v4326
    %v4328 = vpop.f32.mrb[0].mxu0
    %v4329 = vadd.f32 %v4256, %v4328
    %v4330 = vpop.f32.mrb[0].mxu0
    %v4331 = vadd.f32 %v4258, %v4330
    %v4332 = vpop.f32.mrb[0].mxu0
    %v4333 = vadd.f32 %v4260, %v4332
    %4334 = vmatprep.mubr.bf16.mxu0 %v3808
    %4335 = vmatmul.mubr.bf16.gmra.mrb[0].mxu0 %v3807
    %v4336 = vpop.f32.mrb[0].mxu0
    %v4337 = vadd.f32 %v4264, %v4336
    %v4338 = vpop.f32.mrb[0].mxu0
    %v4339 = vadd.f32 %v4266, %v4338
    %v4340 = vpop.f32.mrb[0].mxu0
    %v4341 = vadd.f32 %v4268, %v4340
    %v4342 = vpop.f32.mrb[0].mxu0
    %v4343 = vadd.f32 %v4270, %v4342
    %4344 = vmatprep.mubr.bf16.mxu0 %v3812
    %4345 = vmatmul.mubr.bf16.gmra.mrb[0].mxu0 %v3811
    %v4346 = vpop.f32.mrb[0].mxu0
    %v4347 = vadd.f32 %v4274, %v4346
    %v4348 = vpop.f32.mrb[0].mxu0
    %v4349 = vadd.f32 %v4276, %v4348
    %v4350 = vpop.f32.mrb[0].mxu0
    %v4351 = vadd.f32 %v4278, %v4350
    %v4352 = vpop.f32.mrb[0].mxu0
    %v4353 = vadd.f32 %v4280, %v4352
    %4354 = vdwg.mxu0
    %v4355 = vadd.f32 %v3189, %v4317
    %v4356 = vadd.f32 %v3190, %v4319
    %v4357 = vadd.f32 %v3191, %v4321
    %v4358 = vadd.f32 %v3192, %v4323
    %v4359 = vadd.f32 %v3193, %v4327
    %v4360 = vadd.f32 %v3194, %v4329
    %v4361 = vadd.f32 %v3195, %v4331
    %v4362 = vadd.f32 %v3196, %v4333
    %v4363 = vadd.f32 %v3197, %v4337
    %v4364 = vadd.f32 %v3198, %v4339
    %v4365 = vadd.f32 %v3199, %v4341
    %v4366 = vadd.f32 %v3200, %v4343
    %v4367 = vadd.f32 %v3201, %v4347
    %v4368 = vadd.f32 %v3202, %v4349
    %v4369 = vadd.f32 %v3203, %v4351
    %v4370 = vadd.f32 %v3204, %v4353
    %v4371 = vld [vmem:[%s15] sm:$0x3]
    %v4372 = vld [vmem:[%s16] sm:$0x3]
    %v4373 = vadd.f32 %v4355, %v4356
    %4374 = vadd.xlane.f32.xlu0 %v4373
    %v4375 = vpop.xlane.xlu0 %4374
    %v4376 = vadd.f32 %v4357, %v4358
    %4377 = vadd.xlane.f32.xlu0 %v4376
    %v4378 = vpop.xlane.xlu0 %4377
    %v4379 = vadd.f32 %v4359, %v4360
    %4380 = vadd.xlane.f32.xlu0 %v4379
    %v4381 = vpop.xlane.xlu0 %4380
    %v4382 = vadd.f32 %v4361, %v4362
    %4383 = vadd.xlane.f32.xlu0 %v4382
    %v4384 = vpop.xlane.xlu0 %4383
    %v4385 = vadd.f32 %v4363, %v4364
    %4386 = vadd.xlane.f32.xlu0 %v4385
    %v4387 = vpop.xlane.xlu0 %4386
    %v4388 = vadd.f32 %v4365, %v4366
    %4389 = vadd.xlane.f32.xlu0 %v4388
    %v4390 = vpop.xlane.xlu0 %4389
    %v4391 = vadd.f32 %v4367, %v4368
    %4392 = vadd.xlane.f32.xlu0 %v4391
    %v4393 = vpop.xlane.xlu0 %4392
    %v4394 = vadd.f32 %v4369, %v4370
    %4395 = vadd.xlane.f32.xlu0 %v4394
    %v4396 = vpop.xlane.xlu0 %4395
    %v4397 = vmul.f32 %v4375, %v3046
    %v4398 = vmul.f32 %v4378, %v3046
    %v4399 = vmul.f32 %v4381, %v3046
    %v4400 = vmul.f32 %v4384, %v3046
    %v4401 = vmul.f32 %v4387, %v3046
    %v4402 = vmul.f32 %v4390, %v3046
    %v4403 = vmul.f32 %v4393, %v3046
    %v4404 = vmul.f32 %v4396, %v3046
    %v4405 = vsub.f32 %v4355, %v4397
    %v4406 = vsub.f32 %v4356, %v4397
    %v4407 = vsub.f32 %v4357, %v4398
    %v4408 = vsub.f32 %v4358, %v4398
    %v4409 = vsub.f32 %v4359, %v4399
    %v4410 = vsub.f32 %v4360, %v4399
    %v4411 = vsub.f32 %v4361, %v4400
    %v4412 = vsub.f32 %v4362, %v4400
    %v4413 = vsub.f32 %v4363, %v4401
    %v4414 = vsub.f32 %v4364, %v4401
    %v4415 = vsub.f32 %v4365, %v4402
    %v4416 = vsub.f32 %v4366, %v4402
    %v4417 = vsub.f32 %v4367, %v4403
    %v4418 = vsub.f32 %v4368, %v4403
    %v4419 = vsub.f32 %v4369, %v4404
    %v4420 = vsub.f32 %v4370, %v4404
    %v4421 = vmul.f32 %v4405, %v4405
    %v4422 = vmul.f32 %v4406, %v4406
    %v4423 = vmul.f32 %v4407, %v4407
    %v4424 = vmul.f32 %v4408, %v4408
    %v4425 = vmul.f32 %v4409, %v4409
    %v4426 = vmul.f32 %v4410, %v4410
    %v4427 = vmul.f32 %v4411, %v4411
    %v4428 = vmul.f32 %v4412, %v4412
    %v4429 = vmul.f32 %v4413, %v4413
    %v4430 = vmul.f32 %v4414, %v4414
    %v4431 = vmul.f32 %v4415, %v4415
    %v4432 = vmul.f32 %v4416, %v4416
    %v4433 = vmul.f32 %v4417, %v4417
    %v4434 = vmul.f32 %v4418, %v4418
    %v4435 = vmul.f32 %v4419, %v4419
    %v4436 = vmul.f32 %v4420, %v4420
    %v4437 = vadd.f32 %v4421, %v4422
    %4438 = vadd.xlane.f32.xlu0 %v4437
    %v4439 = vpop.xlane.xlu0 %4438
    %v4440 = vadd.f32 %v4423, %v4424
    %4441 = vadd.xlane.f32.xlu0 %v4440
    %v4442 = vpop.xlane.xlu0 %4441
    %v4443 = vadd.f32 %v4425, %v4426
    %4444 = vadd.xlane.f32.xlu0 %v4443
    %v4445 = vpop.xlane.xlu0 %4444
    %v4446 = vadd.f32 %v4427, %v4428
    %4447 = vadd.xlane.f32.xlu0 %v4446
    %v4448 = vpop.xlane.xlu0 %4447
    %v4449 = vadd.f32 %v4429, %v4430
    %4450 = vadd.xlane.f32.xlu0 %v4449
    %v4451 = vpop.xlane.xlu0 %4450
    %v4452 = vadd.f32 %v4431, %v4432
    %4453 = vadd.xlane.f32.xlu0 %v4452
    %v4454 = vpop.xlane.xlu0 %4453
    %v4455 = vadd.f32 %v4433, %v4434
    %4456 = vadd.xlane.f32.xlu0 %v4455
    %v4457 = vpop.xlane.xlu0 %4456
    %v4458 = vadd.f32 %v4435, %v4436
    %4459 = vadd.xlane.f32.xlu0 %v4458
    %v4460 = vpop.xlane.xlu0 %4459
    %v4461 = vmul.f32 %v4439, %v3046
    %v4462 = vmul.f32 %v4442, %v3046
    %v4463 = vmul.f32 %v4445, %v3046
    %v4464 = vmul.f32 %v4448, %v3046
    %v4465 = vmul.f32 %v4451, %v3046
    %v4466 = vmul.f32 %v4454, %v3046
    %v4467 = vmul.f32 %v4457, %v3046
    %v4468 = vmul.f32 %v4460, %v3046
    %v4469 = vadd.f32 %v4461, 1e-05
    %v4470 = vadd.f32 %v4462, 1e-05
    %v4471 = vadd.f32 %v4463, 1e-05
    %v4472 = vadd.f32 %v4464, 1e-05
    %v4473 = vadd.f32 %v4465, 1e-05
    %v4474 = vadd.f32 %v4466, 1e-05
    %v4475 = vadd.f32 %v4467, 1e-05
    %v4476 = vadd.f32 %v4468, 1e-05
    %v4477 = vrsqrt.pop %v4469
    %v4478 = vrsqrt.pop %v4470
    %v4479 = vrsqrt.pop %v4471
    %v4480 = vrsqrt.pop %v4472
    %v4481 = vrsqrt.pop %v4473
    %v4482 = vrsqrt.pop %v4474
    %v4483 = vrsqrt.pop %v4475
    %v4484 = vrsqrt.pop %v4476
    %v4485 = vmul.f32 %v4405, %v4477
    %v4486 = vmul.f32 %v4406, %v4477
    %v4487 = vmul.f32 %v4407, %v4478
    %v4488 = vmul.f32 %v4408, %v4478
    %v4489 = vmul.f32 %v4409, %v4479
    %v4490 = vmul.f32 %v4410, %v4479
    %v4491 = vmul.f32 %v4411, %v4480
    %v4492 = vmul.f32 %v4412, %v4480
    %v4493 = vmul.f32 %v4413, %v4481
    %v4494 = vmul.f32 %v4414, %v4481
    %v4495 = vmul.f32 %v4415, %v4482
    %v4496 = vmul.f32 %v4416, %v4482
    %v4497 = vmul.f32 %v4417, %v4483
    %v4498 = vmul.f32 %v4418, %v4483
    %v4499 = vmul.f32 %v4419, %v4484
    %v4500 = vmul.f32 %v4420, %v4484
    %v4502 = vlaneseq
    %v4503 = vshrl.u32 %v4502, 7
    %v4504 = vsub.s32 0, %v4503
    %v4505 = vrot.slane %v4371, %v4504
    %v4506 = vlaneseq
    %v4507 = vshrl.u32 %v4506, 7
    %v4508 = vsub.s32 1, %v4507
    %v4509 = vrot.slane %v4371, %v4508
    %v4512 = vmul.f32 %v4485, %v4505
    %v4513 = vmul.f32 %v4486, %v4509
    %v4514 = vmul.f32 %v4487, %v4505
    %v4515 = vmul.f32 %v4488, %v4509
    %v4516 = vmul.f32 %v4489, %v4505
    %v4517 = vmul.f32 %v4490, %v4509
    %v4518 = vmul.f32 %v4491, %v4505
    %v4519 = vmul.f32 %v4492, %v4509
    %v4520 = vmul.f32 %v4493, %v4505
    %v4521 = vmul.f32 %v4494, %v4509
    %v4522 = vmul.f32 %v4495, %v4505
    %v4523 = vmul.f32 %v4496, %v4509
    %v4524 = vmul.f32 %v4497, %v4505
    %v4525 = vmul.f32 %v4498, %v4509
    %v4526 = vmul.f32 %v4499, %v4505
    %v4527 = vmul.f32 %v4500, %v4509
    %v4529 = vlaneseq
    %v4530 = vshrl.u32 %v4529, 7
    %v4531 = vsub.s32 0, %v4530
    %v4532 = vrot.slane %v4372, %v4531
    %v4533 = vlaneseq
    %v4534 = vshrl.u32 %v4533, 7
    %v4535 = vsub.s32 1, %v4534
    %v4536 = vrot.slane %v4372, %v4535
    %v4539 = vadd.f32 %v4512, %v4532
    %v4540 = vadd.f32 %v4513, %v4536
    %v4541 = vadd.f32 %v4514, %v4532
    %v4542 = vadd.f32 %v4515, %v4536
    %v4543 = vadd.f32 %v4516, %v4532
    %v4544 = vadd.f32 %v4517, %v4536
    %v4545 = vadd.f32 %v4518, %v4532
    %v4546 = vadd.f32 %v4519, %v4536
    %v4547 = vadd.f32 %v4520, %v4532
    %v4548 = vadd.f32 %v4521, %v4536
    %v4549 = vadd.f32 %v4522, %v4532
    %v4550 = vadd.f32 %v4523, %v4536
    %v4551 = vadd.f32 %v4524, %v4532
    %v4552 = vadd.f32 %v4525, %v4536
    %v4553 = vadd.f32 %v4526, %v4532
    %v4554 = vadd.f32 %v4527, %v4536
    %v4555 = vld [vmem:[%s2] sm:$0xf]
    %v4556 = vpack.c.bf16 %v4541, %v4539
    %v4557 = vpack.c.bf16 %v4542, %v4540
    %v4558 = vpack.c.bf16 %v4545, %v4543
    %v4559 = vpack.c.bf16 %v4546, %v4544
    %v4560 = vpack.c.bf16 %v4549, %v4547
    %v4561 = vpack.c.bf16 %v4550, %v4548
    %v4562 = vpack.c.bf16 %v4553, %v4551
    %v4563 = vpack.c.bf16 %v4554, %v4552
    %vm4564 = vcmask 523264
    %v4566 = vsel %vm4564, %v4555, 0
    %4568 = vmatprep.subr.bf16.mxu0 %v4557
    %4569 = vmatpush1.bf16.msra.mxu0 %v4556
    %4570 = vmatprep.subr.bf16.mxu0 %v4559
    %4571 = vmatpush1.bf16.msra.mxu0 %v4558
    %4572 = vmatprep.subr.bf16.mxu0 %v4561
    %4573 = vmatpush1.bf16.msra.mxu0 %v4560
    %4574 = vmatprep.subr.bf16.mxu0 %v4563
    %4575 = vmatpush1.bf16.msra.mxu0 %v4562
    %4576 = vmatprep.subr.bf16.mxu0 0
    %4577 = vmatpush1.bf16.msra.mxu0 0
    %4578 = vmatprep.subr.bf16.mxu0 0
    %4579 = vmatpush1.bf16.msra.mxu0 0
    %4580 = vmatprep.subr.bf16.mxu0 0
    %4581 = vmatpush1.bf16.msra.mxu0 0
    %4582 = vmatprep.subr.bf16.mxu0 0
    %4583 = vmatpush1.bf16.msra.mxu0 0
    %4584 = vmatprep.subr.bf16.mxu0 0
    %4585 = vmatpush1.bf16.msra.mxu0 0
    %4586 = vmatprep.subr.bf16.mxu0 0
    %4587 = vmatpush1.bf16.msra.mxu0 0
    %4588 = vmatprep.subr.bf16.mxu0 0
    %4589 = vmatpush1.bf16.msra.mxu0 0
    %4590 = vmatprep.subr.bf16.mxu0 0
    %4591 = vmatpush1.bf16.msra.mxu0 0
    %4592 = vmatprep.subr.bf16.mxu0 0
    %4593 = vmatpush1.bf16.msra.mxu0 0
    %4594 = vmatprep.subr.bf16.mxu0 0
    %4595 = vmatpush1.bf16.msra.mxu0 0
    %4596 = vmatprep.subr.bf16.mxu0 0
    %4597 = vmatpush1.bf16.msra.mxu0 0
    %4598 = vmatprep.subr.bf16.mxu0 0
    %4599 = vmatpush1.bf16.msra.mxu0 0
    %4600 = vmatprep.mubr.bf16.mxu0 0
    %4601 = vmatmul.mubr.bf16.gmra.mrb[0].mxu0 %v4566
    %v4602 = vpop.f32.mrb[0].mxu0
    %v4603 = vadd.f32 0.0, %v4602
    %v4604 = vpop.f32.mrb[0].mxu0
    %v4605 = vadd.f32 0.0, %v4604
    %v4606 = vpop.f32.mrb[0].mxu0
    %v4607 = vpop.f32.mrb[0].mxu0
    %4608 = vdwg.mxu0
    %v4609 = vld [vmem:[%s1] sm:$0xff]
    %v4610 = vpack.c.bf16 %v4609, %v4609
    %v4611 = vpack.c.bf16 %v4603, %v4603
    %v4612 = vpack.c.bf16 %v4605, %v4605
    %v4613 = vld [vmem:[#allocation8] sm:$0xff]
    %v4614 = vld [vmem:[#allocation8 + $0x8] sm:$0xff]
    %v4615 = vld [vmem:[#allocation8 + $0x10] sm:$0xff]
    %v4616 = vld [vmem:[#allocation8 + $0x18] sm:$0xff]
    %v4617 = vld [vmem:[#allocation8 + $0x20] sm:$0xff]
    %v4618 = vld [vmem:[#allocation8 + $0x28] sm:$0xff]
    %v4619 = vld [vmem:[#allocation8 + $0x30] sm:$0xff]
    %v4620 = vld [vmem:[#allocation8 + $0x38] sm:$0xff]
    %v4621 = vld [vmem:[#allocation8 + $0x40] sm:$0xff]
    %v4622 = vld [vmem:[#allocation8 + $0x48] sm:$0xff]
    %v4623 = vld [vmem:[#allocation8 + $0x50] sm:$0xff]
    %v4624 = vld [vmem:[#allocation8 + $0x58] sm:$0xff]
    %v4625 = vld [vmem:[#allocation8 + $0x60] sm:$0xff]
    %v4626 = vld [vmem:[#allocation8 + $0x68] sm:$0xff]
    %v4627 = vld [vmem:[#allocation8 + $0x70] sm:$0xff]
    %v4628 = vld [vmem:[#allocation8 + $0x78] sm:$0xff]
    %v4629 = vld [vmem:[#allocation8 + $0x80] sm:$0xff]
    %v4630 = vld [vmem:[#allocation8 + $0x88] sm:$0xff]
    %v4631 = vld [vmem:[#allocation8 + $0x90] sm:$0xff]
    %v4632 = vld [vmem:[#allocation8 + $0x98] sm:$0xff]
    %v4633 = vld [vmem:[#allocation8 + $0xa0] sm:$0xff]
    %v4634 = vld [vmem:[#allocation8 + $0xa8] sm:$0xff]
    %v4635 = vld [vmem:[#allocation8 + $0xb0] sm:$0xff]
    %v4636 = vld [vmem:[#allocation8 + $0xb8] sm:$0xff]
    %v4637 = vld [vmem:[#allocation8 + $0xc0] sm:$0xff]
    %v4638 = vld [vmem:[#allocation8 + $0xc8] sm:$0xff]
    %v4639 = vld [vmem:[#allocation8 + $0xd0] sm:$0xff]
    %v4640 = vld [vmem:[#allocation8 + $0xd8] sm:$0xff]
    %v4641 = vld [vmem:[#allocation8 + $0xe0] sm:$0xff]
    %v4642 = vld [vmem:[#allocation8 + $0xe8] sm:$0xff]
    %v4643 = vld [vmem:[#allocation8 + $0xf0] sm:$0xff]
    %v4644 = vld [vmem:[#allocation8 + $0xf8] sm:$0xff]
    %v4645 = vld [vmem:[#allocation8 + $0x100] sm:$0xff]
    %v4646 = vld [vmem:[#allocation8 + $0x108] sm:$0xff]
    %v4647 = vld [vmem:[#allocation8 + $0x110] sm:$0xff]
    %v4648 = vld [vmem:[#allocation8 + $0x118] sm:$0xff]
    %v4649 = vld [vmem:[#allocation8 + $0x120] sm:$0xff]
    %v4650 = vld [vmem:[#allocation8 + $0x128] sm:$0xff]
    %v4651 = vld [vmem:[#allocation8 + $0x130] sm:$0xff]
    %v4652 = vld [vmem:[#allocation8 + $0x138] sm:$0xff]
    %v4653 = vld [vmem:[#allocation8 + $0x140] sm:$0xff]
    %v4654 = vld [vmem:[#allocation8 + $0x148] sm:$0xff]
    %v4655 = vld [vmem:[#allocation8 + $0x150] sm:$0xff]
    %v4656 = vld [vmem:[#allocation8 + $0x158] sm:$0xff]
    %v4657 = vld [vmem:[#allocation8 + $0x160] sm:$0xff]
    %v4658 = vld [vmem:[#allocation8 + $0x168] sm:$0xff]
    %v4659 = vld [vmem:[#allocation8 + $0x170] sm:$0xff]
    %v4660 = vld [vmem:[#allocation8 + $0x178] sm:$0xff]
    %v4661 = vld [vmem:[#allocation8 + $0x180] sm:$0xff]
    %v4662 = vld [vmem:[#allocation8 + $0x188] sm:$0xff]
    %v4663 = vld [vmem:[#allocation8 + $0x190] sm:$0xff]
    %v4664 = vld [vmem:[#allocation8 + $0x198] sm:$0xff]
    %v4665 = vld [vmem:[#allocation8 + $0x1a0] sm:$0xff]
    %v4666 = vld [vmem:[#allocation8 + $0x1a8] sm:$0xff]
    %v4667 = vld [vmem:[#allocation8 + $0x1b0] sm:$0xff]
    %v4668 = vld [vmem:[#allocation8 + $0x1b8] sm:$0xff]
    %v4669 = vld [vmem:[#allocation8 + $0x1c0] sm:$0xff]
    %v4670 = vld [vmem:[#allocation8 + $0x1c8] sm:$0xff]
    %v4671 = vld [vmem:[#allocation8 + $0x1d0] sm:$0xff]
    %v4672 = vld [vmem:[#allocation8 + $0x1d8] sm:$0xff]
    %v4673 = vld [vmem:[#allocation8 + $0x1e0] sm:$0xff]
    %v4674 = vld [vmem:[#allocation8 + $0x1e8] sm:$0xff]
    %v4675 = vld [vmem:[#allocation8 + $0x1f0] sm:$0xff]
    %v4676 = vld [vmem:[#allocation8 + $0x1f8] sm:$0xff]
    %v4677 = vld [vmem:[%s18] sm:$0x77]
    %v4678 = vld [vmem:[%s18 + $0x8] sm:$0x77]
    %v4681 = vunpack.c.l.b16 %v4677
    %v4682 = vunpack.c.h.b16 %v4677
    %v4683 = vunpack.c.l.b16 %v4678
    %v4684 = vunpack.c.h.b16 %v4678
    %v4685 = vpack.c.b16 %v4681, %v4681
    %v4686 = vpack.c.b16 %v4682, %v4682
    %v4687 = vpack.c.b16 %v4683, %v4683
    %v4688 = vpack.c.b16 %v4684, %v4684
    %vm4689 = vcmask 48128
    %v4691 = vsel %vm4689, %v4610, 0
    %vm4693 = vcmask 1042432
    %v4695 = vsel %vm4693, %v4685, 0
    %v4698 = vsel %vm4693, %v4686, 0
    %v4701 = vsel %vm4693, %v4687, 0
    %v4704 = vsel %vm4693, %v4688, 0
    %4706 = vmatprep.subr.bf16.mxu0 %v4698
    %4707 = vmatpush1.bf16.msra.mxu0 %v4695
    %4708 = vmatprep.subr.bf16.mxu0 0
    %4709 = vmatpush1.bf16.msra.mxu0 0
    %4710 = vmatprep.subr.bf16.mxu0 0
    %4711 = vmatpush1.bf16.msra.mxu0 0
    %4712 = vmatprep.subr.bf16.mxu0 0
    %4713 = vmatpush1.bf16.msra.mxu0 0
    %4714 = vmatprep.subr.bf16.mxu0 0
    %4715 = vmatpush1.bf16.msra.mxu0 0
    %4716 = vmatprep.subr.bf16.mxu0 0
    %4717 = vmatpush1.bf16.msra.mxu0 0
    %4718 = vmatprep.subr.bf16.mxu0 0
    %4719 = vmatpush1.bf16.msra.mxu0 0
    %4720 = vmatprep.subr.bf16.mxu0 0
    %4721 = vmatpush1.bf16.msra.mxu0 0
    %4722 = vmatprep.subr.bf16.mxu0 0
    %4723 = vmatpush1.bf16.msra.mxu0 0
    %4724 = vmatprep.subr.bf16.mxu0 0
    %4725 = vmatpush1.bf16.msra.mxu0 0
    %4726 = vmatprep.subr.bf16.mxu0 0
    %4727 = vmatpush1.bf16.msra.mxu0 0
    %4728 = vmatprep.subr.bf16.mxu0 0
    %4729 = vmatpush1.bf16.msra.mxu0 0
    %4730 = vmatprep.subr.bf16.mxu0 0
    %4731 = vmatpush1.bf16.msra.mxu0 0
    %4732 = vmatprep.subr.bf16.mxu0 0
    %4733 = vmatpush1.bf16.msra.mxu0 0
    %4734 = vmatprep.subr.bf16.mxu0 0
    %4735 = vmatpush1.bf16.msra.mxu0 0
    %4736 = vmatprep.subr.bf16.mxu0 0
    %4737 = vmatpush1.bf16.msra.mxu0 0
    %4738 = vmatprep.mubr.bf16.mxu0 0
    %4739 = vmatmul.mubr.bf16.gmra.mrb[0].mxu0 %v4691
    %v4740 = vpop.f32.mrb[0].mxu0
    %v4741 = vadd.f32 0.0, %v4740
    %v4742 = vpop.f32.mrb[0].mxu0
    %v4743 = vadd.f32 0.0, %v4742
    %v4744 = vpop.f32.mrb[0].mxu0
    %v4745 = vpop.f32.mrb[0].mxu0
    %4746 = vdwg.mxu0
    %4747 = vmatprep.subr.bf16.mxu0 %v4704
    %4748 = vmatpush1.bf16.msra.mxu0 %v4701
    %4749 = vmatprep.subr.bf16.mxu0 0
    %4750 = vmatpush1.bf16.msra.mxu0 0
    %4751 = vmatprep.subr.bf16.mxu0 0
    %4752 = vmatpush1.bf16.msra.mxu0 0
    %4753 = vmatprep.subr.bf16.mxu0 0
    %4754 = vmatpush1.bf16.msra.mxu0 0
    %4755 = vmatprep.subr.bf16.mxu0 0
    %4756 = vmatpush1.bf16.msra.mxu0 0
    %4757 = vmatprep.subr.bf16.mxu0 0
    %4758 = vmatpush1.bf16.msra.mxu0 0
    %4759 = vmatprep.subr.bf16.mxu0 0
    %4760 = vmatpush1.bf16.msra.mxu0 0
    %4761 = vmatprep.subr.bf16.mxu0 0
    %4762 = vmatpush1.bf16.msra.mxu0 0
    %4763 = vmatprep.subr.bf16.mxu0 0
    %4764 = vmatpush1.bf16.msra.mxu0 0
    %4765 = vmatprep.subr.bf16.mxu0 0
    %4766 = vmatpush1.bf16.msra.mxu0 0
    %4767 = vmatprep.subr.bf16.mxu0 0
    %4768 = vmatpush1.bf16.msra.mxu0 0
    %4769 = vmatprep.subr.bf16.mxu0 0
    %4770 = vmatpush1.bf16.msra.mxu0 0
    %4771 = vmatprep.subr.bf16.mxu0 0
    %4772 = vmatpush1.bf16.msra.mxu0 0
    %4773 = vmatprep.subr.bf16.mxu0 0
    %4774 = vmatpush1.bf16.msra.mxu0 0
    %4775 = vmatprep.subr.bf16.mxu0 0
    %4776 = vmatpush1.bf16.msra.mxu0 0
    %4777 = vmatprep.subr.bf16.mxu0 0
    %4778 = vmatpush1.bf16.msra.mxu0 0
    %4779 = vmatprep.mubr.bf16.mxu0 0
    %4780 = vmatmul.mubr.bf16.gmra.mrb[0].mxu0 %v4691
    %v4781 = vpop.f32.mrb[0].mxu0
    %v4782 = vadd.f32 0.0, %v4781
    %v4783 = vpop.f32.mrb[0].mxu0
    %v4784 = vadd.f32 0.0, %v4783
    %v4785 = vpop.f32.mrb[0].mxu0
    %v4786 = vpop.f32.mrb[0].mxu0
    %4787 = vdwg.mxu0
    %v4852 = vunpack.c.l.b16 %v4613
    %v4853 = vunpack.c.h.b16 %v4613
    %v4854 = vunpack.c.l.b16 %v4614
    %v4855 = vunpack.c.h.b16 %v4614
    %v4856 = vunpack.c.l.b16 %v4615
    %v4857 = vunpack.c.h.b16 %v4615
    %v4858 = vunpack.c.l.b16 %v4616
    %v4859 = vunpack.c.h.b16 %v4616
    %v4860 = vunpack.c.l.b16 %v4617
    %v4861 = vunpack.c.h.b16 %v4617
    %v4862 = vunpack.c.l.b16 %v4618
    %v4863 = vunpack.c.h.b16 %v4618
    %v4864 = vunpack.c.l.b16 %v4619
    %v4865 = vunpack.c.h.b16 %v4619
    %v4866 = vunpack.c.l.b16 %v4620
    %v4867 = vunpack.c.h.b16 %v4620
    %v4868 = vunpack.c.l.b16 %v4621
    %v4869 = vunpack.c.h.b16 %v4621
    %v4870 = vunpack.c.l.b16 %v4622
    %v4871 = vunpack.c.h.b16 %v4622
    %v4872 = vunpack.c.l.b16 %v4623
    %v4873 = vunpack.c.h.b16 %v4623
    %v4874 = vunpack.c.l.b16 %v4624
    %v4875 = vunpack.c.h.b16 %v4624
    %v4876 = vunpack.c.l.b16 %v4625
    %v4877 = vunpack.c.h.b16 %v4625
    %v4878 = vunpack.c.l.b16 %v4626
    %v4879 = vunpack.c.h.b16 %v4626
    %v4880 = vunpack.c.l.b16 %v4627
    %v4881 = vunpack.c.h.b16 %v4627
    %v4882 = vunpack.c.l.b16 %v4628
    %v4883 = vunpack.c.h.b16 %v4628
    %v4884 = vunpack.c.l.b16 %v4629
    %v4885 = vunpack.c.h.b16 %v4629
    %v4886 = vunpack.c.l.b16 %v4630
    %v4887 = vunpack.c.h.b16 %v4630
    %v4888 = vunpack.c.l.b16 %v4631
    %v4889 = vunpack.c.h.b16 %v4631
    %v4890 = vunpack.c.l.b16 %v4632
    %v4891 = vunpack.c.h.b16 %v4632
    %v4892 = vunpack.c.l.b16 %v4633
    %v4893 = vunpack.c.h.b16 %v4633
    %v4894 = vunpack.c.l.b16 %v4634
    %v4895 = vunpack.c.h.b16 %v4634
    %v4896 = vunpack.c.l.b16 %v4635
    %v4897 = vunpack.c.h.b16 %v4635
    %v4898 = vunpack.c.l.b16 %v4636
    %v4899 = vunpack.c.h.b16 %v4636
    %v4900 = vunpack.c.l.b16 %v4637
    %v4901 = vunpack.c.h.b16 %v4637
    %v4902 = vunpack.c.l.b16 %v4638
    %v4903 = vunpack.c.h.b16 %v4638
    %v4904 = vunpack.c.l.b16 %v4639
    %v4905 = vunpack.c.h.b16 %v4639
    %v4906 = vunpack.c.l.b16 %v4640
    %v4907 = vunpack.c.h.b16 %v4640
    %v4908 = vunpack.c.l.b16 %v4641
    %v4909 = vunpack.c.h.b16 %v4641
    %v4910 = vunpack.c.l.b16 %v4642
    %v4911 = vunpack.c.h.b16 %v4642
    %v4912 = vunpack.c.l.b16 %v4643
    %v4913 = vunpack.c.h.b16 %v4643
    %v4914 = vunpack.c.l.b16 %v4644
    %v4915 = vunpack.c.h.b16 %v4644
    %v4916 = vunpack.c.l.b16 %v4645
    %v4917 = vunpack.c.h.b16 %v4645
    %v4918 = vunpack.c.l.b16 %v4646
    %v4919 = vunpack.c.h.b16 %v4646
    %v4920 = vunpack.c.l.b16 %v4647
    %v4921 = vunpack.c.h.b16 %v4647
    %v4922 = vunpack.c.l.b16 %v4648
    %v4923 = vunpack.c.h.b16 %v4648
    %v4924 = vunpack.c.l.b16 %v4649
    %v4925 = vunpack.c.h.b16 %v4649
    %v4926 = vunpack.c.l.b16 %v4650
    %v4927 = vunpack.c.h.b16 %v4650
    %v4928 = vunpack.c.l.b16 %v4651
    %v4929 = vunpack.c.h.b16 %v4651
    %v4930 = vunpack.c.l.b16 %v4652
    %v4931 = vunpack.c.h.b16 %v4652
    %v4932 = vunpack.c.l.b16 %v4653
    %v4933 = vunpack.c.h.b16 %v4653
    %v4934 = vunpack.c.l.b16 %v4654
    %v4935 = vunpack.c.h.b16 %v4654
    %v4936 = vunpack.c.l.b16 %v4655
    %v4937 = vunpack.c.h.b16 %v4655
    %v4938 = vunpack.c.l.b16 %v4656
    %v4939 = vunpack.c.h.b16 %v4656
    %v4940 = vunpack.c.l.b16 %v4657
    %v4941 = vunpack.c.h.b16 %v4657
    %v4942 = vunpack.c.l.b16 %v4658
    %v4943 = vunpack.c.h.b16 %v4658
    %v4944 = vunpack.c.l.b16 %v4659
    %v4945 = vunpack.c.h.b16 %v4659
    %v4946 = vunpack.c.l.b16 %v4660
    %v4947 = vunpack.c.h.b16 %v4660
    %v4948 = vunpack.c.l.b16 %v4661
    %v4949 = vunpack.c.h.b16 %v4661
    %v4950 = vunpack.c.l.b16 %v4662
    %v4951 = vunpack.c.h.b16 %v4662
    %v4952 = vunpack.c.l.b16 %v4663
    %v4953 = vunpack.c.h.b16 %v4663
    %v4954 = vunpack.c.l.b16 %v4664
    %v4955 = vunpack.c.h.b16 %v4664
    %v4956 = vunpack.c.l.b16 %v4665
    %v4957 = vunpack.c.h.b16 %v4665
    %v4958 = vunpack.c.l.b16 %v4666
    %v4959 = vunpack.c.h.b16 %v4666
    %v4960 = vunpack.c.l.b16 %v4667
    %v4961 = vunpack.c.h.b16 %v4667
    %v4962 = vunpack.c.l.b16 %v4668
    %v4963 = vunpack.c.h.b16 %v4668
    %v4964 = vunpack.c.l.b16 %v4669
    %v4965 = vunpack.c.h.b16 %v4669
    %v4966 = vunpack.c.l.b16 %v4670
    %v4967 = vunpack.c.h.b16 %v4670
    %v4968 = vunpack.c.l.b16 %v4671
    %v4969 = vunpack.c.h.b16 %v4671
    %v4970 = vunpack.c.l.b16 %v4672
    %v4971 = vunpack.c.h.b16 %v4672
    %v4972 = vunpack.c.l.b16 %v4673
    %v4973 = vunpack.c.h.b16 %v4673
    %v4974 = vunpack.c.l.b16 %v4674
    %v4975 = vunpack.c.h.b16 %v4674
    %v4976 = vunpack.c.l.b16 %v4675
    %v4977 = vunpack.c.h.b16 %v4675
    %v4978 = vunpack.c.l.b16 %v4676
    %v4979 = vunpack.c.h.b16 %v4676
    %v4980 = vpack.c.b16 %v4856, %v4852
    %v4981 = vpack.c.b16 %v4857, %v4853
    %v4982 = vpack.c.b16 %v4858, %v4854
    %v4983 = vpack.c.b16 %v4859, %v4855
    %v4984 = vpack.c.b16 %v4864, %v4860
    %v4985 = vpack.c.b16 %v4865, %v4861
    %v4986 = vpack.c.b16 %v4866, %v4862
    %v4987 = vpack.c.b16 %v4867, %v4863
    %v4988 = vpack.c.b16 %v4872, %v4868
    %v4989 = vpack.c.b16 %v4873, %v4869
    %v4990 = vpack.c.b16 %v4874, %v4870
    %v4991 = vpack.c.b16 %v4875, %v4871
    %v4992 = vpack.c.b16 %v4880, %v4876
    %v4993 = vpack.c.b16 %v4881, %v4877
    %v4994 = vpack.c.b16 %v4882, %v4878
    %v4995 = vpack.c.b16 %v4883, %v4879
    %v4996 = vpack.c.b16 %v4888, %v4884
    %v4997 = vpack.c.b16 %v4889, %v4885
    %v4998 = vpack.c.b16 %v4890, %v4886
    %v4999 = vpack.c.b16 %v4891, %v4887
    %v5000 = vpack.c.b16 %v4896, %v4892
    %v5001 = vpack.c.b16 %v4897, %v4893
    %v5002 = vpack.c.b16 %v4898, %v4894
    %v5003 = vpack.c.b16 %v4899, %v4895
    %v5004 = vpack.c.b16 %v4904, %v4900
    %v5005 = vpack.c.b16 %v4905, %v4901
    %v5006 = vpack.c.b16 %v4906, %v4902
    %v5007 = vpack.c.b16 %v4907, %v4903
    %v5008 = vpack.c.b16 %v4912, %v4908
    %v5009 = vpack.c.b16 %v4913, %v4909
    %v5010 = vpack.c.b16 %v4914, %v4910
    %v5011 = vpack.c.b16 %v4915, %v4911
    %v5012 = vpack.c.b16 %v4920, %v4916
    %v5013 = vpack.c.b16 %v4921, %v4917
    %v5014 = vpack.c.b16 %v4922, %v4918
    %v5015 = vpack.c.b16 %v4923, %v4919
    %v5016 = vpack.c.b16 %v4928, %v4924
    %v5017 = vpack.c.b16 %v4929, %v4925
    %v5018 = vpack.c.b16 %v4930, %v4926
    %v5019 = vpack.c.b16 %v4931, %v4927
    %v5020 = vpack.c.b16 %v4936, %v4932
    %v5021 = vpack.c.b16 %v4937, %v4933
    %v5022 = vpack.c.b16 %v4938, %v4934
    %v5023 = vpack.c.b16 %v4939, %v4935
    %v5024 = vpack.c.b16 %v4944, %v4940
    %v5025 = vpack.c.b16 %v4945, %v4941
    %v5026 = vpack.c.b16 %v4946, %v4942
    %v5027 = vpack.c.b16 %v4947, %v4943
    %v5028 = vpack.c.b16 %v4952, %v4948
    %v5029 = vpack.c.b16 %v4953, %v4949
    %v5030 = vpack.c.b16 %v4954, %v4950
    %v5031 = vpack.c.b16 %v4955, %v4951
    %v5032 = vpack.c.b16 %v4960, %v4956
    %v5033 = vpack.c.b16 %v4961, %v4957
    %v5034 = vpack.c.b16 %v4962, %v4958
    %v5035 = vpack.c.b16 %v4963, %v4959
    %v5036 = vpack.c.b16 %v4968, %v4964
    %v5037 = vpack.c.b16 %v4969, %v4965
    %v5038 = vpack.c.b16 %v4970, %v4966
    %v5039 = vpack.c.b16 %v4971, %v4967
    %v5040 = vpack.c.b16 %v4976, %v4972
    %v5041 = vpack.c.b16 %v4977, %v4973
    %v5042 = vpack.c.b16 %v4978, %v4974
    %v5043 = vpack.c.b16 %v4979, %v4975
    %5108 = vmatprep.subr.bf16.mxu0 %v4981
    %5109 = vmatpush1.bf16.msra.mxu0 %v4980
    %5110 = vmatprep.subr.bf16.mxu0 %v4985
    %5111 = vmatpush1.bf16.msra.mxu0 %v4984
    %5112 = vmatprep.subr.bf16.mxu0 %v4989
    %5113 = vmatpush1.bf16.msra.mxu0 %v4988
    %5114 = vmatprep.subr.bf16.mxu0 %v4993
    %5115 = vmatpush1.bf16.msra.mxu0 %v4992
    %5116 = vmatprep.subr.bf16.mxu0 %v4997
    %5117 = vmatpush1.bf16.msra.mxu0 %v4996
    %5118 = vmatprep.subr.bf16.mxu0 %v5001
    %5119 = vmatpush1.bf16.msra.mxu0 %v5000
    %5120 = vmatprep.subr.bf16.mxu0 %v5005
    %5121 = vmatpush1.bf16.msra.mxu0 %v5004
    %5122 = vmatprep.subr.bf16.mxu0 %v5009
    %5123 = vmatpush1.bf16.msra.mxu0 %v5008
    %5124 = vmatprep.subr.bf16.mxu0 %v5013
    %5125 = vmatpush1.bf16.msra.mxu0 %v5012
    %5126 = vmatprep.subr.bf16.mxu0 %v5017
    %5127 = vmatpush1.bf16.msra.mxu0 %v5016
    %5128 = vmatprep.subr.bf16.mxu0 %v5021
    %5129 = vmatpush1.bf16.msra.mxu0 %v5020
    %5130 = vmatprep.subr.bf16.mxu0 %v5025
    %5131 = vmatpush1.bf16.msra.mxu0 %v5024
    %5132 = vmatprep.subr.bf16.mxu0 %v5029
    %5133 = vmatpush1.bf16.msra.mxu0 %v5028
    %5134 = vmatprep.subr.bf16.mxu0 %v5033
    %5135 = vmatpush1.bf16.msra.mxu0 %v5032
    %5136 = vmatprep.subr.bf16.mxu0 %v5037
    %5137 = vmatpush1.bf16.msra.mxu0 %v5036
    %5138 = vmatprep.subr.bf16.mxu0 %v5041
    %5139 = vmatpush1.bf16.msra.mxu0 %v5040
    %5140 = vmatprep.mubr.bf16.mxu0 %v4612
    %5141 = vmatmul.mubr.bf16.gmra.mrb[0].mxu0 %v4611
    %v5142 = vpop.f32.mrb[0].mxu0
    %v5143 = vadd.f32 %v4741, %v5142
    %v5144 = vpop.f32.mrb[0].mxu0
    %v5145 = vadd.f32 %v4743, %v5144
    %v5146 = vpop.f32.mrb[0].mxu0
    %v5147 = vpop.f32.mrb[0].mxu0
    %5148 = vdwg.mxu0
    %5149 = vmatprep.subr.bf16.mxu0 %v4983
    %5150 = vmatpush1.bf16.msra.mxu0 %v4982
    %5151 = vmatprep.subr.bf16.mxu0 %v4987
    %5152 = vmatpush1.bf16.msra.mxu0 %v4986
    %5153 = vmatprep.subr.bf16.mxu0 %v4991
    %5154 = vmatpush1.bf16.msra.mxu0 %v4990
    %5155 = vmatprep.subr.bf16.mxu0 %v4995
    %5156 = vmatpush1.bf16.msra.mxu0 %v4994
    %5157 = vmatprep.subr.bf16.mxu0 %v4999
    %5158 = vmatpush1.bf16.msra.mxu0 %v4998
    %5159 = vmatprep.subr.bf16.mxu0 %v5003
    %5160 = vmatpush1.bf16.msra.mxu0 %v5002
    %5161 = vmatprep.subr.bf16.mxu0 %v5007
    %5162 = vmatpush1.bf16.msra.mxu0 %v5006
    %5163 = vmatprep.subr.bf16.mxu0 %v5011
    %5164 = vmatpush1.bf16.msra.mxu0 %v5010
    %5165 = vmatprep.subr.bf16.mxu0 %v5015
    %5166 = vmatpush1.bf16.msra.mxu0 %v5014
    %5167 = vmatprep.subr.bf16.mxu0 %v5019
    %5168 = vmatpush1.bf16.msra.mxu0 %v5018
    %5169 = vmatprep.subr.bf16.mxu0 %v5023
    %5170 = vmatpush1.bf16.msra.mxu0 %v5022
    %5171 = vmatprep.subr.bf16.mxu0 %v5027
    %5172 = vmatpush1.bf16.msra.mxu0 %v5026
    %5173 = vmatprep.subr.bf16.mxu0 %v5031
    %5174 = vmatpush1.bf16.msra.mxu0 %v5030
    %5175 = vmatprep.subr.bf16.mxu0 %v5035
    %5176 = vmatpush1.bf16.msra.mxu0 %v5034
    %5177 = vmatprep.subr.bf16.mxu0 %v5039
    %5178 = vmatpush1.bf16.msra.mxu0 %v5038
    %5179 = vmatprep.subr.bf16.mxu0 %v5043
    %5180 = vmatpush1.bf16.msra.mxu0 %v5042
    %5181 = vmatprep.mubr.bf16.mxu0 %v4612
    %5182 = vmatmul.mubr.bf16.gmra.mrb[0].mxu0 %v4611
    %v5183 = vpop.f32.mrb[0].mxu0
    %v5184 = vadd.f32 %v4782, %v5183
    %v5185 = vpop.f32.mrb[0].mxu0
    %v5186 = vadd.f32 %v4784, %v5185
    %v5187 = vpop.f32.mrb[0].mxu0
    %v5188 = vpop.f32.mrb[0].mxu0
    %5189 = vdwg.mxu0
    %v5190 = vld [vmem:[%s19] sm:$0xf]
    %v5192 = vlaneseq
    %v5193 = vshrl.u32 %v5192, 7
    %v5194 = vsub.s32 0, %v5193
    %v5195 = vrot.slane %v5190, %v5194
    %v5196 = vlaneseq
    %v5197 = vshrl.u32 %v5196, 7
    %v5198 = vsub.s32 1, %v5197
    %v5199 = vrot.slane %v5190, %v5198
    %v5200 = vlaneseq
    %v5201 = vshrl.u32 %v5200, 7
    %v5202 = vsub.s32 2, %v5201
    %v5203 = vrot.slane %v5190, %v5202
    %v5204 = vlaneseq
    %v5205 = vshrl.u32 %v5204, 7
    %v5206 = vsub.s32 3, %v5205
    %v5207 = vrot.slane %v5190, %v5206
    %v5212 = vadd.f32 %v5143, %v5195
    %v5213 = vadd.f32 %v5145, %v5199
    %v5214 = vadd.f32 %v5184, %v5203
    %v5215 = vadd.f32 %v5186, %v5207
    %v5216 = vmax.f32 %v5212, 0.0
    %v5217 = vmax.f32 %v5213, 0.0
    %v5218 = vmax.f32 %v5214, 0.0
    %v5219 = vmax.f32 %v5215, 0.0
    %v5220 = vld [vmem:[%s20] sm:$0xf]
    %v5221 = vld [vmem:[%s20 + $0x4] sm:$0xf]
    %v5222 = vld [vmem:[%s20 + $0x8] sm:$0xf]
    %v5223 = vld [vmem:[%s20 + $0xc] sm:$0xf]
    %v5224 = vld [vmem:[%s20 + $0x10] sm:$0xf]
    %v5225 = vld [vmem:[%s20 + $0x14] sm:$0xf]
    %v5226 = vld [vmem:[%s20 + $0x18] sm:$0xf]
    %v5227 = vld [vmem:[%s20 + $0x1c] sm:$0xf]
    %v5228 = vld [vmem:[%s20 + $0x20] sm:$0xf]
    %v5229 = vld [vmem:[%s20 + $0x24] sm:$0xf]
    %v5230 = vld [vmem:[%s20 + $0x28] sm:$0xf]
    %v5231 = vld [vmem:[%s20 + $0x2c] sm:$0xf]
    %v5232 = vld [vmem:[%s20 + $0x30] sm:$0xf]
    %v5233 = vld [vmem:[%s20 + $0x34] sm:$0xf]
    %v5234 = vld [vmem:[%s20 + $0x38] sm:$0xf]
    %v5235 = vld [vmem:[%s20 + $0x3c] sm:$0xf]
    %v5236 = vld [vmem:[%s20 + $0x40] sm:$0xf]
    %v5237 = vld [vmem:[%s20 + $0x44] sm:$0xf]
    %v5238 = vld [vmem:[%s20 + $0x48] sm:$0xf]
    %v5239 = vld [vmem:[%s20 + $0x4c] sm:$0xf]
    %v5240 = vld [vmem:[%s20 + $0x50] sm:$0xf]
    %v5241 = vld [vmem:[%s20 + $0x54] sm:$0xf]
    %v5242 = vld [vmem:[%s20 + $0x58] sm:$0xf]
    %v5243 = vld [vmem:[%s20 + $0x5c] sm:$0xf]
    %v5244 = vld [vmem:[%s20 + $0x60] sm:$0xf]
    %v5245 = vld [vmem:[%s20 + $0x64] sm:$0xf]
    %v5246 = vld [vmem:[%s20 + $0x68] sm:$0xf]
    %v5247 = vld [vmem:[%s20 + $0x6c] sm:$0xf]
    %v5248 = vld [vmem:[%s20 + $0x70] sm:$0xf]
    %v5249 = vld [vmem:[%s20 + $0x74] sm:$0xf]
    %v5250 = vld [vmem:[%s20 + $0x78] sm:$0xf]
    %v5251 = vld [vmem:[%s20 + $0x7c] sm:$0xf]
    %v5252 = vld [vmem:[%s20 + $0x80] sm:$0xf]
    %v5253 = vld [vmem:[%s20 + $0x84] sm:$0xf]
    %v5254 = vld [vmem:[%s20 + $0x88] sm:$0xf]
    %v5255 = vld [vmem:[%s20 + $0x8c] sm:$0xf]
    %v5256 = vld [vmem:[%s20 + $0x90] sm:$0xf]
    %v5257 = vld [vmem:[%s20 + $0x94] sm:$0xf]
    %v5258 = vld [vmem:[%s20 + $0x98] sm:$0xf]
    %v5259 = vld [vmem:[%s20 + $0x9c] sm:$0xf]
    %v5260 = vld [vmem:[%s20 + $0xa0] sm:$0xf]
    %v5261 = vld [vmem:[%s20 + $0xa4] sm:$0xf]
    %v5262 = vld [vmem:[%s20 + $0xa8] sm:$0xf]
    %v5263 = vld [vmem:[%s20 + $0xac] sm:$0xf]
    %v5264 = vld [vmem:[%s20 + $0xb0] sm:$0xf]
    %v5265 = vld [vmem:[%s20 + $0xb4] sm:$0xf]
    %v5266 = vld [vmem:[%s20 + $0xb8] sm:$0xf]
    %v5267 = vld [vmem:[%s20 + $0xbc] sm:$0xf]
    %v5268 = vld [vmem:[%s20 + $0xc0] sm:$0xf]
    %v5269 = vld [vmem:[%s20 + $0xc4] sm:$0xf]
    %v5270 = vld [vmem:[%s20 + $0xc8] sm:$0xf]
    %v5271 = vld [vmem:[%s20 + $0xcc] sm:$0xf]
    %v5272 = vld [vmem:[%s20 + $0xd0] sm:$0xf]
    %v5273 = vld [vmem:[%s20 + $0xd4] sm:$0xf]
    %v5274 = vld [vmem:[%s20 + $0xd8] sm:$0xf]
    %v5275 = vld [vmem:[%s20 + $0xdc] sm:$0xf]
    %v5276 = vld [vmem:[%s20 + $0xe0] sm:$0xf]
    %v5277 = vld [vmem:[%s20 + $0xe4] sm:$0xf]
    %v5278 = vld [vmem:[%s20 + $0xe8] sm:$0xf]
    %v5279 = vld [vmem:[%s20 + $0xec] sm:$0xf]
    %v5280 = vld [vmem:[%s20 + $0xf0] sm:$0xf]
    %v5281 = vld [vmem:[%s20 + $0xf4] sm:$0xf]
    %v5282 = vld [vmem:[%s20 + $0xf8] sm:$0xf]
    %v5283 = vld [vmem:[%s20 + $0xfc] sm:$0xf]
    %v5284 = vpack.c.bf16 %v5216, %v5216
    %v5285 = vpack.c.bf16 %v5217, %v5217
    %v5286 = vpack.c.bf16 %v5218, %v5218
    %v5287 = vpack.c.bf16 %v5219, %v5219
    %v5288 = vld [vmem:[%s21] sm:$0x3]
    %5290 = vset.pattern.permute.xlu0 0
    %5291 = vperm.xlu0 %5290, %v5288
    %v5292 = vpop.permute.xlu0 %5291
    %v5358 = vunpack.c.l.b16 %v5220
    %v5359 = vunpack.c.l.b16 %v5221
    %v5360 = vunpack.c.l.b16 %v5222
    %v5361 = vunpack.c.l.b16 %v5223
    %v5362 = vunpack.c.l.b16 %v5224
    %v5363 = vunpack.c.l.b16 %v5225
    %v5364 = vunpack.c.l.b16 %v5226
    %v5365 = vunpack.c.l.b16 %v5227
    %v5366 = vunpack.c.l.b16 %v5228
    %v5367 = vunpack.c.l.b16 %v5229
    %v5368 = vunpack.c.l.b16 %v5230
    %v5369 = vunpack.c.l.b16 %v5231
    %v5370 = vunpack.c.l.b16 %v5232
    %v5371 = vunpack.c.l.b16 %v5233
    %v5372 = vunpack.c.l.b16 %v5234
    %v5373 = vunpack.c.l.b16 %v5235
    %v5374 = vunpack.c.l.b16 %v5236
    %v5375 = vunpack.c.l.b16 %v5237
    %v5376 = vunpack.c.l.b16 %v5238
    %v5377 = vunpack.c.l.b16 %v5239
    %v5378 = vunpack.c.l.b16 %v5240
    %v5379 = vunpack.c.l.b16 %v5241
    %v5380 = vunpack.c.l.b16 %v5242
    %v5381 = vunpack.c.l.b16 %v5243
    %v5382 = vunpack.c.l.b16 %v5244
    %v5383 = vunpack.c.l.b16 %v5245
    %v5384 = vunpack.c.l.b16 %v5246
    %v5385 = vunpack.c.l.b16 %v5247
    %v5386 = vunpack.c.l.b16 %v5248
    %v5387 = vunpack.c.l.b16 %v5249
    %v5388 = vunpack.c.l.b16 %v5250
    %v5389 = vunpack.c.l.b16 %v5251
    %v5390 = vunpack.c.l.b16 %v5252
    %v5391 = vunpack.c.l.b16 %v5253
    %v5392 = vunpack.c.l.b16 %v5254
    %v5393 = vunpack.c.l.b16 %v5255
    %v5394 = vunpack.c.l.b16 %v5256
    %v5395 = vunpack.c.l.b16 %v5257
    %v5396 = vunpack.c.l.b16 %v5258
    %v5397 = vunpack.c.l.b16 %v5259
    %v5398 = vunpack.c.l.b16 %v5260
    %v5399 = vunpack.c.l.b16 %v5261
    %v5400 = vunpack.c.l.b16 %v5262
    %v5401 = vunpack.c.l.b16 %v5263
    %v5402 = vunpack.c.l.b16 %v5264
    %v5403 = vunpack.c.l.b16 %v5265
    %v5404 = vunpack.c.l.b16 %v5266
    %v5405 = vunpack.c.l.b16 %v5267
    %v5406 = vunpack.c.l.b16 %v5268
    %v5407 = vunpack.c.l.b16 %v5269
    %v5408 = vunpack.c.l.b16 %v5270
    %v5409 = vunpack.c.l.b16 %v5271
    %v5410 = vunpack.c.l.b16 %v5272
    %v5411 = vunpack.c.l.b16 %v5273
    %v5412 = vunpack.c.l.b16 %v5274
    %v5413 = vunpack.c.l.b16 %v5275
    %v5414 = vunpack.c.l.b16 %v5276
    %v5415 = vunpack.c.l.b16 %v5277
    %v5416 = vunpack.c.l.b16 %v5278
    %v5417 = vunpack.c.l.b16 %v5279
    %v5418 = vunpack.c.l.b16 %v5280
    %v5419 = vunpack.c.l.b16 %v5281
    %v5420 = vunpack.c.l.b16 %v5282
    %v5421 = vunpack.c.l.b16 %v5283
    %v5422 = vpack.c.b16 %v5359, %v5358
    %v5423 = vpack.c.b16 %v5361, %v5360
    %v5424 = vpack.c.b16 %v5363, %v5362
    %v5425 = vpack.c.b16 %v5365, %v5364
    %v5426 = vpack.c.b16 %v5367, %v5366
    %v5427 = vpack.c.b16 %v5369, %v5368
    %v5428 = vpack.c.b16 %v5371, %v5370
    %v5429 = vpack.c.b16 %v5373, %v5372
    %v5430 = vpack.c.b16 %v5375, %v5374
    %v5431 = vpack.c.b16 %v5377, %v5376
    %v5432 = vpack.c.b16 %v5379, %v5378
    %v5433 = vpack.c.b16 %v5381, %v5380
    %v5434 = vpack.c.b16 %v5383, %v5382
    %v5435 = vpack.c.b16 %v5385, %v5384
    %v5436 = vpack.c.b16 %v5387, %v5386
    %v5437 = vpack.c.b16 %v5389, %v5388
    %v5438 = vpack.c.b16 %v5391, %v5390
    %v5439 = vpack.c.b16 %v5393, %v5392
    %v5440 = vpack.c.b16 %v5395, %v5394
    %v5441 = vpack.c.b16 %v5397, %v5396
    %v5442 = vpack.c.b16 %v5399, %v5398
    %v5443 = vpack.c.b16 %v5401, %v5400
    %v5444 = vpack.c.b16 %v5403, %v5402
    %v5445 = vpack.c.b16 %v5405, %v5404
    %v5446 = vpack.c.b16 %v5407, %v5406
    %v5447 = vpack.c.b16 %v5409, %v5408
    %v5448 = vpack.c.b16 %v5411, %v5410
    %v5449 = vpack.c.b16 %v5413, %v5412
    %v5450 = vpack.c.b16 %v5415, %v5414
    %v5451 = vpack.c.b16 %v5417, %v5416
    %v5452 = vpack.c.b16 %v5419, %v5418
    %v5453 = vpack.c.b16 %v5421, %v5420
    %5486 = vxpose.xlu0.c.b16.start [1/8] %v5422, 128
    %5487 = vxpose.xlu0.c.b16.cont [2/8] %v5423, 128
    %5488 = vxpose.xlu0.c.b16.cont [3/8] %v5424, 128
    %5489 = vxpose.xlu0.c.b16.cont [4/8] %v5425, 128
    %5490 = vxpose.xlu0.c.b16.cont [5/8] %v5426, 128
    %5491 = vxpose.xlu0.c.b16.cont [6/8] %v5427, 128
    %5492 = vxpose.xlu0.c.b16.cont [7/8] %v5428, 128
    %5493 = vxpose.xlu0.c.b16.end [8/8] %v5429, 128
    %v5494 = vpop.trf.xlu0
    %v5495 = vpop.trf.xlu0
    %v5496 = vpop.trf.xlu0
    %v5497 = vpop.trf.xlu0
    %v5498 = vpop.trf.xlu0
    %v5499 = vpop.trf.xlu0
    %v5500 = vpop.trf.xlu0
    %v5501 = vpop.trf.xlu0
    %5502 = vxpose.xlu0.c.b16.start [1/8] %v5430, 128
    %5503 = vxpose.xlu0.c.b16.cont [2/8] %v5431, 128
    %5504 = vxpose.xlu0.c.b16.cont [3/8] %v5432, 128
    %5505 = vxpose.xlu0.c.b16.cont [4/8] %v5433, 128
    %5506 = vxpose.xlu0.c.b16.cont [5/8] %v5434, 128
    %5507 = vxpose.xlu0.c.b16.cont [6/8] %v5435, 128
    %5508 = vxpose.xlu0.c.b16.cont [7/8] %v5436, 128
    %5509 = vxpose.xlu0.c.b16.end [8/8] %v5437, 128
    %v5510 = vpop.trf.xlu0
    %v5511 = vpop.trf.xlu0
    %v5512 = vpop.trf.xlu0
    %v5513 = vpop.trf.xlu0
    %v5514 = vpop.trf.xlu0
    %v5515 = vpop.trf.xlu0
    %v5516 = vpop.trf.xlu0
    %v5517 = vpop.trf.xlu0
    %5518 = vxpose.xlu0.c.b16.start [1/8] %v5438, 128
    %5519 = vxpose.xlu0.c.b16.cont [2/8] %v5439, 128
    %5520 = vxpose.xlu0.c.b16.cont [3/8] %v5440, 128
    %5521 = vxpose.xlu0.c.b16.cont [4/8] %v5441, 128
    %5522 = vxpose.xlu0.c.b16.cont [5/8] %v5442, 128
    %5523 = vxpose.xlu0.c.b16.cont [6/8] %v5443, 128
    %5524 = vxpose.xlu0.c.b16.cont [7/8] %v5444, 128
    %5525 = vxpose.xlu0.c.b16.end [8/8] %v5445, 128
    %v5526 = vpop.trf.xlu0
    %v5527 = vpop.trf.xlu0
    %v5528 = vpop.trf.xlu0
    %v5529 = vpop.trf.xlu0
    %v5530 = vpop.trf.xlu0
    %v5531 = vpop.trf.xlu0
    %v5532 = vpop.trf.xlu0
    %v5533 = vpop.trf.xlu0
    %5534 = vxpose.xlu0.c.b16.start [1/8] %v5446, 128
    %5535 = vxpose.xlu0.c.b16.cont [2/8] %v5447, 128
    %5536 = vxpose.xlu0.c.b16.cont [3/8] %v5448, 128
    %5537 = vxpose.xlu0.c.b16.cont [4/8] %v5449, 128
    %5538 = vxpose.xlu0.c.b16.cont [5/8] %v5450, 128
    %5539 = vxpose.xlu0.c.b16.cont [6/8] %v5451, 128
    %5540 = vxpose.xlu0.c.b16.cont [7/8] %v5452, 128
    %5541 = vxpose.xlu0.c.b16.end [8/8] %v5453, 128
    %v5542 = vpop.trf.xlu0
    %v5543 = vpop.trf.xlu0
    %v5544 = vpop.trf.xlu0
    %v5545 = vpop.trf.xlu0
    %v5546 = vpop.trf.xlu0
    %v5547 = vpop.trf.xlu0
    %v5548 = vpop.trf.xlu0
    %v5549 = vpop.trf.xlu0
    %5550 = vmatprep.subr.bf16.mxu0 %v5285
    %5551 = vmatpush1.bf16.xpose.msra.mxu0 %v5284
    %5552 = vmatprep.subr.bf16.mxu0 0
    %5553 = vmatpush1.bf16.xpose.msra.mxu0 0
    %5554 = vmatprep.subr.bf16.mxu0 0
    %5555 = vmatpush1.bf16.xpose.msra.mxu0 0
    %5556 = vmatprep.subr.bf16.mxu0 0
    %5557 = vmatpush1.bf16.xpose.msra.mxu0 0
    %5558 = vmatprep.subr.bf16.mxu0 0
    %5559 = vmatpush1.bf16.xpose.msra.mxu0 0
    %5560 = vmatprep.subr.bf16.mxu0 0
    %5561 = vmatpush1.bf16.xpose.msra.mxu0 0
    %5562 = vmatprep.subr.bf16.mxu0 0
    %5563 = vmatpush1.bf16.xpose.msra.mxu0 0
    %5564 = vmatprep.subr.bf16.mxu0 0
    %5565 = vmatpush1.bf16.xpose.msra.mxu0 0
    %5566 = vmatprep.subr.bf16.mxu0 0
    %5567 = vmatpush1.bf16.xpose.msra.mxu0 0
    %5568 = vmatprep.subr.bf16.mxu0 0
    %5569 = vmatpush1.bf16.xpose.msra.mxu0 0
    %5570 = vmatprep.subr.bf16.mxu0 0
    %5571 = vmatpush1.bf16.xpose.msra.mxu0 0
    %5572 = vmatprep.subr.bf16.mxu0 0
    %5573 = vmatpush1.bf16.xpose.msra.mxu0 0
    %5574 = vmatprep.subr.bf16.mxu0 0
    %5575 = vmatpush1.bf16.xpose.msra.mxu0 0
    %5576 = vmatprep.subr.bf16.mxu0 0
    %5577 = vmatpush1.bf16.xpose.msra.mxu0 0
    %5578 = vmatprep.subr.bf16.mxu0 0
    %5579 = vmatpush1.bf16.xpose.msra.mxu0 0
    %5580 = vmatprep.subr.bf16.mxu0 0
    %5581 = vmatpush1.bf16.xpose.msra.mxu0 0
    %5582 = vmatprep.mubr.bf16.mxu0 %v5510
    %5583 = vmatmul.mubr.bf16.gmra.mrb[0].mxu0 %v5494
    %v5584 = vpop.f32.mrb[0].mxu0
    %v5585 = vadd.f32 %v5292, %v5584
    %v5586 = vpop.f32.mrb[0].mxu0
    %v5587 = vpop.f32.mrb[0].mxu0
    %v5588 = vpop.f32.mrb[0].mxu0
    %5589 = vdwg.mxu0
    %5590 = vmatprep.subr.bf16.mxu0 %v5287
    %5591 = vmatpush1.bf16.xpose.msra.mxu0 %v5286
    %5592 = vmatprep.subr.bf16.mxu0 0
    %5593 = vmatpush1.bf16.xpose.msra.mxu0 0
    %5594 = vmatprep.subr.bf16.mxu0 0
    %5595 = vmatpush1.bf16.xpose.msra.mxu0 0
    %5596 = vmatprep.subr.bf16.mxu0 0
    %5597 = vmatpush1.bf16.xpose.msra.mxu0 0
    %5598 = vmatprep.subr.bf16.mxu0 0
    %5599 = vmatpush1.bf16.xpose.msra.mxu0 0
    %5600 = vmatprep.subr.bf16.mxu0 0
    %5601 = vmatpush1.bf16.xpose.msra.mxu0 0
    %5602 = vmatprep.subr.bf16.mxu0 0
    %5603 = vmatpush1.bf16.xpose.msra.mxu0 0
    %5604 = vmatprep.subr.bf16.mxu0 0
    %5605 = vmatpush1.bf16.xpose.msra.mxu0 0
    %5606 = vmatprep.subr.bf16.mxu0 0
    %5607 = vmatpush1.bf16.xpose.msra.mxu0 0
    %5608 = vmatprep.subr.bf16.mxu0 0
    %5609 = vmatpush1.bf16.xpose.msra.mxu0 0
    %5610 = vmatprep.subr.bf16.mxu0 0
    %5611 = vmatpush1.bf16.xpose.msra.mxu0 0
    %5612 = vmatprep.subr.bf16.mxu0 0
    %5613 = vmatpush1.bf16.xpose.msra.mxu0 0
    %5614 = vmatprep.subr.bf16.mxu0 0
    %5615 = vmatpush1.bf16.xpose.msra.mxu0 0
    %5616 = vmatprep.subr.bf16.mxu0 0
    %5617 = vmatpush1.bf16.xpose.msra.mxu0 0
    %5618 = vmatprep.subr.bf16.mxu0 0
    %5619 = vmatpush1.bf16.xpose.msra.mxu0 0
    %5620 = vmatprep.subr.bf16.mxu0 0
    %5621 = vmatpush1.bf16.xpose.msra.mxu0 0
    %5622 = vmatprep.mubr.bf16.mxu0 %v5542
    %5623 = vmatmul.mubr.bf16.gmra.mrb[0].mxu0 %v5526
    %v5624 = vpop.f32.mrb[0].mxu0
    %v5625 = vadd.f32 %v5585, %v5624
    %v5626 = vpop.f32.mrb[0].mxu0
    %v5627 = vpop.f32.mrb[0].mxu0
    %v5628 = vpop.f32.mrb[0].mxu0
    %5629 = vdwg.mxu0
    %vm5630 = vcmask 58368
    %5631 = vst.msk [vmem:[#allocation10] sm:$0x3] %vm5630, %v5625
    // Predicated region
    $region106: #{tpu_custom_call.1} parent=1 // pred_check
      _
    $region107: #{tpu_custom_call.1} parent=1 // pred_check_branch
      %5633 = sbr.rel (0) target = $region109
    $region108: #{tpu_custom_call.1} parent=1 // pred_region
      %s5635 = ssub.s32 32, 32
      %5636 = vsyncadd [#allocation4], %s5635
      %s5638 = sshll.u32 [#allocation10], 4
      %s5639 = int_to_ptr.vmem [resolvable:$true] %s5638
      %5641 = dma.vmem_to_hbm [thread:$0]  %s5639, 32, %s22, [#allocation4]
    $region109: #{tpu_custom_call.1} parent=1 // pred_fallthru
      _
    // Predicated region
    $region110: #{tpu_custom_call.1} parent=1 // pred_check
      _
    $region111: #{tpu_custom_call.1} parent=1 // pred_check_branch
      %5643 = sbr.rel (0) target = $region113
    $region112: #{tpu_custom_call.1} parent=1 // pred_region
      %5644 = dma.done [#allocation4], 32
    $region113: #{tpu_custom_call.1} parent=1 // pred_fallthru
      _
    %5645 = vsyncpa [#allocation3], 1
    %5646 = vsyncpa [#allocation6], 1
    %5647 = vsyncpa [#allocation9], 1
    %5648 = vsyncpa [#allocation4], 1

</llo_original>
